<compile_context>
chip_gen: v6e
topology: v6e:2x2x1
jax: 0.10.0
libtpu: 0.0.40
codegen_flags: <defaults>
</compile_context>

<pallas_src>
import functools

import jax
import jax.numpy as jnp
import numpy as np
from jax import lax
from jax.experimental import pallas as pl
from jax.experimental.pallas import tpu as pltpu

SUBLANE = 8
LANE = 128


def _round_up(x, m):
    return (x + m - 1) // m * m


# ----------------------------------------------------------------------------
# Fused kernel: one-hot embedding matmul -> L-layer LSTM -> output Linear.
# PyTorch gate order: i, f, g, o.
#   gates = x @ W_ih^T + h @ W_hh^T + (b_ih + b_hh)
#   c' = f*c + i*g ; h' = o*tanh(c')
# ----------------------------------------------------------------------------
def fused_lm_kernel(tok_ref, emb_ref, h0_ref, c0_ref, wih_ref, whh_ref, b_ref,
                    wout_ref, bout_ref,
                    logits_ref, hn_ref, cn_ref,
                    xp_scr, y_scr,
                    *, num_layers, seq, batch_p, hidden, vocab_p):
    S, Bp, H, Vp = seq, batch_p, hidden, vocab_p
    N = S * Bp

    # --- Embedding lookup fused as a one-hot MXU matmul (exact row select) ---
    tok = tok_ref[...]                                           # (N, 1) int32
    vocab_iota = lax.broadcasted_iota(jnp.int32, (N, Vp), 1)     # (N, Vp)
    one_hot = jnp.where(vocab_iota == tok, 1.0, 0.0).astype(emb_ref.dtype)
    y_scr[...] = jnp.dot(one_hot, emb_ref[...],
                         preferred_element_type=jnp.float32)     # (N, H) f32

    for l in range(num_layers):                     # static unroll over layers
        # --- hoisted input projection: one big (N, H) @ (H, 4H) matmul ---
        xp_scr[...] = (
            jnp.dot(y_scr[...].astype(wih_ref.dtype), wih_ref[l],
                    preferred_element_type=jnp.float32)
            + b_ref[l])                                          # (N, 4H) f32

        whh_l = whh_ref[l]                                       # (H, 4H) bf16

        # --- serial recurrence: only h @ W_hh^T + VPU/EUP gate math.
        # Bp == 8, so every slice below is a full, aligned (8,128*k) tile.
        def step(t, carry):
            h, c = carry                                         # (Bp, H) f32
            row = pl.multiple_of(t * Bp, Bp)
            gates = xp_scr[pl.ds(row, Bp), :] + jnp.dot(
                h.astype(whh_l.dtype), whh_l,
                preferred_element_type=jnp.float32)              # (Bp, 4H) f32
            # H is a multiple of 128 -> lane-aligned gate slices.
            i_g = jax.nn.sigmoid(gates[:, 0 * H:1 * H])
            f_g = jax.nn.sigmoid(gates[:, 1 * H:2 * H])
            g_g = jnp.tanh(gates[:, 2 * H:3 * H])
            o_g = jax.nn.sigmoid(gates[:, 3 * H:4 * H])
            c_new = f_g * c + i_g * g_g
            h_new = o_g * jnp.tanh(c_new)
            y_scr[pl.ds(row, Bp), :] = h_new
            return h_new, c_new

        h_fin, c_fin = lax.fori_loop(
            0, S, step, (h0_ref[l], c0_ref[l]), unroll=(S <= 16))

        hn_ref[l] = h_fin
        cn_ref[l] = c_fin
        # TODO(synk): training-mode inter-layer dropout (stochastic) not
        # modeled; this matches nn.LSTM with dropout inactive (eval mode).

    # --- fused output Linear on the VMEM-resident last-layer activations ---
    logits_ref[...] = (
        jnp.dot(y_scr[...].astype(wout_ref.dtype), wout_ref[...],
                preferred_element_type=jnp.float32)
        + bout_ref[...])                                         # (N, Vp) f32


def fused_forward_call(tok2d, emb_p, h0_p, c0_p, wih_t, whh_t, b,
                       w_out_t, b_out, *, seq, batch_p):
    """tok2d: (S*Bp, 1) int32; emb_p: (Vp, H) bf16; h0/c0: (L, Bp, H) f32;
    wih_t/whh_t: (L, H, 4H) bf16; b: (L, 1, 4H) f32; w_out_t: (H, Vp) bf16;
    b_out: (1, Vp) f32. Returns logits (S*Bp, Vp) f32, h_n, c_n (L, Bp, H)."""
    S, Bp = seq, batch_p
    L, H, H4 = wih_t.shape
    Vp = emb_p.shape[0]
    N = S * Bp

    kernel = functools.partial(fused_lm_kernel, num_layers=L, seq=S,
                               batch_p=Bp, hidden=H, vocab_p=Vp)

    grid_spec = pltpu.PrefetchScalarGridSpec(
        num_scalar_prefetch=0,
        grid=(1,),
        in_specs=[
            pl.BlockSpec((N, 1), lambda i: (0, 0)),            # tokens (int32)
            pl.BlockSpec((Vp, H), lambda i: (0, 0)),           # embedding bf16
            pl.BlockSpec((L, Bp, H), lambda i: (0, 0, 0)),     # h0
            pl.BlockSpec((L, Bp, H), lambda i: (0, 0, 0)),     # c0
            pl.BlockSpec((L, H, H4), lambda i: (0, 0, 0)),     # W_ih^T (bf16)
            pl.BlockSpec((L, H, H4), lambda i: (0, 0, 0)),     # W_hh^T (bf16)
            pl.BlockSpec((L, 1, H4), lambda i: (0, 0, 0)),     # b_ih + b_hh
            pl.BlockSpec((H, Vp), lambda i: (0, 0)),           # W_out^T (bf16)
            pl.BlockSpec((1, Vp), lambda i: (0, 0)),           # b_out
        ],
        out_specs=[
            pl.BlockSpec((N, Vp), lambda i: (0, 0)),           # logits
            pl.BlockSpec((L, Bp, H), lambda i: (0, 0, 0)),     # h_n
            pl.BlockSpec((L, Bp, H), lambda i: (0, 0, 0)),     # c_n
        ],
        scratch_shapes=[
            pltpu.VMEM((N, H4), jnp.float32),                  # hoisted x-proj
            pltpu.VMEM((N, H), jnp.float32),                   # activation slab
        ],
    )
    # Note: grid=(1,) fetches every block exactly once; at these sizes the
    # default double-buffering is irrelevant (total VMEM ~2 MiB).
    return pl.pallas_call(
        kernel,
        out_shape=(
            jax.ShapeDtypeStruct((N, Vp), jnp.float32),
            jax.ShapeDtypeStruct((L, Bp, H), jnp.float32),
            jax.ShapeDtypeStruct((L, Bp, H), jnp.float32),
        ),
        grid_spec=grid_spec,
        compiler_params=pltpu.CompilerParams(
            dimension_semantics=("arbitrary",)),
    )(tok2d, emb_p, h0_p, c0_p, wih_t, whh_t, b, w_out_t, b_out)


# ----------------------------------------------------------------------------
# Model: parameter init (weights pre-padded to lane multiples) + forward
# ----------------------------------------------------------------------------
def init_params(key, vocab_size, hidden, num_layers):
    assert hidden % LANE == 0, "hidden size must be a multiple of 128"
    Vp = _round_up(vocab_size, LANE)
    keys = jax.random.split(key, 2 + num_layers)
    params = {"vocab_size": vocab_size}

    emb = 0.1 * jax.random.normal(keys[0], (vocab_size, hidden), jnp.float32)
    emb_p = jnp.zeros((Vp, hidden), jnp.float32).at[:vocab_size].set(emb)
    params["emb_p"] = emb_p.astype(jnp.bfloat16)           # (Vp, H) bf16

    wih, whh, bias = [], [], []
    for l in range(num_layers):
        kk = jax.random.split(keys[1 + l], 4)
        w_ih = 0.1 * jax.random.normal(kk[0], (4 * hidden, hidden), jnp.float32)
        w_hh = 0.1 * jax.random.normal(kk[1], (4 * hidden, hidden), jnp.float32)
        b_ih = 0.1 * jax.random.normal(kk[2], (4 * hidden,), jnp.float32)
        b_hh = 0.1 * jax.random.normal(kk[3], (4 * hidden,), jnp.float32)
        wih.append(w_ih.T.astype(jnp.bfloat16))             # (H, 4H)
        whh.append(w_hh.T.astype(jnp.bfloat16))             # (H, 4H)
        bias.append((b_ih + b_hh)[None, :])                 # (1, 4H)
    params["wih_t"] = jnp.stack(wih)                        # (L, H, 4H) bf16
    params["whh_t"] = jnp.stack(whh)                        # (L, H, 4H) bf16
    params["b"] = jnp.stack(bias)                           # (L, 1, 4H) f32

    kout = jax.random.split(keys[-1], 2)
    w_out = 0.1 * jax.random.normal(kout[0], (vocab_size, hidden), jnp.float32)
    b_out = 0.1 * jax.random.normal(kout[1], (vocab_size,), jnp.float32)
    w_out_p = jnp.zeros((hidden, Vp), jnp.float32).at[:, :vocab_size].set(w_out.T)
    b_out_p = jnp.zeros((1, Vp), jnp.float32).at[:, :vocab_size].set(b_out[None])
    params["w_out_t"] = w_out_p.astype(jnp.bfloat16)        # (H, Vp) bf16
    params["b_out"] = b_out_p                               # (1, Vp) f32
    return params


def forward(params, x, h, c):
    """x: (S, B) int32 tokens; h, c: (num_layers, B, H) f32.
    Returns (logits (S, B, V), h_n (L, B, H), c_n (L, B, H))."""
    S, B = x.shape
    V = params["vocab_size"]
    Vp, H = params["emb_p"].shape
    Bp = _round_up(B, SUBLANE)      # pad batch -> full (8,128) tiles in-kernel

    tok = x.astype(jnp.int32)
    if Bp != B:
        tok = jnp.pad(tok, ((0, 0), (0, Bp - B)))          # padded rows -> id 0
        h = jnp.pad(h, ((0, 0), (0, Bp - B), (0, 0)))
        c = jnp.pad(c, ((0, 0), (0, Bp - B), (0, 0)))
    tok2d = tok.reshape(S * Bp, 1)

    logits_p, h_n, c_n = fused_forward_call(
        tok2d, params["emb_p"], h, c,
        params["wih_t"], params["whh_t"], params["b"],
        params["w_out_t"], params["b_out"],
        seq=S, batch_p=Bp)

    logits = logits_p.reshape(S, Bp, Vp)[:, :B, :V]
    return logits, h_n[:, :B, :], c_n[:, :B, :]


# ----------------------------------------------------------------------------
# Pure-JAX reference mirroring the kernel numerics (bf16 weights, bf16-rounded
# matmul inputs, f32 accumulation) for correctness verification.
# ----------------------------------------------------------------------------
def reference_forward(params, x, h, c):
    S, B = x.shape
    V = params["vocab_size"]
    L, H, _ = params["wih_t"].shape

    def mm(a, w):
        return jnp.dot(a.astype(jnp.bfloat16), w,
                       preferred_element_type=jnp.float32)

    layer_in = params["emb_p"][x].astype(jnp.float32)       # (S, B, H)
    h_list, c_list = [], []
    for l in range(L):
        wih = params["wih_t"][l]
        whh = params["whh_t"][l]
        b = params["b"][l]                                  # (1, 4H)
        hs, cs = h[l], c[l]
        outs = []
        for t in range(S):
            gates = mm(layer_in[t], wih) + mm(hs, whh) + b
            i_g = jax.nn.sigmoid(gates[:, 0 * H:1 * H])
            f_g = jax.nn.sigmoid(gates[:, 1 * H:2 * H])
            g_g = jnp.tanh(gates[:, 2 * H:3 * H])
            o_g = jax.nn.sigmoid(gates[:, 3 * H:4 * H])
            cs = f_g * cs + i_g * g_g
            hs = o_g * jnp.tanh(cs)
            outs.append(hs)
        layer_in = jnp.stack(outs)
        h_list.append(hs)
        c_list.append(cs)
    logits = (mm(layer_in.reshape(S * B, H), params["w_out_t"])
              + params["b_out"]).reshape(S, B, -1)[:, :, :V]
    return logits, jnp.stack(h_list), jnp.stack(c_list)


if __name__ == "__main__":
    SEQ, BATCH, HIDDEN, VOCAB, LAYERS = 8, 2, 128, 40, 2

    key = jax.random.PRNGKey(0)
    k_param, k_x, k_h, k_c = jax.random.split(key, 4)

    params = init_params(k_param, VOCAB, HIDDEN, LAYERS)

    x = jax.random.randint(k_x, (SEQ, BATCH), 0, VOCAB, dtype=jnp.int32)
    h0 = 0.1 * jax.random.normal(k_h, (LAYERS, BATCH, HIDDEN), jnp.float32)
    c0 = 0.1 * jax.random.normal(k_c, (LAYERS, BATCH, HIDDEN), jnp.float32)

    out, h_n, c_n = forward(params, x, h0, c0)
    jax.block_until_ready((out, h_n, c_n))

    assert out.shape == (SEQ, BATCH, VOCAB)
    assert h_n.shape == (LAYERS, BATCH, HIDDEN)
    assert c_n.shape == (LAYERS, BATCH, HIDDEN)

    ref_out, ref_h, ref_c = reference_forward(params, x, h0, c0)
    np.testing.assert_allclose(np.asarray(out), np.asarray(ref_out),
                               atol=1e-2, rtol=1e-2)
    np.testing.assert_allclose(np.asarray(h_n), np.asarray(ref_h),
                               atol=1e-2, rtol=1e-2)
    np.testing.assert_allclose(np.asarray(c_n), np.asarray(ref_c),
                               atol=1e-2, rtol=1e-2)

    print("KERNEL_OK")
</pallas_src>

<mosaic_0001>
module attributes {stable_mosaic.version = 11 : i64} {
  func.func @fused_lm_kernel(%arg0: i32, %arg1: memref<64x1xi32, #tpu.memory_space<vmem>>, %arg2: memref<128x128xbf16, #tpu.memory_space<vmem>>, %arg3: memref<2x8x128xf32, #tpu.memory_space<vmem>>, %arg4: memref<2x8x128xf32, #tpu.memory_space<vmem>>, %arg5: memref<2x128x512xbf16, #tpu.memory_space<vmem>>, %arg6: memref<2x128x512xbf16, #tpu.memory_space<vmem>>, %arg7: memref<2x1x512xf32, #tpu.memory_space<vmem>>, %arg8: memref<128x128xbf16, #tpu.memory_space<vmem>>, %arg9: memref<1x128xf32, #tpu.memory_space<vmem>>, %arg10: memref<64x128xf32, #tpu.memory_space<vmem>>, %arg11: memref<2x8x128xf32, #tpu.memory_space<vmem>>, %arg12: memref<2x8x128xf32, #tpu.memory_space<vmem>>, %arg13: memref<64x512xf32, #tpu.memory_space<vmem>>, %arg14: memref<64x128xf32, #tpu.memory_space<vmem>>) attributes {dimension_semantics = [#tpu.dimension_semantics<arbitrary>], iteration_bounds = array<i64: 1>, scalar_prefetch = 0 : i64, scratch_operands = 2 : i64, tpu.core_type = #tpu.core_type<tc>, window_params = [{pipeline_mode = #tpu.pipeline_mode<synchronous>, transform_indices = @transform_0, window_bounds = array<i64: 64, 1>}, {pipeline_mode = #tpu.pipeline_mode<synchronous>, transform_indices = @transform_1, window_bounds = array<i64: 128, 128>}, {pipeline_mode = #tpu.pipeline_mode<synchronous>, transform_indices = @transform_2, window_bounds = array<i64: 2, 8, 128>}, {pipeline_mode = #tpu.pipeline_mode<synchronous>, transform_indices = @transform_3, window_bounds = array<i64: 2, 8, 128>}, {pipeline_mode = #tpu.pipeline_mode<synchronous>, transform_indices = @transform_4, window_bounds = array<i64: 2, 128, 512>}, {pipeline_mode = #tpu.pipeline_mode<synchronous>, transform_indices = @transform_5, window_bounds = array<i64: 2, 128, 512>}, {pipeline_mode = #tpu.pipeline_mode<synchronous>, transform_indices = @transform_6, window_bounds = array<i64: 2, 1, 512>}, {pipeline_mode = #tpu.pipeline_mode<synchronous>, transform_indices = @transform_7, window_bounds = array<i64: 128, 128>}, {pipeline_mode = #tpu.pipeline_mode<synchronous>, transform_indices = @transform_8, window_bounds = array<i64: 1, 128>}, {pipeline_mode = #tpu.pipeline_mode<synchronous>, transform_indices = @transform_9, window_bounds = array<i64: 64, 128>}, {pipeline_mode = #tpu.pipeline_mode<synchronous>, transform_indices = @transform_10, window_bounds = array<i64: 2, 8, 128>}, {pipeline_mode = #tpu.pipeline_mode<synchronous>, transform_indices = @transform_11, window_bounds = array<i64: 2, 8, 128>}]} {
    %c0 = arith.constant 0 : index
    %c0_0 = arith.constant 0 : index
    %0 = vector.load %arg1[%c0, %c0_0] : memref<64x1xi32, #tpu.memory_space<vmem>>, vector<64x1xi32>
    %1 = tpu.iota {dimensions = array<i32: 1>} : vector<64x128xi32>
    %2 = vector.broadcast %0 : vector<64x1xi32> to vector<64x128xi32>
    %3 = arith.cmpi eq, %1, %2 : vector<64x128xi32>
    %cst = arith.constant 1.000000e+00 : f32
    %cst_1 = arith.constant 0.000000e+00 : f32
    %4 = vector.broadcast %cst : f32 to vector<64x128xf32>
    %5 = vector.broadcast %cst_1 : f32 to vector<64x128xf32>
    %6 = arith.select %3, %4, %5 : vector<64x128xi1>, vector<64x128xf32>
    %7 = arith.truncf %6 : vector<64x128xf32> to vector<64x128xbf16>
    %c0_2 = arith.constant 0 : index
    %c0_3 = arith.constant 0 : index
    %8 = vector.load %arg2[%c0_2, %c0_3] : memref<128x128xbf16, #tpu.memory_space<vmem>>, vector<128x128xbf16>
    %cst_4 = arith.constant dense<0.000000e+00> : vector<64x128xf32>
    %9 = tpu.matmul %7, %8, %cst_4 {dimension_numbers = #tpu.dot_dimension_numbers<[1], [0], [0], [1], [0, 0, 1, 1], [], []>} : vector<64x128xbf16>, vector<128x128xbf16>, vector<64x128xf32> -> vector<64x128xf32>
    %c0_5 = arith.constant 0 : index
    %c0_6 = arith.constant 0 : index
    %10 = vector.load %arg14[%c0_5, %c0_6] : memref<64x128xf32, #tpu.memory_space<vmem>>, vector<64x128xf32>
    tpu.vector_store %arg14[%c0_5, %c0_6], %9 {strides = array<i32>} : memref<64x128xf32, #tpu.memory_space<vmem>>, vector<64x128xf32>,
    %c0_7 = arith.constant 0 : index
    %c0_8 = arith.constant 0 : index
    %11 = vector.load %arg14[%c0_7, %c0_8] : memref<64x128xf32, #tpu.memory_space<vmem>>, vector<64x128xf32>
    %12 = arith.truncf %11 : vector<64x128xf32> to vector<64x128xbf16>
    %c0_9 = arith.constant 0 : index
    %c0_10 = arith.constant 0 : index
    %c0_11 = arith.constant 0 : index
    %13 = vector.load %arg5[%c0_9, %c0_10, %c0_11] : memref<2x128x512xbf16, #tpu.memory_space<vmem>>, vector<1x128x512xbf16>
    %14 = vector.shape_cast %13 : vector<1x128x512xbf16> to vector<128x512xbf16>
    %cst_12 = arith.constant dense<0.000000e+00> : vector<64x512xf32>
    %15 = tpu.matmul %12, %14, %cst_12 {dimension_numbers = #tpu.dot_dimension_numbers<[1], [0], [0], [1], [0, 0, 1, 1], [], []>} : vector<64x128xbf16>, vector<128x512xbf16>, vector<64x512xf32> -> vector<64x512xf32>
    %c0_13 = arith.constant 0 : index
    %c0_14 = arith.constant 0 : index
    %c0_15 = arith.constant 0 : index
    %16 = vector.load %arg7[%c0_13, %c0_14, %c0_15] : memref<2x1x512xf32, #tpu.memory_space<vmem>>, vector<1x1x512xf32>
    %17 = vector.shape_cast %16 : vector<1x1x512xf32> to vector<1x512xf32>
    %18 = vector.broadcast %17 : vector<1x512xf32> to vector<64x512xf32>
    %19 = arith.addf %15, %18 : vector<64x512xf32>
    %c0_16 = arith.constant 0 : index
    %c0_17 = arith.constant 0 : index
    %20 = vector.load %arg13[%c0_16, %c0_17] : memref<64x512xf32, #tpu.memory_space<vmem>>, vector<64x512xf32>
    tpu.vector_store %arg13[%c0_16, %c0_17], %19 {strides = array<i32>} : memref<64x512xf32, #tpu.memory_space<vmem>>, vector<64x512xf32>,
    %c0_18 = arith.constant 0 : index
    %c0_19 = arith.constant 0 : index
    %c0_20 = arith.constant 0 : index
    %21 = vector.load %arg6[%c0_18, %c0_19, %c0_20] : memref<2x128x512xbf16, #tpu.memory_space<vmem>>, vector<1x128x512xbf16>
    %22 = vector.shape_cast %21 : vector<1x128x512xbf16> to vector<128x512xbf16>
    %c0_21 = arith.constant 0 : index
    %c0_22 = arith.constant 0 : index
    %c0_23 = arith.constant 0 : index
    %23 = vector.load %arg3[%c0_21, %c0_22, %c0_23] : memref<2x8x128xf32, #tpu.memory_space<vmem>>, vector<1x8x128xf32>
    %24 = vector.shape_cast %23 : vector<1x8x128xf32> to vector<8x128xf32>
    %c0_24 = arith.constant 0 : index
    %c0_25 = arith.constant 0 : index
    %c0_26 = arith.constant 0 : index
    %25 = vector.load %arg4[%c0_24, %c0_25, %c0_26] : memref<2x8x128xf32, #tpu.memory_space<vmem>>, vector<1x8x128xf32>
    %26 = vector.shape_cast %25 : vector<1x8x128xf32> to vector<8x128xf32>
    %c0_i32 = arith.constant 0 : i32
    %c8_i32 = arith.constant 8 : i32
    %27 = arith.muli %c0_i32, %c8_i32 : i32
    %28 = tpu.assume_multiple %27, 8 : i32
    %29 = arith.index_cast %28 : i32 to index
    %c0_27 = arith.constant 0 : index
    %30 = vector.load %arg13[%29, %c0_27] : memref<64x512xf32, #tpu.memory_space<vmem>>, vector<8x512xf32>
    %31 = arith.truncf %24 : vector<8x128xf32> to vector<8x128xbf16>
    %cst_28 = arith.constant dense<0.000000e+00> : vector<8x512xf32>
    %32 = tpu.matmul %31, %22, %cst_28 {dimension_numbers = #tpu.dot_dimension_numbers<[1], [0], [0], [1], [0, 0, 1, 1], [], []>} : vector<8x128xbf16>, vector<128x512xbf16>, vector<8x512xf32> -> vector<8x512xf32>
    %33 = arith.addf %30, %32 : vector<8x512xf32>
    %34 = vector.extract_strided_slice %33 {offsets = [0, 0], sizes = [8, 128], strides = [1, 1]} : vector<8x512xf32> to vector<8x128xf32>
    %35 = arith.negf %34 : vector<8x128xf32>
    %36 = math.exp %35 : vector<8x128xf32>
    %cst_29 = arith.constant 1.000000e+00 : f32
    %37 = vector.broadcast %cst_29 : f32 to vector<8x128xf32>
    %38 = arith.addf %37, %36 : vector<8x128xf32>
    %39 = arith.divf %37, %38 : vector<8x128xf32>
    %40 = vector.extract_strided_slice %33 {offsets = [0, 128], sizes = [8, 128], strides = [1, 1]} : vector<8x512xf32> to vector<8x128xf32>
    %41 = arith.negf %40 : vector<8x128xf32>
    %42 = math.exp %41 : vector<8x128xf32>
    %cst_30 = arith.constant 1.000000e+00 : f32
    %43 = vector.broadcast %cst_30 : f32 to vector<8x128xf32>
    %44 = arith.addf %43, %42 : vector<8x128xf32>
    %45 = arith.divf %43, %44 : vector<8x128xf32>
    %46 = vector.extract_strided_slice %33 {offsets = [0, 256], sizes = [8, 128], strides = [1, 1]} : vector<8x512xf32> to vector<8x128xf32>
    %47 = math.tanh %46 : vector<8x128xf32>
    %48 = vector.extract_strided_slice %33 {offsets = [0, 384], sizes = [8, 128], strides = [1, 1]} : vector<8x512xf32> to vector<8x128xf32>
    %49 = arith.negf %48 : vector<8x128xf32>
    %50 = math.exp %49 : vector<8x128xf32>
    %cst_31 = arith.constant 1.000000e+00 : f32
    %51 = vector.broadcast %cst_31 : f32 to vector<8x128xf32>
    %52 = arith.addf %51, %50 : vector<8x128xf32>
    %53 = arith.divf %51, %52 : vector<8x128xf32>
    %54 = arith.mulf %45, %26 : vector<8x128xf32>
    %55 = arith.mulf %39, %47 : vector<8x128xf32>
    %56 = arith.addf %54, %55 : vector<8x128xf32>
    %57 = math.tanh %56 : vector<8x128xf32>
    %58 = arith.mulf %53, %57 : vector<8x128xf32>
    %59 = arith.index_cast %28 : i32 to index
    %c0_32 = arith.constant 0 : index
    %60 = vector.load %arg14[%59, %c0_32] : memref<64x128xf32, #tpu.memory_space<vmem>>, vector<8x128xf32>
    tpu.vector_store %arg14[%59, %c0_32], %58 {strides = array<i32>} : memref<64x128xf32, #tpu.memory_space<vmem>>, vector<8x128xf32>,
    %c1_i32 = arith.constant 1 : i32
    %c8_i32_33 = arith.constant 8 : i32
    %61 = arith.muli %c1_i32, %c8_i32_33 : i32
    %62 = tpu.assume_multiple %61, 8 : i32
    %63 = arith.index_cast %62 : i32 to index
    %c0_34 = arith.constant 0 : index
    %64 = vector.load %arg13[%63, %c0_34] : memref<64x512xf32, #tpu.memory_space<vmem>>, vector<8x512xf32>
    %65 = arith.truncf %58 : vector<8x128xf32> to vector<8x128xbf16>
    %cst_35 = arith.constant dense<0.000000e+00> : vector<8x512xf32>
    %66 = tpu.matmul %65, %22, %cst_35 {dimension_numbers = #tpu.dot_dimension_numbers<[1], [0], [0], [1], [0, 0, 1, 1], [], []>} : vector<8x128xbf16>, vector<128x512xbf16>, vector<8x512xf32> -> vector<8x512xf32>
    %67 = arith.addf %64, %66 : vector<8x512xf32>
    %68 = vector.extract_strided_slice %67 {offsets = [0, 0], sizes = [8, 128], strides = [1, 1]} : vector<8x512xf32> to vector<8x128xf32>
    %69 = arith.negf %68 : vector<8x128xf32>
    %70 = math.exp %69 : vector<8x128xf32>
    %cst_36 = arith.constant 1.000000e+00 : f32
    %71 = vector.broadcast %cst_36 : f32 to vector<8x128xf32>
    %72 = arith.addf %71, %70 : vector<8x128xf32>
    %73 = arith.divf %71, %72 : vector<8x128xf32>
    %74 = vector.extract_strided_slice %67 {offsets = [0, 128], sizes = [8, 128], strides = [1, 1]} : vector<8x512xf32> to vector<8x128xf32>
    %75 = arith.negf %74 : vector<8x128xf32>
    %76 = math.exp %75 : vector<8x128xf32>
    %cst_37 = arith.constant 1.000000e+00 : f32
    %77 = vector.broadcast %cst_37 : f32 to vector<8x128xf32>
    %78 = arith.addf %77, %76 : vector<8x128xf32>
    %79 = arith.divf %77, %78 : vector<8x128xf32>
    %80 = vector.extract_strided_slice %67 {offsets = [0, 256], sizes = [8, 128], strides = [1, 1]} : vector<8x512xf32> to vector<8x128xf32>
    %81 = math.tanh %80 : vector<8x128xf32>
    %82 = vector.extract_strided_slice %67 {offsets = [0, 384], sizes = [8, 128], strides = [1, 1]} : vector<8x512xf32> to vector<8x128xf32>
    %83 = arith.negf %82 : vector<8x128xf32>
    %84 = math.exp %83 : vector<8x128xf32>
    %cst_38 = arith.constant 1.000000e+00 : f32
    %85 = vector.broadcast %cst_38 : f32 to vector<8x128xf32>
    %86 = arith.addf %85, %84 : vector<8x128xf32>
    %87 = arith.divf %85, %86 : vector<8x128xf32>
    %88 = arith.mulf %79, %56 : vector<8x128xf32>
    %89 = arith.mulf %73, %81 : vector<8x128xf32>
    %90 = arith.addf %88, %89 : vector<8x128xf32>
    %91 = math.tanh %90 : vector<8x128xf32>
    %92 = arith.mulf %87, %91 : vector<8x128xf32>
    %93 = arith.index_cast %62 : i32 to index
    %c0_39 = arith.constant 0 : index
    %94 = vector.load %arg14[%93, %c0_39] : memref<64x128xf32, #tpu.memory_space<vmem>>, vector<8x128xf32>
    tpu.vector_store %arg14[%93, %c0_39], %92 {strides = array<i32>} : memref<64x128xf32, #tpu.memory_space<vmem>>, vector<8x128xf32>,
    %c2_i32 = arith.constant 2 : i32
    %c8_i32_40 = arith.constant 8 : i32
    %95 = arith.muli %c2_i32, %c8_i32_40 : i32
    %96 = tpu.assume_multiple %95, 8 : i32
    %97 = arith.index_cast %96 : i32 to index
    %c0_41 = arith.constant 0 : index
    %98 = vector.load %arg13[%97, %c0_41] : memref<64x512xf32, #tpu.memory_space<vmem>>, vector<8x512xf32>
    %99 = arith.truncf %92 : vector<8x128xf32> to vector<8x128xbf16>
    %cst_42 = arith.constant dense<0.000000e+00> : vector<8x512xf32>
    %100 = tpu.matmul %99, %22, %cst_42 {dimension_numbers = #tpu.dot_dimension_numbers<[1], [0], [0], [1], [0, 0, 1, 1], [], []>} : vector<8x128xbf16>, vector<128x512xbf16>, vector<8x512xf32> -> vector<8x512xf32>
    %101 = arith.addf %98, %100 : vector<8x512xf32>
    %102 = vector.extract_strided_slice %101 {offsets = [0, 0], sizes = [8, 128], strides = [1, 1]} : vector<8x512xf32> to vector<8x128xf32>
    %103 = arith.negf %102 : vector<8x128xf32>
    %104 = math.exp %103 : vector<8x128xf32>
    %cst_43 = arith.constant 1.000000e+00 : f32
    %105 = vector.broadcast %cst_43 : f32 to vector<8x128xf32>
    %106 = arith.addf %105, %104 : vector<8x128xf32>
    %107 = arith.divf %105, %106 : vector<8x128xf32>
    %108 = vector.extract_strided_slice %101 {offsets = [0, 128], sizes = [8, 128], strides = [1, 1]} : vector<8x512xf32> to vector<8x128xf32>
    %109 = arith.negf %108 : vector<8x128xf32>
    %110 = math.exp %109 : vector<8x128xf32>
    %cst_44 = arith.constant 1.000000e+00 : f32
    %111 = vector.broadcast %cst_44 : f32 to vector<8x128xf32>
    %112 = arith.addf %111, %110 : vector<8x128xf32>
    %113 = arith.divf %111, %112 : vector<8x128xf32>
    %114 = vector.extract_strided_slice %101 {offsets = [0, 256], sizes = [8, 128], strides = [1, 1]} : vector<8x512xf32> to vector<8x128xf32>
    %115 = math.tanh %114 : vector<8x128xf32>
    %116 = vector.extract_strided_slice %101 {offsets = [0, 384], sizes = [8, 128], strides = [1, 1]} : vector<8x512xf32> to vector<8x128xf32>
    %117 = arith.negf %116 : vector<8x128xf32>
    %118 = math.exp %117 : vector<8x128xf32>
    %cst_45 = arith.constant 1.000000e+00 : f32
    %119 = vector.broadcast %cst_45 : f32 to vector<8x128xf32>
    %120 = arith.addf %119, %118 : vector<8x128xf32>
    %121 = arith.divf %119, %120 : vector<8x128xf32>
    %122 = arith.mulf %113, %90 : vector<8x128xf32>
    %123 = arith.mulf %107, %115 : vector<8x128xf32>
    %124 = arith.addf %122, %123 : vector<8x128xf32>
    %125 = math.tanh %124 : vector<8x128xf32>
    %126 = arith.mulf %121, %125 : vector<8x128xf32>
    %127 = arith.index_cast %96 : i32 to index
    %c0_46 = arith.constant 0 : index
    %128 = vector.load %arg14[%127, %c0_46] : memref<64x128xf32, #tpu.memory_space<vmem>>, vector<8x128xf32>
    tpu.vector_store %arg14[%127, %c0_46], %126 {strides = array<i32>} : memref<64x128xf32, #tpu.memory_space<vmem>>, vector<8x128xf32>,
    %c3_i32 = arith.constant 3 : i32
    %c8_i32_47 = arith.constant 8 : i32
    %129 = arith.muli %c3_i32, %c8_i32_47 : i32
    %130 = tpu.assume_multiple %129, 8 : i32
    %131 = arith.index_cast %130 : i32 to index
    %c0_48 = arith.constant 0 : index
    %132 = vector.load %arg13[%131, %c0_48] : memref<64x512xf32, #tpu.memory_space<vmem>>, vector<8x512xf32>
    %133 = arith.truncf %126 : vector<8x128xf32> to vector<8x128xbf16>
    %cst_49 = arith.constant dense<0.000000e+00> : vector<8x512xf32>
    %134 = tpu.matmul %133, %22, %cst_49 {dimension_numbers = #tpu.dot_dimension_numbers<[1], [0], [0], [1], [0, 0, 1, 1], [], []>} : vector<8x128xbf16>, vector<128x512xbf16>, vector<8x512xf32> -> vector<8x512xf32>
    %135 = arith.addf %132, %134 : vector<8x512xf32>
    %136 = vector.extract_strided_slice %135 {offsets = [0, 0], sizes = [8, 128], strides = [1, 1]} : vector<8x512xf32> to vector<8x128xf32>
    %137 = arith.negf %136 : vector<8x128xf32>
    %138 = math.exp %137 : vector<8x128xf32>
    %cst_50 = arith.constant 1.000000e+00 : f32
    %139 = vector.broadcast %cst_50 : f32 to vector<8x128xf32>
    %140 = arith.addf %139, %138 : vector<8x128xf32>
    %141 = arith.divf %139, %140 : vector<8x128xf32>
    %142 = vector.extract_strided_slice %135 {offsets = [0, 128], sizes = [8, 128], strides = [1, 1]} : vector<8x512xf32> to vector<8x128xf32>
    %143 = arith.negf %142 : vector<8x128xf32>
    %144 = math.exp %143 : vector<8x128xf32>
    %cst_51 = arith.constant 1.000000e+00 : f32
    %145 = vector.broadcast %cst_51 : f32 to vector<8x128xf32>
    %146 = arith.addf %145, %144 : vector<8x128xf32>
    %147 = arith.divf %145, %146 : vector<8x128xf32>
    %148 = vector.extract_strided_slice %135 {offsets = [0, 256], sizes = [8, 128], strides = [1, 1]} : vector<8x512xf32> to vector<8x128xf32>
    %149 = math.tanh %148 : vector<8x128xf32>
    %150 = vector.extract_strided_slice %135 {offsets = [0, 384], sizes = [8, 128], strides = [1, 1]} : vector<8x512xf32> to vector<8x128xf32>
    %151 = arith.negf %150 : vector<8x128xf32>
    %152 = math.exp %151 : vector<8x128xf32>
    %cst_52 = arith.constant 1.000000e+00 : f32
    %153 = vector.broadcast %cst_52 : f32 to vector<8x128xf32>
    %154 = arith.addf %153, %152 : vector<8x128xf32>
    %155 = arith.divf %153, %154 : vector<8x128xf32>
    %156 = arith.mulf %147, %124 : vector<8x128xf32>
    %157 = arith.mulf %141, %149 : vector<8x128xf32>
    %158 = arith.addf %156, %157 : vector<8x128xf32>
    %159 = math.tanh %158 : vector<8x128xf32>
    %160 = arith.mulf %155, %159 : vector<8x128xf32>
    %161 = arith.index_cast %130 : i32 to index
    %c0_53 = arith.constant 0 : index
    %162 = vector.load %arg14[%161, %c0_53] : memref<64x128xf32, #tpu.memory_space<vmem>>, vector<8x128xf32>
    tpu.vector_store %arg14[%161, %c0_53], %160 {strides = array<i32>} : memref<64x128xf32, #tpu.memory_space<vmem>>, vector<8x128xf32>,
    %c4_i32 = arith.constant 4 : i32
    %c8_i32_54 = arith.constant 8 : i32
    %163 = arith.muli %c4_i32, %c8_i32_54 : i32
    %164 = tpu.assume_multiple %163, 8 : i32
    %165 = arith.index_cast %164 : i32 to index
    %c0_55 = arith.constant 0 : index
    %166 = vector.load %arg13[%165, %c0_55] : memref<64x512xf32, #tpu.memory_space<vmem>>, vector<8x512xf32>
    %167 = arith.truncf %160 : vector<8x128xf32> to vector<8x128xbf16>
    %cst_56 = arith.constant dense<0.000000e+00> : vector<8x512xf32>
    %168 = tpu.matmul %167, %22, %cst_56 {dimension_numbers = #tpu.dot_dimension_numbers<[1], [0], [0], [1], [0, 0, 1, 1], [], []>} : vector<8x128xbf16>, vector<128x512xbf16>, vector<8x512xf32> -> vector<8x512xf32>
    %169 = arith.addf %166, %168 : vector<8x512xf32>
    %170 = vector.extract_strided_slice %169 {offsets = [0, 0], sizes = [8, 128], strides = [1, 1]} : vector<8x512xf32> to vector<8x128xf32>
    %171 = arith.negf %170 : vector<8x128xf32>
    %172 = math.exp %171 : vector<8x128xf32>
    %cst_57 = arith.constant 1.000000e+00 : f32
    %173 = vector.broadcast %cst_57 : f32 to vector<8x128xf32>
    %174 = arith.addf %173, %172 : vector<8x128xf32>
    %175 = arith.divf %173, %174 : vector<8x128xf32>
    %176 = vector.extract_strided_slice %169 {offsets = [0, 128], sizes = [8, 128], strides = [1, 1]} : vector<8x512xf32> to vector<8x128xf32>
    %177 = arith.negf %176 : vector<8x128xf32>
    %178 = math.exp %177 : vector<8x128xf32>
    %cst_58 = arith.constant 1.000000e+00 : f32
    %179 = vector.broadcast %cst_58 : f32 to vector<8x128xf32>
    %180 = arith.addf %179, %178 : vector<8x128xf32>
    %181 = arith.divf %179, %180 : vector<8x128xf32>
    %182 = vector.extract_strided_slice %169 {offsets = [0, 256], sizes = [8, 128], strides = [1, 1]} : vector<8x512xf32> to vector<8x128xf32>
    %183 = math.tanh %182 : vector<8x128xf32>
    %184 = vector.extract_strided_slice %169 {offsets = [0, 384], sizes = [8, 128], strides = [1, 1]} : vector<8x512xf32> to vector<8x128xf32>
    %185 = arith.negf %184 : vector<8x128xf32>
    %186 = math.exp %185 : vector<8x128xf32>
    %cst_59 = arith.constant 1.000000e+00 : f32
    %187 = vector.broadcast %cst_59 : f32 to vector<8x128xf32>
    %188 = arith.addf %187, %186 : vector<8x128xf32>
    %189 = arith.divf %187, %188 : vector<8x128xf32>
    %190 = arith.mulf %181, %158 : vector<8x128xf32>
    %191 = arith.mulf %175, %183 : vector<8x128xf32>
    %192 = arith.addf %190, %191 : vector<8x128xf32>
    %193 = math.tanh %192 : vector<8x128xf32>
    %194 = arith.mulf %189, %193 : vector<8x128xf32>
    %195 = arith.index_cast %164 : i32 to index
    %c0_60 = arith.constant 0 : index
    %196 = vector.load %arg14[%195, %c0_60] : memref<64x128xf32, #tpu.memory_space<vmem>>, vector<8x128xf32>
    tpu.vector_store %arg14[%195, %c0_60], %194 {strides = array<i32>} : memref<64x128xf32, #tpu.memory_space<vmem>>, vector<8x128xf32>,
    %c5_i32 = arith.constant 5 : i32
    %c8_i32_61 = arith.constant 8 : i32
    %197 = arith.muli %c5_i32, %c8_i32_61 : i32
    %198 = tpu.assume_multiple %197, 8 : i32
    %199 = arith.index_cast %198 : i32 to index
    %c0_62 = arith.constant 0 : index
    %200 = vector.load %arg13[%199, %c0_62] : memref<64x512xf32, #tpu.memory_space<vmem>>, vector<8x512xf32>
    %201 = arith.truncf %194 : vector<8x128xf32> to vector<8x128xbf16>
    %cst_63 = arith.constant dense<0.000000e+00> : vector<8x512xf32>
    %202 = tpu.matmul %201, %22, %cst_63 {dimension_numbers = #tpu.dot_dimension_numbers<[1], [0], [0], [1], [0, 0, 1, 1], [], []>} : vector<8x128xbf16>, vector<128x512xbf16>, vector<8x512xf32> -> vector<8x512xf32>
    %203 = arith.addf %200, %202 : vector<8x512xf32>
    %204 = vector.extract_strided_slice %203 {offsets = [0, 0], sizes = [8, 128], strides = [1, 1]} : vector<8x512xf32> to vector<8x128xf32>
    %205 = arith.negf %204 : vector<8x128xf32>
    %206 = math.exp %205 : vector<8x128xf32>
    %cst_64 = arith.constant 1.000000e+00 : f32
    %207 = vector.broadcast %cst_64 : f32 to vector<8x128xf32>
    %208 = arith.addf %207, %206 : vector<8x128xf32>
    %209 = arith.divf %207, %208 : vector<8x128xf32>
    %210 = vector.extract_strided_slice %203 {offsets = [0, 128], sizes = [8, 128], strides = [1, 1]} : vector<8x512xf32> to vector<8x128xf32>
    %211 = arith.negf %210 : vector<8x128xf32>
    %212 = math.exp %211 : vector<8x128xf32>
    %cst_65 = arith.constant 1.000000e+00 : f32
    %213 = vector.broadcast %cst_65 : f32 to vector<8x128xf32>
    %214 = arith.addf %213, %212 : vector<8x128xf32>
    %215 = arith.divf %213, %214 : vector<8x128xf32>
    %216 = vector.extract_strided_slice %203 {offsets = [0, 256], sizes = [8, 128], strides = [1, 1]} : vector<8x512xf32> to vector<8x128xf32>
    %217 = math.tanh %216 : vector<8x128xf32>
    %218 = vector.extract_strided_slice %203 {offsets = [0, 384], sizes = [8, 128], strides = [1, 1]} : vector<8x512xf32> to vector<8x128xf32>
    %219 = arith.negf %218 : vector<8x128xf32>
    %220 = math.exp %219 : vector<8x128xf32>
    %cst_66 = arith.constant 1.000000e+00 : f32
    %221 = vector.broadcast %cst_66 : f32 to vector<8x128xf32>
    %222 = arith.addf %221, %220 : vector<8x128xf32>
    %223 = arith.divf %221, %222 : vector<8x128xf32>
    %224 = arith.mulf %215, %192 : vector<8x128xf32>
    %225 = arith.mulf %209, %217 : vector<8x128xf32>
    %226 = arith.addf %224, %225 : vector<8x128xf32>
    %227 = math.tanh %226 : vector<8x128xf32>
    %228 = arith.mulf %223, %227 : vector<8x128xf32>
    %229 = arith.index_cast %198 : i32 to index
    %c0_67 = arith.constant 0 : index
    %230 = vector.load %arg14[%229, %c0_67] : memref<64x128xf32, #tpu.memory_space<vmem>>, vector<8x128xf32>
    tpu.vector_store %arg14[%229, %c0_67], %228 {strides = array<i32>} : memref<64x128xf32, #tpu.memory_space<vmem>>, vector<8x128xf32>,
    %c6_i32 = arith.constant 6 : i32
    %c8_i32_68 = arith.constant 8 : i32
    %231 = arith.muli %c6_i32, %c8_i32_68 : i32
    %232 = tpu.assume_multiple %231, 8 : i32
    %233 = arith.index_cast %232 : i32 to index
    %c0_69 = arith.constant 0 : index
    %234 = vector.load %arg13[%233, %c0_69] : memref<64x512xf32, #tpu.memory_space<vmem>>, vector<8x512xf32>
    %235 = arith.truncf %228 : vector<8x128xf32> to vector<8x128xbf16>
    %cst_70 = arith.constant dense<0.000000e+00> : vector<8x512xf32>
    %236 = tpu.matmul %235, %22, %cst_70 {dimension_numbers = #tpu.dot_dimension_numbers<[1], [0], [0], [1], [0, 0, 1, 1], [], []>} : vector<8x128xbf16>, vector<128x512xbf16>, vector<8x512xf32> -> vector<8x512xf32>
    %237 = arith.addf %234, %236 : vector<8x512xf32>
    %238 = vector.extract_strided_slice %237 {offsets = [0, 0], sizes = [8, 128], strides = [1, 1]} : vector<8x512xf32> to vector<8x128xf32>
    %239 = arith.negf %238 : vector<8x128xf32>
    %240 = math.exp %239 : vector<8x128xf32>
    %cst_71 = arith.constant 1.000000e+00 : f32
    %241 = vector.broadcast %cst_71 : f32 to vector<8x128xf32>
    %242 = arith.addf %241, %240 : vector<8x128xf32>
    %243 = arith.divf %241, %242 : vector<8x128xf32>
    %244 = vector.extract_strided_slice %237 {offsets = [0, 128], sizes = [8, 128], strides = [1, 1]} : vector<8x512xf32> to vector<8x128xf32>
    %245 = arith.negf %244 : vector<8x128xf32>
    %246 = math.exp %245 : vector<8x128xf32>
    %cst_72 = arith.constant 1.000000e+00 : f32
    %247 = vector.broadcast %cst_72 : f32 to vector<8x128xf32>
    %248 = arith.addf %247, %246 : vector<8x128xf32>
    %249 = arith.divf %247, %248 : vector<8x128xf32>
    %250 = vector.extract_strided_slice %237 {offsets = [0, 256], sizes = [8, 128], strides = [1, 1]} : vector<8x512xf32> to vector<8x128xf32>
    %251 = math.tanh %250 : vector<8x128xf32>
    %252 = vector.extract_strided_slice %237 {offsets = [0, 384], sizes = [8, 128], strides = [1, 1]} : vector<8x512xf32> to vector<8x128xf32>
    %253 = arith.negf %252 : vector<8x128xf32>
    %254 = math.exp %253 : vector<8x128xf32>
    %cst_73 = arith.constant 1.000000e+00 : f32
    %255 = vector.broadcast %cst_73 : f32 to vector<8x128xf32>
    %256 = arith.addf %255, %254 : vector<8x128xf32>
    %257 = arith.divf %255, %256 : vector<8x128xf32>
    %258 = arith.mulf %249, %226 : vector<8x128xf32>
    %259 = arith.mulf %243, %251 : vector<8x128xf32>
    %260 = arith.addf %258, %259 : vector<8x128xf32>
    %261 = math.tanh %260 : vector<8x128xf32>
    %262 = arith.mulf %257, %261 : vector<8x128xf32>
    %263 = arith.index_cast %232 : i32 to index
    %c0_74 = arith.constant 0 : index
    %264 = vector.load %arg14[%263, %c0_74] : memref<64x128xf32, #tpu.memory_space<vmem>>, vector<8x128xf32>
    tpu.vector_store %arg14[%263, %c0_74], %262 {strides = array<i32>} : memref<64x128xf32, #tpu.memory_space<vmem>>, vector<8x128xf32>,
    %c7_i32 = arith.constant 7 : i32
    %c8_i32_75 = arith.constant 8 : i32
    %265 = arith.muli %c7_i32, %c8_i32_75 : i32
    %266 = tpu.assume_multiple %265, 8 : i32
    %267 = arith.index_cast %266 : i32 to index
    %c0_76 = arith.constant 0 : index
    %268 = vector.load %arg13[%267, %c0_76] : memref<64x512xf32, #tpu.memory_space<vmem>>, vector<8x512xf32>
    %269 = arith.truncf %262 : vector<8x128xf32> to vector<8x128xbf16>
    %cst_77 = arith.constant dense<0.000000e+00> : vector<8x512xf32>
    %270 = tpu.matmul %269, %22, %cst_77 {dimension_numbers = #tpu.dot_dimension_numbers<[1], [0], [0], [1], [0, 0, 1, 1], [], []>} : vector<8x128xbf16>, vector<128x512xbf16>, vector<8x512xf32> -> vector<8x512xf32>
    %271 = arith.addf %268, %270 : vector<8x512xf32>
    %272 = vector.extract_strided_slice %271 {offsets = [0, 0], sizes = [8, 128], strides = [1, 1]} : vector<8x512xf32> to vector<8x128xf32>
    %273 = arith.negf %272 : vector<8x128xf32>
    %274 = math.exp %273 : vector<8x128xf32>
    %cst_78 = arith.constant 1.000000e+00 : f32
    %275 = vector.broadcast %cst_78 : f32 to vector<8x128xf32>
    %276 = arith.addf %275, %274 : vector<8x128xf32>
    %277 = arith.divf %275, %276 : vector<8x128xf32>
    %278 = vector.extract_strided_slice %271 {offsets = [0, 128], sizes = [8, 128], strides = [1, 1]} : vector<8x512xf32> to vector<8x128xf32>
    %279 = arith.negf %278 : vector<8x128xf32>
    %280 = math.exp %279 : vector<8x128xf32>
    %cst_79 = arith.constant 1.000000e+00 : f32
    %281 = vector.broadcast %cst_79 : f32 to vector<8x128xf32>
    %282 = arith.addf %281, %280 : vector<8x128xf32>
    %283 = arith.divf %281, %282 : vector<8x128xf32>
    %284 = vector.extract_strided_slice %271 {offsets = [0, 256], sizes = [8, 128], strides = [1, 1]} : vector<8x512xf32> to vector<8x128xf32>
    %285 = math.tanh %284 : vector<8x128xf32>
    %286 = vector.extract_strided_slice %271 {offsets = [0, 384], sizes = [8, 128], strides = [1, 1]} : vector<8x512xf32> to vector<8x128xf32>
    %287 = arith.negf %286 : vector<8x128xf32>
    %288 = math.exp %287 : vector<8x128xf32>
    %cst_80 = arith.constant 1.000000e+00 : f32
    %289 = vector.broadcast %cst_80 : f32 to vector<8x128xf32>
    %290 = arith.addf %289, %288 : vector<8x128xf32>
    %291 = arith.divf %289, %290 : vector<8x128xf32>
    %292 = arith.mulf %283, %260 : vector<8x128xf32>
    %293 = arith.mulf %277, %285 : vector<8x128xf32>
    %294 = arith.addf %292, %293 : vector<8x128xf32>
    %295 = math.tanh %294 : vector<8x128xf32>
    %296 = arith.mulf %291, %295 : vector<8x128xf32>
    %297 = arith.index_cast %266 : i32 to index
    %c0_81 = arith.constant 0 : index
    %298 = vector.load %arg14[%297, %c0_81] : memref<64x128xf32, #tpu.memory_space<vmem>>, vector<8x128xf32>
    tpu.vector_store %arg14[%297, %c0_81], %296 {strides = array<i32>} : memref<64x128xf32, #tpu.memory_space<vmem>>, vector<8x128xf32>,
    %c8_i32_82 = arith.constant 8 : i32
    %c0_83 = arith.constant 0 : index
    %c0_84 = arith.constant 0 : index
    %c0_85 = arith.constant 0 : index
    %299 = vector.load %arg11[%c0_83, %c0_84, %c0_85] : memref<2x8x128xf32, #tpu.memory_space<vmem>>, vector<1x8x128xf32>
    %300 = vector.shape_cast %299 : vector<1x8x128xf32> to vector<8x128xf32>
    %301 = vector.shape_cast %296 : vector<8x128xf32> to vector<1x8x128xf32>
    tpu.vector_store %arg11[%c0_83, %c0_84, %c0_85], %301 {strides = array<i32>} : memref<2x8x128xf32, #tpu.memory_space<vmem>>, vector<1x8x128xf32>,
    %c0_86 = arith.constant 0 : index
    %c0_87 = arith.constant 0 : index
    %c0_88 = arith.constant 0 : index
    %302 = vector.load %arg12[%c0_86, %c0_87, %c0_88] : memref<2x8x128xf32, #tpu.memory_space<vmem>>, vector<1x8x128xf32>
    %303 = vector.shape_cast %302 : vector<1x8x128xf32> to vector<8x128xf32>
    %304 = vector.shape_cast %294 : vector<8x128xf32> to vector<1x8x128xf32>
    tpu.vector_store %arg12[%c0_86, %c0_87, %c0_88], %304 {strides = array<i32>} : memref<2x8x128xf32, #tpu.memory_space<vmem>>, vector<1x8x128xf32>,
    %c0_89 = arith.constant 0 : index
    %c0_90 = arith.constant 0 : index
    %305 = vector.load %arg14[%c0_89, %c0_90] : memref<64x128xf32, #tpu.memory_space<vmem>>, vector<64x128xf32>
    %306 = arith.truncf %305 : vector<64x128xf32> to vector<64x128xbf16>
    %c1 = arith.constant 1 : index
    %c0_91 = arith.constant 0 : index
    %c0_92 = arith.constant 0 : index
    %307 = vector.load %arg5[%c1, %c0_91, %c0_92] : memref<2x128x512xbf16, #tpu.memory_space<vmem>>, vector<1x128x512xbf16>
    %308 = vector.shape_cast %307 : vector<1x128x512xbf16> to vector<128x512xbf16>
    %cst_93 = arith.constant dense<0.000000e+00> : vector<64x512xf32>
    %309 = tpu.matmul %306, %308, %cst_93 {dimension_numbers = #tpu.dot_dimension_numbers<[1], [0], [0], [1], [0, 0, 1, 1], [], []>} : vector<64x128xbf16>, vector<128x512xbf16>, vector<64x512xf32> -> vector<64x512xf32>
    %c1_94 = arith.constant 1 : index
    %c0_95 = arith.constant 0 : index
    %c0_96 = arith.constant 0 : index
    %310 = vector.load %arg7[%c1_94, %c0_95, %c0_96] : memref<2x1x512xf32, #tpu.memory_space<vmem>>, vector<1x1x512xf32>
    %311 = vector.shape_cast %310 : vector<1x1x512xf32> to vector<1x512xf32>
    %312 = vector.broadcast %311 : vector<1x512xf32> to vector<64x512xf32>
    %313 = arith.addf %309, %312 : vector<64x512xf32>
    %c0_97 = arith.constant 0 : index
    %c0_98 = arith.constant 0 : index
    %314 = vector.load %arg13[%c0_97, %c0_98] : memref<64x512xf32, #tpu.memory_space<vmem>>, vector<64x512xf32>
    tpu.vector_store %arg13[%c0_97, %c0_98], %313 {strides = array<i32>} : memref<64x512xf32, #tpu.memory_space<vmem>>, vector<64x512xf32>,
    %c1_99 = arith.constant 1 : index
    %c0_100 = arith.constant 0 : index
    %c0_101 = arith.constant 0 : index
    %315 = vector.load %arg6[%c1_99, %c0_100, %c0_101] : memref<2x128x512xbf16, #tpu.memory_space<vmem>>, vector<1x128x512xbf16>
    %316 = vector.shape_cast %315 : vector<1x128x512xbf16> to vector<128x512xbf16>
    %c1_102 = arith.constant 1 : index
    %c0_103 = arith.constant 0 : index
    %c0_104 = arith.constant 0 : index
    %317 = vector.load %arg3[%c1_102, %c0_103, %c0_104] : memref<2x8x128xf32, #tpu.memory_space<vmem>>, vector<1x8x128xf32>
    %318 = vector.shape_cast %317 : vector<1x8x128xf32> to vector<8x128xf32>
    %c1_105 = arith.constant 1 : index
    %c0_106 = arith.constant 0 : index
    %c0_107 = arith.constant 0 : index
    %319 = vector.load %arg4[%c1_105, %c0_106, %c0_107] : memref<2x8x128xf32, #tpu.memory_space<vmem>>, vector<1x8x128xf32>
    %320 = vector.shape_cast %319 : vector<1x8x128xf32> to vector<8x128xf32>
    %c0_i32_108 = arith.constant 0 : i32
    %c8_i32_109 = arith.constant 8 : i32
    %321 = arith.muli %c0_i32_108, %c8_i32_109 : i32
    %322 = tpu.assume_multiple %321, 8 : i32
    %323 = arith.index_cast %322 : i32 to index
    %c0_110 = arith.constant 0 : index
    %324 = vector.load %arg13[%323, %c0_110] : memref<64x512xf32, #tpu.memory_space<vmem>>, vector<8x512xf32>
    %325 = arith.truncf %318 : vector<8x128xf32> to vector<8x128xbf16>
    %cst_111 = arith.constant dense<0.000000e+00> : vector<8x512xf32>
    %326 = tpu.matmul %325, %316, %cst_111 {dimension_numbers = #tpu.dot_dimension_numbers<[1], [0], [0], [1], [0, 0, 1, 1], [], []>} : vector<8x128xbf16>, vector<128x512xbf16>, vector<8x512xf32> -> vector<8x512xf32>
    %327 = arith.addf %324, %326 : vector<8x512xf32>
    %328 = vector.extract_strided_slice %327 {offsets = [0, 0], sizes = [8, 128], strides = [1, 1]} : vector<8x512xf32> to vector<8x128xf32>
    %329 = arith.negf %328 : vector<8x128xf32>
    %330 = math.exp %329 : vector<8x128xf32>
    %cst_112 = arith.constant 1.000000e+00 : f32
    %331 = vector.broadcast %cst_112 : f32 to vector<8x128xf32>
    %332 = arith.addf %331, %330 : vector<8x128xf32>
    %333 = arith.divf %331, %332 : vector<8x128xf32>
    %334 = vector.extract_strided_slice %327 {offsets = [0, 128], sizes = [8, 128], strides = [1, 1]} : vector<8x512xf32> to vector<8x128xf32>
    %335 = arith.negf %334 : vector<8x128xf32>
    %336 = math.exp %335 : vector<8x128xf32>
    %cst_113 = arith.constant 1.000000e+00 : f32
    %337 = vector.broadcast %cst_113 : f32 to vector<8x128xf32>
    %338 = arith.addf %337, %336 : vector<8x128xf32>
    %339 = arith.divf %337, %338 : vector<8x128xf32>
    %340 = vector.extract_strided_slice %327 {offsets = [0, 256], sizes = [8, 128], strides = [1, 1]} : vector<8x512xf32> to vector<8x128xf32>
    %341 = math.tanh %340 : vector<8x128xf32>
    %342 = vector.extract_strided_slice %327 {offsets = [0, 384], sizes = [8, 128], strides = [1, 1]} : vector<8x512xf32> to vector<8x128xf32>
    %343 = arith.negf %342 : vector<8x128xf32>
    %344 = math.exp %343 : vector<8x128xf32>
    %cst_114 = arith.constant 1.000000e+00 : f32
    %345 = vector.broadcast %cst_114 : f32 to vector<8x128xf32>
    %346 = arith.addf %345, %344 : vector<8x128xf32>
    %347 = arith.divf %345, %346 : vector<8x128xf32>
    %348 = arith.mulf %339, %320 : vector<8x128xf32>
    %349 = arith.mulf %333, %341 : vector<8x128xf32>
    %350 = arith.addf %348, %349 : vector<8x128xf32>
    %351 = math.tanh %350 : vector<8x128xf32>
    %352 = arith.mulf %347, %351 : vector<8x128xf32>
    %353 = arith.index_cast %322 : i32 to index
    %c0_115 = arith.constant 0 : index
    %354 = vector.load %arg14[%353, %c0_115] : memref<64x128xf32, #tpu.memory_space<vmem>>, vector<8x128xf32>
    tpu.vector_store %arg14[%353, %c0_115], %352 {strides = array<i32>} : memref<64x128xf32, #tpu.memory_space<vmem>>, vector<8x128xf32>,
    %c1_i32_116 = arith.constant 1 : i32
    %c8_i32_117 = arith.constant 8 : i32
    %355 = arith.muli %c1_i32_116, %c8_i32_117 : i32
    %356 = tpu.assume_multiple %355, 8 : i32
    %357 = arith.index_cast %356 : i32 to index
    %c0_118 = arith.constant 0 : index
    %358 = vector.load %arg13[%357, %c0_118] : memref<64x512xf32, #tpu.memory_space<vmem>>, vector<8x512xf32>
    %359 = arith.truncf %352 : vector<8x128xf32> to vector<8x128xbf16>
    %cst_119 = arith.constant dense<0.000000e+00> : vector<8x512xf32>
    %360 = tpu.matmul %359, %316, %cst_119 {dimension_numbers = #tpu.dot_dimension_numbers<[1], [0], [0], [1], [0, 0, 1, 1], [], []>} : vector<8x128xbf16>, vector<128x512xbf16>, vector<8x512xf32> -> vector<8x512xf32>
    %361 = arith.addf %358, %360 : vector<8x512xf32>
    %362 = vector.extract_strided_slice %361 {offsets = [0, 0], sizes = [8, 128], strides = [1, 1]} : vector<8x512xf32> to vector<8x128xf32>
    %363 = arith.negf %362 : vector<8x128xf32>
    %364 = math.exp %363 : vector<8x128xf32>
    %cst_120 = arith.constant 1.000000e+00 : f32
    %365 = vector.broadcast %cst_120 : f32 to vector<8x128xf32>
    %366 = arith.addf %365, %364 : vector<8x128xf32>
    %367 = arith.divf %365, %366 : vector<8x128xf32>
    %368 = vector.extract_strided_slice %361 {offsets = [0, 128], sizes = [8, 128], strides = [1, 1]} : vector<8x512xf32> to vector<8x128xf32>
    %369 = arith.negf %368 : vector<8x128xf32>
    %370 = math.exp %369 : vector<8x128xf32>
    %cst_121 = arith.constant 1.000000e+00 : f32
    %371 = vector.broadcast %cst_121 : f32 to vector<8x128xf32>
    %372 = arith.addf %371, %370 : vector<8x128xf32>
    %373 = arith.divf %371, %372 : vector<8x128xf32>
    %374 = vector.extract_strided_slice %361 {offsets = [0, 256], sizes = [8, 128], strides = [1, 1]} : vector<8x512xf32> to vector<8x128xf32>
    %375 = math.tanh %374 : vector<8x128xf32>
    %376 = vector.extract_strided_slice %361 {offsets = [0, 384], sizes = [8, 128], strides = [1, 1]} : vector<8x512xf32> to vector<8x128xf32>
    %377 = arith.negf %376 : vector<8x128xf32>
    %378 = math.exp %377 : vector<8x128xf32>
    %cst_122 = arith.constant 1.000000e+00 : f32
    %379 = vector.broadcast %cst_122 : f32 to vector<8x128xf32>
    %380 = arith.addf %379, %378 : vector<8x128xf32>
    %381 = arith.divf %379, %380 : vector<8x128xf32>
    %382 = arith.mulf %373, %350 : vector<8x128xf32>
    %383 = arith.mulf %367, %375 : vector<8x128xf32>
    %384 = arith.addf %382, %383 : vector<8x128xf32>
    %385 = math.tanh %384 : vector<8x128xf32>
    %386 = arith.mulf %381, %385 : vector<8x128xf32>
    %387 = arith.index_cast %356 : i32 to index
    %c0_123 = arith.constant 0 : index
    %388 = vector.load %arg14[%387, %c0_123] : memref<64x128xf32, #tpu.memory_space<vmem>>, vector<8x128xf32>
    tpu.vector_store %arg14[%387, %c0_123], %386 {strides = array<i32>} : memref<64x128xf32, #tpu.memory_space<vmem>>, vector<8x128xf32>,
    %c2_i32_124 = arith.constant 2 : i32
    %c8_i32_125 = arith.constant 8 : i32
    %389 = arith.muli %c2_i32_124, %c8_i32_125 : i32
    %390 = tpu.assume_multiple %389, 8 : i32
    %391 = arith.index_cast %390 : i32 to index
    %c0_126 = arith.constant 0 : index
    %392 = vector.load %arg13[%391, %c0_126] : memref<64x512xf32, #tpu.memory_space<vmem>>, vector<8x512xf32>
    %393 = arith.truncf %386 : vector<8x128xf32> to vector<8x128xbf16>
    %cst_127 = arith.constant dense<0.000000e+00> : vector<8x512xf32>
    %394 = tpu.matmul %393, %316, %cst_127 {dimension_numbers = #tpu.dot_dimension_numbers<[1], [0], [0], [1], [0, 0, 1, 1], [], []>} : vector<8x128xbf16>, vector<128x512xbf16>, vector<8x512xf32> -> vector<8x512xf32>
    %395 = arith.addf %392, %394 : vector<8x512xf32>
    %396 = vector.extract_strided_slice %395 {offsets = [0, 0], sizes = [8, 128], strides = [1, 1]} : vector<8x512xf32> to vector<8x128xf32>
    %397 = arith.negf %396 : vector<8x128xf32>
    %398 = math.exp %397 : vector<8x128xf32>
    %cst_128 = arith.constant 1.000000e+00 : f32
    %399 = vector.broadcast %cst_128 : f32 to vector<8x128xf32>
    %400 = arith.addf %399, %398 : vector<8x128xf32>
    %401 = arith.divf %399, %400 : vector<8x128xf32>
    %402 = vector.extract_strided_slice %395 {offsets = [0, 128], sizes = [8, 128], strides = [1, 1]} : vector<8x512xf32> to vector<8x128xf32>
    %403 = arith.negf %402 : vector<8x128xf32>
    %404 = math.exp %403 : vector<8x128xf32>
    %cst_129 = arith.constant 1.000000e+00 : f32
    %405 = vector.broadcast %cst_129 : f32 to vector<8x128xf32>
    %406 = arith.addf %405, %404 : vector<8x128xf32>
    %407 = arith.divf %405, %406 : vector<8x128xf32>
    %408 = vector.extract_strided_slice %395 {offsets = [0, 256], sizes = [8, 128], strides = [1, 1]} : vector<8x512xf32> to vector<8x128xf32>
    %409 = math.tanh %408 : vector<8x128xf32>
    %410 = vector.extract_strided_slice %395 {offsets = [0, 384], sizes = [8, 128], strides = [1, 1]} : vector<8x512xf32> to vector<8x128xf32>
    %411 = arith.negf %410 : vector<8x128xf32>
    %412 = math.exp %411 : vector<8x128xf32>
    %cst_130 = arith.constant 1.000000e+00 : f32
    %413 = vector.broadcast %cst_130 : f32 to vector<8x128xf32>
    %414 = arith.addf %413, %412 : vector<8x128xf32>
    %415 = arith.divf %413, %414 : vector<8x128xf32>
    %416 = arith.mulf %407, %384 : vector<8x128xf32>
    %417 = arith.mulf %401, %409 : vector<8x128xf32>
    %418 = arith.addf %416, %417 : vector<8x128xf32>
    %419 = math.tanh %418 : vector<8x128xf32>
    %420 = arith.mulf %415, %419 : vector<8x128xf32>
    %421 = arith.index_cast %390 : i32 to index
    %c0_131 = arith.constant 0 : index
    %422 = vector.load %arg14[%421, %c0_131] : memref<64x128xf32, #tpu.memory_space<vmem>>, vector<8x128xf32>
    tpu.vector_store %arg14[%421, %c0_131], %420 {strides = array<i32>} : memref<64x128xf32, #tpu.memory_space<vmem>>, vector<8x128xf32>,
    %c3_i32_132 = arith.constant 3 : i32
    %c8_i32_133 = arith.constant 8 : i32
    %423 = arith.muli %c3_i32_132, %c8_i32_133 : i32
    %424 = tpu.assume_multiple %423, 8 : i32
    %425 = arith.index_cast %424 : i32 to index
    %c0_134 = arith.constant 0 : index
    %426 = vector.load %arg13[%425, %c0_134] : memref<64x512xf32, #tpu.memory_space<vmem>>, vector<8x512xf32>
    %427 = arith.truncf %420 : vector<8x128xf32> to vector<8x128xbf16>
    %cst_135 = arith.constant dense<0.000000e+00> : vector<8x512xf32>
    %428 = tpu.matmul %427, %316, %cst_135 {dimension_numbers = #tpu.dot_dimension_numbers<[1], [0], [0], [1], [0, 0, 1, 1], [], []>} : vector<8x128xbf16>, vector<128x512xbf16>, vector<8x512xf32> -> vector<8x512xf32>
    %429 = arith.addf %426, %428 : vector<8x512xf32>
    %430 = vector.extract_strided_slice %429 {offsets = [0, 0], sizes = [8, 128], strides = [1, 1]} : vector<8x512xf32> to vector<8x128xf32>
    %431 = arith.negf %430 : vector<8x128xf32>
    %432 = math.exp %431 : vector<8x128xf32>
    %cst_136 = arith.constant 1.000000e+00 : f32
    %433 = vector.broadcast %cst_136 : f32 to vector<8x128xf32>
    %434 = arith.addf %433, %432 : vector<8x128xf32>
    %435 = arith.divf %433, %434 : vector<8x128xf32>
    %436 = vector.extract_strided_slice %429 {offsets = [0, 128], sizes = [8, 128], strides = [1, 1]} : vector<8x512xf32> to vector<8x128xf32>
    %437 = arith.negf %436 : vector<8x128xf32>
    %438 = math.exp %437 : vector<8x128xf32>
    %cst_137 = arith.constant 1.000000e+00 : f32
    %439 = vector.broadcast %cst_137 : f32 to vector<8x128xf32>
    %440 = arith.addf %439, %438 : vector<8x128xf32>
    %441 = arith.divf %439, %440 : vector<8x128xf32>
    %442 = vector.extract_strided_slice %429 {offsets = [0, 256], sizes = [8, 128], strides = [1, 1]} : vector<8x512xf32> to vector<8x128xf32>
    %443 = math.tanh %442 : vector<8x128xf32>
    %444 = vector.extract_strided_slice %429 {offsets = [0, 384], sizes = [8, 128], strides = [1, 1]} : vector<8x512xf32> to vector<8x128xf32>
    %445 = arith.negf %444 : vector<8x128xf32>
    %446 = math.exp %445 : vector<8x128xf32>
    %cst_138 = arith.constant 1.000000e+00 : f32
    %447 = vector.broadcast %cst_138 : f32 to vector<8x128xf32>
    %448 = arith.addf %447, %446 : vector<8x128xf32>
    %449 = arith.divf %447, %448 : vector<8x128xf32>
    %450 = arith.mulf %441, %418 : vector<8x128xf32>
    %451 = arith.mulf %435, %443 : vector<8x128xf32>
    %452 = arith.addf %450, %451 : vector<8x128xf32>
    %453 = math.tanh %452 : vector<8x128xf32>
    %454 = arith.mulf %449, %453 : vector<8x128xf32>
    %455 = arith.index_cast %424 : i32 to index
    %c0_139 = arith.constant 0 : index
    %456 = vector.load %arg14[%455, %c0_139] : memref<64x128xf32, #tpu.memory_space<vmem>>, vector<8x128xf32>
    tpu.vector_store %arg14[%455, %c0_139], %454 {strides = array<i32>} : memref<64x128xf32, #tpu.memory_space<vmem>>, vector<8x128xf32>,
    %c4_i32_140 = arith.constant 4 : i32
    %c8_i32_141 = arith.constant 8 : i32
    %457 = arith.muli %c4_i32_140, %c8_i32_141 : i32
    %458 = tpu.assume_multiple %457, 8 : i32
    %459 = arith.index_cast %458 : i32 to index
    %c0_142 = arith.constant 0 : index
    %460 = vector.load %arg13[%459, %c0_142] : memref<64x512xf32, #tpu.memory_space<vmem>>, vector<8x512xf32>
    %461 = arith.truncf %454 : vector<8x128xf32> to vector<8x128xbf16>
    %cst_143 = arith.constant dense<0.000000e+00> : vector<8x512xf32>
    %462 = tpu.matmul %461, %316, %cst_143 {dimension_numbers = #tpu.dot_dimension_numbers<[1], [0], [0], [1], [0, 0, 1, 1], [], []>} : vector<8x128xbf16>, vector<128x512xbf16>, vector<8x512xf32> -> vector<8x512xf32>
    %463 = arith.addf %460, %462 : vector<8x512xf32>
    %464 = vector.extract_strided_slice %463 {offsets = [0, 0], sizes = [8, 128], strides = [1, 1]} : vector<8x512xf32> to vector<8x128xf32>
    %465 = arith.negf %464 : vector<8x128xf32>
    %466 = math.exp %465 : vector<8x128xf32>
    %cst_144 = arith.constant 1.000000e+00 : f32
    %467 = vector.broadcast %cst_144 : f32 to vector<8x128xf32>
    %468 = arith.addf %467, %466 : vector<8x128xf32>
    %469 = arith.divf %467, %468 : vector<8x128xf32>
    %470 = vector.extract_strided_slice %463 {offsets = [0, 128], sizes = [8, 128], strides = [1, 1]} : vector<8x512xf32> to vector<8x128xf32>
    %471 = arith.negf %470 : vector<8x128xf32>
    %472 = math.exp %471 : vector<8x128xf32>
    %cst_145 = arith.constant 1.000000e+00 : f32
    %473 = vector.broadcast %cst_145 : f32 to vector<8x128xf32>
    %474 = arith.addf %473, %472 : vector<8x128xf32>
    %475 = arith.divf %473, %474 : vector<8x128xf32>
    %476 = vector.extract_strided_slice %463 {offsets = [0, 256], sizes = [8, 128], strides = [1, 1]} : vector<8x512xf32> to vector<8x128xf32>
    %477 = math.tanh %476 : vector<8x128xf32>
    %478 = vector.extract_strided_slice %463 {offsets = [0, 384], sizes = [8, 128], strides = [1, 1]} : vector<8x512xf32> to vector<8x128xf32>
    %479 = arith.negf %478 : vector<8x128xf32>
    %480 = math.exp %479 : vector<8x128xf32>
    %cst_146 = arith.constant 1.000000e+00 : f32
    %481 = vector.broadcast %cst_146 : f32 to vector<8x128xf32>
    %482 = arith.addf %481, %480 : vector<8x128xf32>
    %483 = arith.divf %481, %482 : vector<8x128xf32>
    %484 = arith.mulf %475, %452 : vector<8x128xf32>
    %485 = arith.mulf %469, %477 : vector<8x128xf32>
    %486 = arith.addf %484, %485 : vector<8x128xf32>
    %487 = math.tanh %486 : vector<8x128xf32>
    %488 = arith.mulf %483, %487 : vector<8x128xf32>
    %489 = arith.index_cast %458 : i32 to index
    %c0_147 = arith.constant 0 : index
    %490 = vector.load %arg14[%489, %c0_147] : memref<64x128xf32, #tpu.memory_space<vmem>>, vector<8x128xf32>
    tpu.vector_store %arg14[%489, %c0_147], %488 {strides = array<i32>} : memref<64x128xf32, #tpu.memory_space<vmem>>, vector<8x128xf32>,
    %c5_i32_148 = arith.constant 5 : i32
    %c8_i32_149 = arith.constant 8 : i32
    %491 = arith.muli %c5_i32_148, %c8_i32_149 : i32
    %492 = tpu.assume_multiple %491, 8 : i32
    %493 = arith.index_cast %492 : i32 to index
    %c0_150 = arith.constant 0 : index
    %494 = vector.load %arg13[%493, %c0_150] : memref<64x512xf32, #tpu.memory_space<vmem>>, vector<8x512xf32>
    %495 = arith.truncf %488 : vector<8x128xf32> to vector<8x128xbf16>
    %cst_151 = arith.constant dense<0.000000e+00> : vector<8x512xf32>
    %496 = tpu.matmul %495, %316, %cst_151 {dimension_numbers = #tpu.dot_dimension_numbers<[1], [0], [0], [1], [0, 0, 1, 1], [], []>} : vector<8x128xbf16>, vector<128x512xbf16>, vector<8x512xf32> -> vector<8x512xf32>
    %497 = arith.addf %494, %496 : vector<8x512xf32>
    %498 = vector.extract_strided_slice %497 {offsets = [0, 0], sizes = [8, 128], strides = [1, 1]} : vector<8x512xf32> to vector<8x128xf32>
    %499 = arith.negf %498 : vector<8x128xf32>
    %500 = math.exp %499 : vector<8x128xf32>
    %cst_152 = arith.constant 1.000000e+00 : f32
    %501 = vector.broadcast %cst_152 : f32 to vector<8x128xf32>
    %502 = arith.addf %501, %500 : vector<8x128xf32>
    %503 = arith.divf %501, %502 : vector<8x128xf32>
    %504 = vector.extract_strided_slice %497 {offsets = [0, 128], sizes = [8, 128], strides = [1, 1]} : vector<8x512xf32> to vector<8x128xf32>
    %505 = arith.negf %504 : vector<8x128xf32>
    %506 = math.exp %505 : vector<8x128xf32>
    %cst_153 = arith.constant 1.000000e+00 : f32
    %507 = vector.broadcast %cst_153 : f32 to vector<8x128xf32>
    %508 = arith.addf %507, %506 : vector<8x128xf32>
    %509 = arith.divf %507, %508 : vector<8x128xf32>
    %510 = vector.extract_strided_slice %497 {offsets = [0, 256], sizes = [8, 128], strides = [1, 1]} : vector<8x512xf32> to vector<8x128xf32>
    %511 = math.tanh %510 : vector<8x128xf32>
    %512 = vector.extract_strided_slice %497 {offsets = [0, 384], sizes = [8, 128], strides = [1, 1]} : vector<8x512xf32> to vector<8x128xf32>
    %513 = arith.negf %512 : vector<8x128xf32>
    %514 = math.exp %513 : vector<8x128xf32>
    %cst_154 = arith.constant 1.000000e+00 : f32
    %515 = vector.broadcast %cst_154 : f32 to vector<8x128xf32>
    %516 = arith.addf %515, %514 : vector<8x128xf32>
    %517 = arith.divf %515, %516 : vector<8x128xf32>
    %518 = arith.mulf %509, %486 : vector<8x128xf32>
    %519 = arith.mulf %503, %511 : vector<8x128xf32>
    %520 = arith.addf %518, %519 : vector<8x128xf32>
    %521 = math.tanh %520 : vector<8x128xf32>
    %522 = arith.mulf %517, %521 : vector<8x128xf32>
    %523 = arith.index_cast %492 : i32 to index
    %c0_155 = arith.constant 0 : index
    %524 = vector.load %arg14[%523, %c0_155] : memref<64x128xf32, #tpu.memory_space<vmem>>, vector<8x128xf32>
    tpu.vector_store %arg14[%523, %c0_155], %522 {strides = array<i32>} : memref<64x128xf32, #tpu.memory_space<vmem>>, vector<8x128xf32>,
    %c6_i32_156 = arith.constant 6 : i32
    %c8_i32_157 = arith.constant 8 : i32
    %525 = arith.muli %c6_i32_156, %c8_i32_157 : i32
    %526 = tpu.assume_multiple %525, 8 : i32
    %527 = arith.index_cast %526 : i32 to index
    %c0_158 = arith.constant 0 : index
    %528 = vector.load %arg13[%527, %c0_158] : memref<64x512xf32, #tpu.memory_space<vmem>>, vector<8x512xf32>
    %529 = arith.truncf %522 : vector<8x128xf32> to vector<8x128xbf16>
    %cst_159 = arith.constant dense<0.000000e+00> : vector<8x512xf32>
    %530 = tpu.matmul %529, %316, %cst_159 {dimension_numbers = #tpu.dot_dimension_numbers<[1], [0], [0], [1], [0, 0, 1, 1], [], []>} : vector<8x128xbf16>, vector<128x512xbf16>, vector<8x512xf32> -> vector<8x512xf32>
    %531 = arith.addf %528, %530 : vector<8x512xf32>
    %532 = vector.extract_strided_slice %531 {offsets = [0, 0], sizes = [8, 128], strides = [1, 1]} : vector<8x512xf32> to vector<8x128xf32>
    %533 = arith.negf %532 : vector<8x128xf32>
    %534 = math.exp %533 : vector<8x128xf32>
    %cst_160 = arith.constant 1.000000e+00 : f32
    %535 = vector.broadcast %cst_160 : f32 to vector<8x128xf32>
    %536 = arith.addf %535, %534 : vector<8x128xf32>
    %537 = arith.divf %535, %536 : vector<8x128xf32>
    %538 = vector.extract_strided_slice %531 {offsets = [0, 128], sizes = [8, 128], strides = [1, 1]} : vector<8x512xf32> to vector<8x128xf32>
    %539 = arith.negf %538 : vector<8x128xf32>
    %540 = math.exp %539 : vector<8x128xf32>
    %cst_161 = arith.constant 1.000000e+00 : f32
    %541 = vector.broadcast %cst_161 : f32 to vector<8x128xf32>
    %542 = arith.addf %541, %540 : vector<8x128xf32>
    %543 = arith.divf %541, %542 : vector<8x128xf32>
    %544 = vector.extract_strided_slice %531 {offsets = [0, 256], sizes = [8, 128], strides = [1, 1]} : vector<8x512xf32> to vector<8x128xf32>
    %545 = math.tanh %544 : vector<8x128xf32>
    %546 = vector.extract_strided_slice %531 {offsets = [0, 384], sizes = [8, 128], strides = [1, 1]} : vector<8x512xf32> to vector<8x128xf32>
    %547 = arith.negf %546 : vector<8x128xf32>
    %548 = math.exp %547 : vector<8x128xf32>
    %cst_162 = arith.constant 1.000000e+00 : f32
    %549 = vector.broadcast %cst_162 : f32 to vector<8x128xf32>
    %550 = arith.addf %549, %548 : vector<8x128xf32>
    %551 = arith.divf %549, %550 : vector<8x128xf32>
    %552 = arith.mulf %543, %520 : vector<8x128xf32>
    %553 = arith.mulf %537, %545 : vector<8x128xf32>
    %554 = arith.addf %552, %553 : vector<8x128xf32>
    %555 = math.tanh %554 : vector<8x128xf32>
    %556 = arith.mulf %551, %555 : vector<8x128xf32>
    %557 = arith.index_cast %526 : i32 to index
    %c0_163 = arith.constant 0 : index
    %558 = vector.load %arg14[%557, %c0_163] : memref<64x128xf32, #tpu.memory_space<vmem>>, vector<8x128xf32>
    tpu.vector_store %arg14[%557, %c0_163], %556 {strides = array<i32>} : memref<64x128xf32, #tpu.memory_space<vmem>>, vector<8x128xf32>,
    %c7_i32_164 = arith.constant 7 : i32
    %c8_i32_165 = arith.constant 8 : i32
    %559 = arith.muli %c7_i32_164, %c8_i32_165 : i32
    %560 = tpu.assume_multiple %559, 8 : i32
    %561 = arith.index_cast %560 : i32 to index
    %c0_166 = arith.constant 0 : index
    %562 = vector.load %arg13[%561, %c0_166] : memref<64x512xf32, #tpu.memory_space<vmem>>, vector<8x512xf32>
    %563 = arith.truncf %556 : vector<8x128xf32> to vector<8x128xbf16>
    %cst_167 = arith.constant dense<0.000000e+00> : vector<8x512xf32>
    %564 = tpu.matmul %563, %316, %cst_167 {dimension_numbers = #tpu.dot_dimension_numbers<[1], [0], [0], [1], [0, 0, 1, 1], [], []>} : vector<8x128xbf16>, vector<128x512xbf16>, vector<8x512xf32> -> vector<8x512xf32>
    %565 = arith.addf %562, %564 : vector<8x512xf32>
    %566 = vector.extract_strided_slice %565 {offsets = [0, 0], sizes = [8, 128], strides = [1, 1]} : vector<8x512xf32> to vector<8x128xf32>
    %567 = arith.negf %566 : vector<8x128xf32>
    %568 = math.exp %567 : vector<8x128xf32>
    %cst_168 = arith.constant 1.000000e+00 : f32
    %569 = vector.broadcast %cst_168 : f32 to vector<8x128xf32>
    %570 = arith.addf %569, %568 : vector<8x128xf32>
    %571 = arith.divf %569, %570 : vector<8x128xf32>
    %572 = vector.extract_strided_slice %565 {offsets = [0, 128], sizes = [8, 128], strides = [1, 1]} : vector<8x512xf32> to vector<8x128xf32>
    %573 = arith.negf %572 : vector<8x128xf32>
    %574 = math.exp %573 : vector<8x128xf32>
    %cst_169 = arith.constant 1.000000e+00 : f32
    %575 = vector.broadcast %cst_169 : f32 to vector<8x128xf32>
    %576 = arith.addf %575, %574 : vector<8x128xf32>
    %577 = arith.divf %575, %576 : vector<8x128xf32>
    %578 = vector.extract_strided_slice %565 {offsets = [0, 256], sizes = [8, 128], strides = [1, 1]} : vector<8x512xf32> to vector<8x128xf32>
    %579 = math.tanh %578 : vector<8x128xf32>
    %580 = vector.extract_strided_slice %565 {offsets = [0, 384], sizes = [8, 128], strides = [1, 1]} : vector<8x512xf32> to vector<8x128xf32>
    %581 = arith.negf %580 : vector<8x128xf32>
    %582 = math.exp %581 : vector<8x128xf32>
    %cst_170 = arith.constant 1.000000e+00 : f32
    %583 = vector.broadcast %cst_170 : f32 to vector<8x128xf32>
    %584 = arith.addf %583, %582 : vector<8x128xf32>
    %585 = arith.divf %583, %584 : vector<8x128xf32>
    %586 = arith.mulf %577, %554 : vector<8x128xf32>
    %587 = arith.mulf %571, %579 : vector<8x128xf32>
    %588 = arith.addf %586, %587 : vector<8x128xf32>
    %589 = math.tanh %588 : vector<8x128xf32>
    %590 = arith.mulf %585, %589 : vector<8x128xf32>
    %591 = arith.index_cast %560 : i32 to index
    %c0_171 = arith.constant 0 : index
    %592 = vector.load %arg14[%591, %c0_171] : memref<64x128xf32, #tpu.memory_space<vmem>>, vector<8x128xf32>
    tpu.vector_store %arg14[%591, %c0_171], %590 {strides = array<i32>} : memref<64x128xf32, #tpu.memory_space<vmem>>, vector<8x128xf32>,
    %c8_i32_172 = arith.constant 8 : i32
    %c1_173 = arith.constant 1 : index
    %c0_174 = arith.constant 0 : index
    %c0_175 = arith.constant 0 : index
    %593 = vector.load %arg11[%c1_173, %c0_174, %c0_175] : memref<2x8x128xf32, #tpu.memory_space<vmem>>, vector<1x8x128xf32>
    %594 = vector.shape_cast %593 : vector<1x8x128xf32> to vector<8x128xf32>
    %595 = vector.shape_cast %590 : vector<8x128xf32> to vector<1x8x128xf32>
    tpu.vector_store %arg11[%c1_173, %c0_174, %c0_175], %595 {strides = array<i32>} : memref<2x8x128xf32, #tpu.memory_space<vmem>>, vector<1x8x128xf32>,
    %c1_176 = arith.constant 1 : index
    %c0_177 = arith.constant 0 : index
    %c0_178 = arith.constant 0 : index
    %596 = vector.load %arg12[%c1_176, %c0_177, %c0_178] : memref<2x8x128xf32, #tpu.memory_space<vmem>>, vector<1x8x128xf32>
    %597 = vector.shape_cast %596 : vector<1x8x128xf32> to vector<8x128xf32>
    %598 = vector.shape_cast %588 : vector<8x128xf32> to vector<1x8x128xf32>
    tpu.vector_store %arg12[%c1_176, %c0_177, %c0_178], %598 {strides = array<i32>} : memref<2x8x128xf32, #tpu.memory_space<vmem>>, vector<1x8x128xf32>,
    %c0_179 = arith.constant 0 : index
    %c0_180 = arith.constant 0 : index
    %599 = vector.load %arg14[%c0_179, %c0_180] : memref<64x128xf32, #tpu.memory_space<vmem>>, vector<64x128xf32>
    %600 = arith.truncf %599 : vector<64x128xf32> to vector<64x128xbf16>
    %c0_181 = arith.constant 0 : index
    %c0_182 = arith.constant 0 : index
    %601 = vector.load %arg8[%c0_181, %c0_182] : memref<128x128xbf16, #tpu.memory_space<vmem>>, vector<128x128xbf16>
    %cst_183 = arith.constant dense<0.000000e+00> : vector<64x128xf32>
    %602 = tpu.matmul %600, %601, %cst_183 {dimension_numbers = #tpu.dot_dimension_numbers<[1], [0], [0], [1], [0, 0, 1, 1], [], []>} : vector<64x128xbf16>, vector<128x128xbf16>, vector<64x128xf32> -> vector<64x128xf32>
    %c0_184 = arith.constant 0 : index
    %c0_185 = arith.constant 0 : index
    %603 = vector.load %arg9[%c0_184, %c0_185] : memref<1x128xf32, #tpu.memory_space<vmem>>, vector<1x128xf32>
    %604 = vector.broadcast %603 : vector<1x128xf32> to vector<64x128xf32>
    %605 = arith.addf %602, %604 : vector<64x128xf32>
    %c0_186 = arith.constant 0 : index
    %c0_187 = arith.constant 0 : index
    %606 = vector.load %arg10[%c0_186, %c0_187] : memref<64x128xf32, #tpu.memory_space<vmem>>, vector<64x128xf32>
    tpu.vector_store %arg10[%c0_186, %c0_187], %605 {strides = array<i32>} : memref<64x128xf32, #tpu.memory_space<vmem>>, vector<64x128xf32>,
    return
  }
  func.func @transform_0(%arg0: i32) -> (i32, i32) {
    %c0_i32 = arith.constant 0 : i32
    %c0_i32_0 = arith.constant 0 : i32
    %c0_i32_1 = arith.constant 0 : i32
    return %c0_i32, %c0_i32_0 : i32, i32
  }
  func.func @transform_1(%arg0: i32) -> (i32, i32) {
    %c0_i32 = arith.constant 0 : i32
    %c0_i32_0 = arith.constant 0 : i32
    %c0_i32_1 = arith.constant 0 : i32
    return %c0_i32, %c0_i32_0 : i32, i32
  }
  func.func @transform_2(%arg0: i32) -> (i32, i32, i32) {
    %c0_i32 = arith.constant 0 : i32
    %c0_i32_0 = arith.constant 0 : i32
    %c0_i32_1 = arith.constant 0 : i32
    %c0_i32_2 = arith.constant 0 : i32
    return %c0_i32, %c0_i32_0, %c0_i32_1 : i32, i32, i32
  }
  func.func @transform_3(%arg0: i32) -> (i32, i32, i32) {
    %c0_i32 = arith.constant 0 : i32
    %c0_i32_0 = arith.constant 0 : i32
    %c0_i32_1 = arith.constant 0 : i32
    %c0_i32_2 = arith.constant 0 : i32
    return %c0_i32, %c0_i32_0, %c0_i32_1 : i32, i32, i32
  }
  func.func @transform_4(%arg0: i32) -> (i32, i32, i32) {
    %c0_i32 = arith.constant 0 : i32
    %c0_i32_0 = arith.constant 0 : i32
    %c0_i32_1 = arith.constant 0 : i32
    %c0_i32_2 = arith.constant 0 : i32
    return %c0_i32, %c0_i32_0, %c0_i32_1 : i32, i32, i32
  }
  func.func @transform_5(%arg0: i32) -> (i32, i32, i32) {
    %c0_i32 = arith.constant 0 : i32
    %c0_i32_0 = arith.constant 0 : i32
    %c0_i32_1 = arith.constant 0 : i32
    %c0_i32_2 = arith.constant 0 : i32
    return %c0_i32, %c0_i32_0, %c0_i32_1 : i32, i32, i32
  }
  func.func @transform_6(%arg0: i32) -> (i32, i32, i32) {
    %c0_i32 = arith.constant 0 : i32
    %c0_i32_0 = arith.constant 0 : i32
    %c0_i32_1 = arith.constant 0 : i32
    %c0_i32_2 = arith.constant 0 : i32
    return %c0_i32, %c0_i32_0, %c0_i32_1 : i32, i32, i32
  }
  func.func @transform_7(%arg0: i32) -> (i32, i32) {
    %c0_i32 = arith.constant 0 : i32
    %c0_i32_0 = arith.constant 0 : i32
    %c0_i32_1 = arith.constant 0 : i32
    return %c0_i32, %c0_i32_0 : i32, i32
  }
  func.func @transform_8(%arg0: i32) -> (i32, i32) {
    %c0_i32 = arith.constant 0 : i32
    %c0_i32_0 = arith.constant 0 : i32
    %c0_i32_1 = arith.constant 0 : i32
    return %c0_i32, %c0_i32_0 : i32, i32
  }
  func.func @transform_9(%arg0: i32) -> (i32, i32) {
    %c0_i32 = arith.constant 0 : i32
    %c0_i32_0 = arith.constant 0 : i32
    %c0_i32_1 = arith.constant 0 : i32
    return %c0_i32, %c0_i32_0 : i32, i32
  }
  func.func @transform_10(%arg0: i32) -> (i32, i32, i32) {
    %c0_i32 = arith.constant 0 : i32
    %c0_i32_0 = arith.constant 0 : i32
    %c0_i32_1 = arith.constant 0 : i32
    %c0_i32_2 = arith.constant 0 : i32
    return %c0_i32, %c0_i32_0, %c0_i32_1 : i32, i32, i32
  }
  func.func @transform_11(%arg0: i32) -> (i32, i32, i32) {
    %c0_i32 = arith.constant 0 : i32
    %c0_i32_0 = arith.constant 0 : i32
    %c0_i32_1 = arith.constant 0 : i32
    %c0_i32_2 = arith.constant 0 : i32
    return %c0_i32, %c0_i32_0, %c0_i32_1 : i32, i32, i32
  }
}

</mosaic_0001>

<llo_original>
// kernel: tpu_custom_call.1
$region0: #{tpu_custom_call.1}
  #allocation0 [shape = 'u32[]', space=smem, size = 0x4, offset = 0x4, fixed_abs, tag = 'smem constant byte address 0x4 - core index']
  #allocation1 [shape = 'u32[144,128]{1,0:T(1,128)}', space=vmem, size = 0x12000, scoped, tag = 'internal scratch']
  #allocation2 [shape = 'f32[64,512]{1,0:T(8,128)}', space=vmem, size = 0x20000, scoped, tag = 'scratch operand']
  #allocation3 [shape = 'f32[64,128]{1,0:T(8,128)}', space=vmem, size = 0x8000, scoped, tag = 'scratch operand']
  %s0 = inlined_call_operand.vmem [shape: s32[64,1], index: 0, kind: input, shape index: {}]
  %s1 = inlined_call_operand.vmem [shape: bf16[128,128], index: 1, kind: input, shape index: {}]
  %s2 = inlined_call_operand.hbm [shape: f32[2,8,128], index: 2, kind: input, shape index: {}]
  %s3 = inlined_call_operand.hbm [shape: f32[2,8,128], index: 3, kind: input, shape index: {}]
  %s4 = inlined_call_operand.hbm [shape: bf16[2,128,512], index: 4, kind: input, shape index: {}]
  %s5 = inlined_call_operand.hbm [shape: bf16[2,128,512], index: 5, kind: input, shape index: {}]
  %s6 = inlined_call_operand.vmem [shape: f32[2,1,512], index: 6, kind: input, shape index: {}]
  %s7 = inlined_call_operand.hbm [shape: bf16[128,128], index: 7, kind: input, shape index: {}]
  %s8 = inlined_call_operand.vmem [shape: f32[1,128], index: 8, kind: input, shape index: {}]
  %s9 = inlined_call_operand.hbm [shape: f32[64,128], index: 9, kind: output, shape index: {0}]
  %s10 = inlined_call_operand.hbm [shape: f32[2,8,128], index: 10, kind: output, shape index: {1}]
  %s11 = inlined_call_operand.hbm [shape: f32[2,8,128], index: 11, kind: output, shape index: {2}]
  %12 = xla_tuple %s9, %s10, %s11
  %s13 = sld [smem:[#allocation0]]
  $region82: #{tpu_custom_call.1} parent=0
    _
  %s15 = ssub.s32 1, %s13
  %s16 = scalar_select 0, %s15, %s13
  $region1: #{tpu_custom_call.1} parent=0
    #allocation4 [shape = 'u8[8192]{0}', space=vmem, size = 0x2000, scoped, tag = 'input window, operand 2, single buffered']
    #allocation5 [shape = 's32[1]{0}', space=sflag, size = 0x4, scoped, tag = 'scoped memory for tpu_custom_call.1']
    #allocation6 [shape = 's32[1]{0}', space=sflag, size = 0x4, scoped, tag = 'scoped memory for tpu_custom_call.1']
    #allocation7 [shape = 'u8[8192]{0}', space=vmem, size = 0x2000, scoped, tag = 'input window, operand 3, single buffered']
    #allocation8 [shape = 's32[1]{0}', space=sflag, size = 0x4, scoped, tag = 'scoped memory for tpu_custom_call.1']
    #allocation9 [shape = 'u8[262144]{0}', space=vmem, size = 0x40000, scoped, tag = 'input window, operand 4, single buffered']
    #allocation10 [shape = 'u8[262144]{0}', space=vmem, size = 0x40000, scoped, tag = 'input window, operand 5, single buffered']
    #allocation11 [shape = 's32[1]{0}', space=sflag, size = 0x4, scoped, tag = 'scoped memory for tpu_custom_call.1']
    #allocation12 [shape = 'u8[32768]{0}', space=vmem, size = 0x8000, scoped, tag = 'input window, operand 7, single buffered']
    #allocation13 [shape = 'u8[32768]{0}', space=vmem, size = 0x8000, scoped, tag = 'output window, operand 0, single buffered']
    #allocation14 [shape = 'u8[8192]{0}', space=vmem, size = 0x2000, scoped, tag = 'output window, operand 1, single buffered']
    #allocation15 [shape = 's32[1]{0}', space=sflag, size = 0x4, scoped, tag = 'scoped memory for tpu_custom_call.1']
    #allocation16 [shape = 'u8[8192]{0}', space=vmem, size = 0x2000, scoped, tag = 'output window, operand 2, single buffered']
    %17 = vsyncpa [#allocation5], 0
    %18 = vsyncpa [#allocation8], 0
    %19 = vsyncpa [#allocation11], 0
    %20 = vsyncpa [#allocation6], 0
    %21 = vsyncpa [#allocation15], 0
    // Predicated region
    $region2: #{tpu_custom_call.1} parent=1 // pred_check
      _
    $region3: #{tpu_custom_call.1} parent=1 // pred_check_branch
      %23 = sbr.rel (0) target = $region5
    $region4: #{tpu_custom_call.1} parent=1 // pred_region
      _
    $region5: #{tpu_custom_call.1} parent=1 // pred_fallthru
      _
    // Predicated region
    $region6: #{tpu_custom_call.1} parent=1 // pred_check
      _
    $region7: #{tpu_custom_call.1} parent=1 // pred_check_branch
      %25 = sbr.rel (0) target = $region9
    $region8: #{tpu_custom_call.1} parent=1 // pred_region
      _
    $region9: #{tpu_custom_call.1} parent=1 // pred_fallthru
      _
    // Predicated region
    $region10: #{tpu_custom_call.1} parent=1 // pred_check
      _
    $region11: #{tpu_custom_call.1} parent=1 // pred_check_branch
      %27 = sbr.rel (0) target = $region13
    $region12: #{tpu_custom_call.1} parent=1 // pred_region
      %s29 = ssub.s32 256, 256
      %30 = vsyncadd [#allocation5], %s29
      %s31 = sshll.u32 [#allocation4], 4
      %s32 = int_to_ptr.vmem [resolvable:$true] %s31
      %37 = dma.hbm_to_vmem [thread:$0]  %s2, 256, %s32, [#allocation5], 128, 128, 8
    $region13: #{tpu_custom_call.1} parent=1 // pred_fallthru
      _
    // Predicated region
    $region14: #{tpu_custom_call.1} parent=1 // pred_check
      _
    $region15: #{tpu_custom_call.1} parent=1 // pred_check_branch
      %39 = sbr.rel (0) target = $region17
    $region16: #{tpu_custom_call.1} parent=1 // pred_region
      %s41 = ssub.s32 256, 256
      %42 = vsyncadd [#allocation8], %s41
      %s43 = sshll.u32 [#allocation7], 4
      %s44 = int_to_ptr.vmem [resolvable:$true] %s43
      %49 = dma.hbm_to_vmem [thread:$0]  %s3, 256, %s44, [#allocation8], 128, 128, 8
    $region17: #{tpu_custom_call.1} parent=1 // pred_fallthru
      _
    // Predicated region
    $region18: #{tpu_custom_call.1} parent=1 // pred_check
      _
    $region19: #{tpu_custom_call.1} parent=1 // pred_check_branch
      %51 = sbr.rel (0) target = $region21
    $region20: #{tpu_custom_call.1} parent=1 // pred_region
      %s53 = ssub.s32 8192, 8192
      %54 = vsyncadd [#allocation8], %s53
      %s55 = sshll.u32 [#allocation9], 4
      %s56 = int_to_ptr.vmem [resolvable:$true] %s55
      %61 = dma.hbm_to_vmem [thread:$0]  %s4, 8192, %s56, [#allocation8], 256, 256, 16
    $region21: #{tpu_custom_call.1} parent=1 // pred_fallthru
      _
    // Predicated region
    $region22: #{tpu_custom_call.1} parent=1 // pred_check
      _
    $region23: #{tpu_custom_call.1} parent=1 // pred_check_branch
      %63 = sbr.rel (0) target = $region25
    $region24: #{tpu_custom_call.1} parent=1 // pred_region
      %s65 = ssub.s32 8192, 8192
      %66 = vsyncadd [#allocation11], %s65
      %s67 = sshll.u32 [#allocation10], 4
      %s68 = int_to_ptr.vmem [resolvable:$true] %s67
      %73 = dma.hbm_to_vmem [thread:$0]  %s5, 8192, %s68, [#allocation11], 256, 256, 16
    $region25: #{tpu_custom_call.1} parent=1 // pred_fallthru
      _
    // Predicated region
    $region26: #{tpu_custom_call.1} parent=1 // pred_check
      _
    $region27: #{tpu_custom_call.1} parent=1 // pred_check_branch
      %75 = sbr.rel (0) target = $region29
    $region28: #{tpu_custom_call.1} parent=1 // pred_region
      _
    $region29: #{tpu_custom_call.1} parent=1 // pred_fallthru
      _
    // Predicated region
    $region30: #{tpu_custom_call.1} parent=1 // pred_check
      _
    $region31: #{tpu_custom_call.1} parent=1 // pred_check_branch
      %77 = sbr.rel (0) target = $region33
    $region32: #{tpu_custom_call.1} parent=1 // pred_region
      %s79 = ssub.s32 1024, 1024
      %80 = vsyncadd [#allocation11], %s79
      %s81 = sshll.u32 [#allocation12], 4
      %s82 = int_to_ptr.vmem [resolvable:$true] %s81
      %87 = dma.hbm_to_vmem [thread:$0]  %s7, 1024, %s82, [#allocation11], 64, 64, 4
    $region33: #{tpu_custom_call.1} parent=1 // pred_fallthru
      _
    // Predicated region
    $region34: #{tpu_custom_call.1} parent=1 // pred_check
      _
    $region35: #{tpu_custom_call.1} parent=1 // pred_check_branch
      %89 = sbr.rel (0) target = $region37
    $region36: #{tpu_custom_call.1} parent=1 // pred_region
      _
    $region37: #{tpu_custom_call.1} parent=1 // pred_fallthru
      _
    // Predicated region
    $region38: #{tpu_custom_call.1} parent=1 // pred_check
      _
    $region39: #{tpu_custom_call.1} parent=1 // pred_check_branch
      %91 = sbr.rel (0) target = $region41
    $region40: #{tpu_custom_call.1} parent=1 // pred_region
      %92 = dma.done [#allocation5], 256
    $region41: #{tpu_custom_call.1} parent=1 // pred_fallthru
      _
    // Predicated region
    $region42: #{tpu_custom_call.1} parent=1 // pred_check
      _
    $region43: #{tpu_custom_call.1} parent=1 // pred_check_branch
      %94 = sbr.rel (0) target = $region45
    $region44: #{tpu_custom_call.1} parent=1 // pred_region
      %95 = dma.done [#allocation8], 256
    $region45: #{tpu_custom_call.1} parent=1 // pred_fallthru
      _
    // Predicated region
    $region46: #{tpu_custom_call.1} parent=1 // pred_check
      _
    $region47: #{tpu_custom_call.1} parent=1 // pred_check_branch
      %97 = sbr.rel (0) target = $region49
    $region48: #{tpu_custom_call.1} parent=1 // pred_region
      %98 = dma.done [#allocation8], 8192
    $region49: #{tpu_custom_call.1} parent=1 // pred_fallthru
      _
    // Predicated region
    $region50: #{tpu_custom_call.1} parent=1 // pred_check
      _
    $region51: #{tpu_custom_call.1} parent=1 // pred_check_branch
      %100 = sbr.rel (0) target = $region53
    $region52: #{tpu_custom_call.1} parent=1 // pred_region
      %101 = dma.done [#allocation11], 8192
    $region53: #{tpu_custom_call.1} parent=1 // pred_fallthru
      _
    // Predicated region
    $region54: #{tpu_custom_call.1} parent=1 // pred_check
      _
    $region55: #{tpu_custom_call.1} parent=1 // pred_check_branch
      %103 = sbr.rel (0) target = $region57
    $region56: #{tpu_custom_call.1} parent=1 // pred_region
      %104 = dma.done [#allocation11], 1024
    $region57: #{tpu_custom_call.1} parent=1 // pred_fallthru
      _
    %v106 = vld [vmem:[%s0] sm:$0xff]
    %v107 = vld [vmem:[%s0 + $0x8] sm:$0xff]
    %v108 = vld [vmem:[%s0 + $0x10] sm:$0xff]
    %v109 = vld [vmem:[%s0 + $0x18] sm:$0xff]
    %v110 = vld [vmem:[%s0 + $0x20] sm:$0xff]
    %v111 = vld [vmem:[%s0 + $0x28] sm:$0xff]
    %v112 = vld [vmem:[%s0 + $0x30] sm:$0xff]
    %v113 = vld [vmem:[%s0 + $0x38] sm:$0xff]
    %v114 = vlaneseq
    %v115 = vand.u32 %v114, 127
    %116 = vset.pattern.permute.xlu0 0
    %117 = vperm.xlu0 %116, %v106
    %v118 = vpop.permute.xlu0 %117
    %119 = vset.pattern.permute.xlu0 0
    %120 = vperm.xlu0 %119, %v107
    %v121 = vpop.permute.xlu0 %120
    %122 = vset.pattern.permute.xlu0 0
    %123 = vperm.xlu0 %122, %v108
    %v124 = vpop.permute.xlu0 %123
    %125 = vset.pattern.permute.xlu0 0
    %126 = vperm.xlu0 %125, %v109
    %v127 = vpop.permute.xlu0 %126
    %128 = vset.pattern.permute.xlu0 0
    %129 = vperm.xlu0 %128, %v110
    %v130 = vpop.permute.xlu0 %129
    %131 = vset.pattern.permute.xlu0 0
    %132 = vperm.xlu0 %131, %v111
    %v133 = vpop.permute.xlu0 %132
    %134 = vset.pattern.permute.xlu0 0
    %135 = vperm.xlu0 %134, %v112
    %v136 = vpop.permute.xlu0 %135
    %137 = vset.pattern.permute.xlu0 0
    %138 = vperm.xlu0 %137, %v113
    %v139 = vpop.permute.xlu0 %138
    %vm140 = vcmp.eq.s32.totalorder %v115, %v118
    %vm141 = vcmp.eq.s32.totalorder %v115, %v121
    %vm142 = vcmp.eq.s32.totalorder %v115, %v124
    %vm143 = vcmp.eq.s32.totalorder %v115, %v127
    %vm144 = vcmp.eq.s32.totalorder %v115, %v130
    %vm145 = vcmp.eq.s32.totalorder %v115, %v133
    %vm146 = vcmp.eq.s32.totalorder %v115, %v136
    %vm147 = vcmp.eq.s32.totalorder %v115, %v139
    %v148 = vsel %vm140, 1.0, 0.0
    %v149 = vsel %vm141, 1.0, 0.0
    %v150 = vsel %vm142, 1.0, 0.0
    %v151 = vsel %vm143, 1.0, 0.0
    %v152 = vsel %vm144, 1.0, 0.0
    %v153 = vsel %vm145, 1.0, 0.0
    %v154 = vsel %vm146, 1.0, 0.0
    %v155 = vsel %vm147, 1.0, 0.0
    %v156 = vpack.c.bf16 %v149, %v148
    %v157 = vpack.c.bf16 %v151, %v150
    %v158 = vpack.c.bf16 %v153, %v152
    %v159 = vpack.c.bf16 %v155, %v154
    %v160 = vld [vmem:[%s1] sm:$0xf]
    %v161 = vld [vmem:[%s1 + $0x4] sm:$0xf]
    %v162 = vld [vmem:[%s1 + $0x8] sm:$0xf]
    %v163 = vld [vmem:[%s1 + $0xc] sm:$0xf]
    %v164 = vld [vmem:[%s1 + $0x10] sm:$0xf]
    %v165 = vld [vmem:[%s1 + $0x14] sm:$0xf]
    %v166 = vld [vmem:[%s1 + $0x18] sm:$0xf]
    %v167 = vld [vmem:[%s1 + $0x1c] sm:$0xf]
    %v168 = vld [vmem:[%s1 + $0x20] sm:$0xf]
    %v169 = vld [vmem:[%s1 + $0x24] sm:$0xf]
    %v170 = vld [vmem:[%s1 + $0x28] sm:$0xf]
    %v171 = vld [vmem:[%s1 + $0x2c] sm:$0xf]
    %v172 = vld [vmem:[%s1 + $0x30] sm:$0xf]
    %v173 = vld [vmem:[%s1 + $0x34] sm:$0xf]
    %v174 = vld [vmem:[%s1 + $0x38] sm:$0xf]
    %v175 = vld [vmem:[%s1 + $0x3c] sm:$0xf]
    %v192 = vunpack.c.l.b16 %v160
    %v193 = vunpack.c.l.b16 %v161
    %v194 = vunpack.c.l.b16 %v162
    %v195 = vunpack.c.l.b16 %v163
    %v196 = vunpack.c.l.b16 %v164
    %v197 = vunpack.c.l.b16 %v165
    %v198 = vunpack.c.l.b16 %v166
    %v199 = vunpack.c.l.b16 %v167
    %v200 = vunpack.c.l.b16 %v168
    %v201 = vunpack.c.l.b16 %v169
    %v202 = vunpack.c.l.b16 %v170
    %v203 = vunpack.c.l.b16 %v171
    %v204 = vunpack.c.l.b16 %v172
    %v205 = vunpack.c.l.b16 %v173
    %v206 = vunpack.c.l.b16 %v174
    %v207 = vunpack.c.l.b16 %v175
    %v208 = vpack.c.b16 %v193, %v192
    %v209 = vpack.c.b16 %v195, %v194
    %v210 = vpack.c.b16 %v197, %v196
    %v211 = vpack.c.b16 %v199, %v198
    %v212 = vpack.c.b16 %v201, %v200
    %v213 = vpack.c.b16 %v203, %v202
    %v214 = vpack.c.b16 %v205, %v204
    %v215 = vpack.c.b16 %v207, %v206
    %224 = vmatprep.subr.bf16.mxu0 0
    %225 = vmatpush1.bf16.msra.mxu0 %v215
    %226 = vmatprep.subr.bf16.mxu0 0
    %227 = vmatpush1.bf16.msra.mxu0 %v214
    %228 = vmatprep.subr.bf16.mxu0 0
    %229 = vmatpush1.bf16.msra.mxu0 %v213
    %230 = vmatprep.subr.bf16.mxu0 0
    %231 = vmatpush1.bf16.msra.mxu0 %v212
    %232 = vmatprep.subr.bf16.mxu0 0
    %233 = vmatpush1.bf16.msra.mxu0 %v211
    %234 = vmatprep.subr.bf16.mxu0 0
    %235 = vmatpush1.bf16.msra.mxu0 %v210
    %236 = vmatprep.subr.bf16.mxu0 0
    %237 = vmatpush1.bf16.msra.mxu0 %v209
    %238 = vmatprep.subr.bf16.mxu0 0
    %239 = vmatpush1.bf16.msra.mxu0 %v208
    %240 = vmatprep.subr.bf16.mxu0 0
    %241 = vmatpush2.bf16.msra.mxu0 0
    %242 = vmatprep.subr.bf16.mxu0 0
    %243 = vmatpush2.bf16.msra.mxu0 0
    %244 = vmatprep.subr.bf16.mxu0 0
    %245 = vmatpush2.bf16.msra.mxu0 0
    %246 = vmatprep.subr.bf16.mxu0 0
    %247 = vmatpush2.bf16.msra.mxu0 0
    %248 = vmatprep.subr.bf16.mxu0 0
    %249 = vmatpush2.bf16.msra.mxu0 0
    %250 = vmatprep.subr.bf16.mxu0 0
    %251 = vmatpush2.bf16.msra.mxu0 0
    %252 = vmatprep.subr.bf16.mxu0 0
    %253 = vmatpush2.bf16.msra.mxu0 0
    %254 = vmatprep.subr.bf16.mxu0 0
    %255 = vmatpush2.bf16.msra.mxu0 0
    %256 = vmatprep.mubr.bf16.mxu0 0
    %257 = vmatmul.mubr.bf16.gmra.mxu0 %v156
    %v258 = vpop.f32.mrf.mxu0
    %v259 = vadd.f32 0.0, %v258
    %v260 = vpop.f32.mrf.mxu0
    %v261 = vpop.f32.mrf.mxu0
    %v262 = vadd.f32 0.0, %v261
    %v263 = vpop.f32.mrf.mxu0
    %264 = vmatprep.mubr.bf16.mxu0 0
    %265 = vmatmul.mubr.bf16.gmra.mxu0 %v157
    %v266 = vpop.f32.mrf.mxu0
    %v267 = vadd.f32 0.0, %v266
    %v268 = vpop.f32.mrf.mxu0
    %v269 = vpop.f32.mrf.mxu0
    %v270 = vadd.f32 0.0, %v269
    %v271 = vpop.f32.mrf.mxu0
    %272 = vmatprep.mubr.bf16.mxu0 0
    %273 = vmatmul.mubr.bf16.gmra.mxu0 %v158
    %v274 = vpop.f32.mrf.mxu0
    %v275 = vadd.f32 0.0, %v274
    %v276 = vpop.f32.mrf.mxu0
    %v277 = vpop.f32.mrf.mxu0
    %v278 = vadd.f32 0.0, %v277
    %v279 = vpop.f32.mrf.mxu0
    %280 = vmatprep.mubr.bf16.mxu0 0
    %281 = vmatmul.mubr.bf16.gmra.mxu0 %v159
    %v282 = vpop.f32.mrf.mxu0
    %v283 = vadd.f32 0.0, %v282
    %v284 = vpop.f32.mrf.mxu0
    %v285 = vpop.f32.mrf.mxu0
    %v286 = vadd.f32 0.0, %v285
    %v287 = vpop.f32.mrf.mxu0
    %288 = vdwg.mxu0
    %289 = vst [vmem:[#allocation3] sm:$0xff] %v259
    %290 = vst [vmem:[#allocation3 + $0x8] sm:$0xff] %v262
    %291 = vst [vmem:[#allocation3 + $0x10] sm:$0xff] %v267
    %292 = vst [vmem:[#allocation3 + $0x18] sm:$0xff] %v270
    %293 = vst [vmem:[#allocation3 + $0x20] sm:$0xff] %v275
    %294 = vst [vmem:[#allocation3 + $0x28] sm:$0xff] %v278
    %295 = vst [vmem:[#allocation3 + $0x30] sm:$0xff] %v283
    %296 = vst [vmem:[#allocation3 + $0x38] sm:$0xff] %v286
    %v297 = vld [vmem:[#allocation3] sm:$0xff]
    %v298 = vld [vmem:[#allocation3 + $0x8] sm:$0xff]
    %v299 = vld [vmem:[#allocation3 + $0x10] sm:$0xff]
    %v300 = vld [vmem:[#allocation3 + $0x18] sm:$0xff]
    %v301 = vld [vmem:[#allocation3 + $0x20] sm:$0xff]
    %v302 = vld [vmem:[#allocation3 + $0x28] sm:$0xff]
    %v303 = vld [vmem:[#allocation3 + $0x30] sm:$0xff]
    %v304 = vld [vmem:[#allocation3 + $0x38] sm:$0xff]
    %v305 = vpack.c.bf16 %v298, %v297
    %v306 = vpack.c.bf16 %v300, %v299
    %v307 = vpack.c.bf16 %v302, %v301
    %v308 = vpack.c.bf16 %v304, %v303
    %v309 = vld [vmem:[#allocation9] sm:$0xff]
    %v310 = vld [vmem:[#allocation9 + $0x8] sm:$0xff]
    %v311 = vld [vmem:[#allocation9 + $0x10] sm:$0xff]
    %v312 = vld [vmem:[#allocation9 + $0x18] sm:$0xff]
    %v313 = vld [vmem:[#allocation9 + $0x20] sm:$0xff]
    %v314 = vld [vmem:[#allocation9 + $0x28] sm:$0xff]
    %v315 = vld [vmem:[#allocation9 + $0x30] sm:$0xff]
    %v316 = vld [vmem:[#allocation9 + $0x38] sm:$0xff]
    %v317 = vld [vmem:[#allocation9 + $0x40] sm:$0xff]
    %v318 = vld [vmem:[#allocation9 + $0x48] sm:$0xff]
    %v319 = vld [vmem:[#allocation9 + $0x50] sm:$0xff]
    %v320 = vld [vmem:[#allocation9 + $0x58] sm:$0xff]
    %v321 = vld [vmem:[#allocation9 + $0x60] sm:$0xff]
    %v322 = vld [vmem:[#allocation9 + $0x68] sm:$0xff]
    %v323 = vld [vmem:[#allocation9 + $0x70] sm:$0xff]
    %v324 = vld [vmem:[#allocation9 + $0x78] sm:$0xff]
    %v325 = vld [vmem:[#allocation9 + $0x80] sm:$0xff]
    %v326 = vld [vmem:[#allocation9 + $0x88] sm:$0xff]
    %v327 = vld [vmem:[#allocation9 + $0x90] sm:$0xff]
    %v328 = vld [vmem:[#allocation9 + $0x98] sm:$0xff]
    %v329 = vld [vmem:[#allocation9 + $0xa0] sm:$0xff]
    %v330 = vld [vmem:[#allocation9 + $0xa8] sm:$0xff]
    %v331 = vld [vmem:[#allocation9 + $0xb0] sm:$0xff]
    %v332 = vld [vmem:[#allocation9 + $0xb8] sm:$0xff]
    %v333 = vld [vmem:[#allocation9 + $0xc0] sm:$0xff]
    %v334 = vld [vmem:[#allocation9 + $0xc8] sm:$0xff]
    %v335 = vld [vmem:[#allocation9 + $0xd0] sm:$0xff]
    %v336 = vld [vmem:[#allocation9 + $0xd8] sm:$0xff]
    %v337 = vld [vmem:[#allocation9 + $0xe0] sm:$0xff]
    %v338 = vld [vmem:[#allocation9 + $0xe8] sm:$0xff]
    %v339 = vld [vmem:[#allocation9 + $0xf0] sm:$0xff]
    %v340 = vld [vmem:[#allocation9 + $0xf8] sm:$0xff]
    %v341 = vld [vmem:[%s6] sm:$0xf]
    %v343 = vlaneseq
    %v344 = vshrl.u32 %v343, 7
    %v345 = vsub.s32 0, %v344
    %v346 = vrot.slane %v341, %v345
    %v347 = vlaneseq
    %v348 = vshrl.u32 %v347, 7
    %v349 = vsub.s32 1, %v348
    %v350 = vrot.slane %v341, %v349
    %v351 = vlaneseq
    %v352 = vshrl.u32 %v351, 7
    %v353 = vsub.s32 2, %v352
    %v354 = vrot.slane %v341, %v353
    %v355 = vlaneseq
    %v356 = vshrl.u32 %v355, 7
    %v357 = vsub.s32 3, %v356
    %v358 = vrot.slane %v341, %v357
    %v395 = vunpack.c.l.b16 %v309
    %v396 = vunpack.c.h.b16 %v309
    %v397 = vunpack.c.l.b16 %v310
    %v398 = vunpack.c.h.b16 %v310
    %v399 = vunpack.c.l.b16 %v311
    %v400 = vunpack.c.h.b16 %v311
    %v401 = vunpack.c.l.b16 %v312
    %v402 = vunpack.c.h.b16 %v312
    %v403 = vunpack.c.l.b16 %v313
    %v404 = vunpack.c.h.b16 %v313
    %v405 = vunpack.c.l.b16 %v314
    %v406 = vunpack.c.h.b16 %v314
    %v407 = vunpack.c.l.b16 %v315
    %v408 = vunpack.c.h.b16 %v315
    %v409 = vunpack.c.l.b16 %v316
    %v410 = vunpack.c.h.b16 %v316
    %v411 = vunpack.c.l.b16 %v317
    %v412 = vunpack.c.h.b16 %v317
    %v413 = vunpack.c.l.b16 %v318
    %v414 = vunpack.c.h.b16 %v318
    %v415 = vunpack.c.l.b16 %v319
    %v416 = vunpack.c.h.b16 %v319
    %v417 = vunpack.c.l.b16 %v320
    %v418 = vunpack.c.h.b16 %v320
    %v419 = vunpack.c.l.b16 %v321
    %v420 = vunpack.c.h.b16 %v321
    %v421 = vunpack.c.l.b16 %v322
    %v422 = vunpack.c.h.b16 %v322
    %v423 = vunpack.c.l.b16 %v323
    %v424 = vunpack.c.h.b16 %v323
    %v425 = vunpack.c.l.b16 %v324
    %v426 = vunpack.c.h.b16 %v324
    %v427 = vunpack.c.l.b16 %v325
    %v428 = vunpack.c.h.b16 %v325
    %v429 = vunpack.c.l.b16 %v326
    %v430 = vunpack.c.h.b16 %v326
    %v431 = vunpack.c.l.b16 %v327
    %v432 = vunpack.c.h.b16 %v327
    %v433 = vunpack.c.l.b16 %v328
    %v434 = vunpack.c.h.b16 %v328
    %v435 = vunpack.c.l.b16 %v329
    %v436 = vunpack.c.h.b16 %v329
    %v437 = vunpack.c.l.b16 %v330
    %v438 = vunpack.c.h.b16 %v330
    %v439 = vunpack.c.l.b16 %v331
    %v440 = vunpack.c.h.b16 %v331
    %v441 = vunpack.c.l.b16 %v332
    %v442 = vunpack.c.h.b16 %v332
    %v443 = vunpack.c.l.b16 %v333
    %v444 = vunpack.c.h.b16 %v333
    %v445 = vunpack.c.l.b16 %v334
    %v446 = vunpack.c.h.b16 %v334
    %v447 = vunpack.c.l.b16 %v335
    %v448 = vunpack.c.h.b16 %v335
    %v449 = vunpack.c.l.b16 %v336
    %v450 = vunpack.c.h.b16 %v336
    %v451 = vunpack.c.l.b16 %v337
    %v452 = vunpack.c.h.b16 %v337
    %v453 = vunpack.c.l.b16 %v338
    %v454 = vunpack.c.h.b16 %v338
    %v455 = vunpack.c.l.b16 %v339
    %v456 = vunpack.c.h.b16 %v339
    %v457 = vunpack.c.l.b16 %v340
    %v458 = vunpack.c.h.b16 %v340
    %v459 = vpack.c.b16 %v399, %v395
    %v460 = vpack.c.b16 %v400, %v396
    %v461 = vpack.c.b16 %v401, %v397
    %v462 = vpack.c.b16 %v402, %v398
    %v463 = vpack.c.b16 %v407, %v403
    %v464 = vpack.c.b16 %v408, %v404
    %v465 = vpack.c.b16 %v409, %v405
    %v466 = vpack.c.b16 %v410, %v406
    %v467 = vpack.c.b16 %v415, %v411
    %v468 = vpack.c.b16 %v416, %v412
    %v469 = vpack.c.b16 %v417, %v413
    %v470 = vpack.c.b16 %v418, %v414
    %v471 = vpack.c.b16 %v423, %v419
    %v472 = vpack.c.b16 %v424, %v420
    %v473 = vpack.c.b16 %v425, %v421
    %v474 = vpack.c.b16 %v426, %v422
    %v475 = vpack.c.b16 %v431, %v427
    %v476 = vpack.c.b16 %v432, %v428
    %v477 = vpack.c.b16 %v433, %v429
    %v478 = vpack.c.b16 %v434, %v430
    %v479 = vpack.c.b16 %v439, %v435
    %v480 = vpack.c.b16 %v440, %v436
    %v481 = vpack.c.b16 %v441, %v437
    %v482 = vpack.c.b16 %v442, %v438
    %v483 = vpack.c.b16 %v447, %v443
    %v484 = vpack.c.b16 %v448, %v444
    %v485 = vpack.c.b16 %v449, %v445
    %v486 = vpack.c.b16 %v450, %v446
    %v487 = vpack.c.b16 %v455, %v451
    %v488 = vpack.c.b16 %v456, %v452
    %v489 = vpack.c.b16 %v457, %v453
    %v490 = vpack.c.b16 %v458, %v454
    %523 = vmatprep.subr.bf16.mxu0 %v488
    %524 = vmatpush1.bf16.msra.mxu0 %v487
    %525 = vmatprep.subr.bf16.mxu0 %v484
    %526 = vmatpush1.bf16.msra.mxu0 %v483
    %527 = vmatprep.subr.bf16.mxu0 %v480
    %528 = vmatpush1.bf16.msra.mxu0 %v479
    %529 = vmatprep.subr.bf16.mxu0 %v476
    %530 = vmatpush1.bf16.msra.mxu0 %v475
    %531 = vmatprep.subr.bf16.mxu0 %v472
    %532 = vmatpush1.bf16.msra.mxu0 %v471
    %533 = vmatprep.subr.bf16.mxu0 %v468
    %534 = vmatpush1.bf16.msra.mxu0 %v467
    %535 = vmatprep.subr.bf16.mxu0 %v464
    %536 = vmatpush1.bf16.msra.mxu0 %v463
    %537 = vmatprep.subr.bf16.mxu0 %v460
    %538 = vmatpush1.bf16.msra.mxu0 %v459
    %539 = vmatprep.subr.bf16.mxu0 0
    %540 = vmatpush2.bf16.msra.mxu0 0
    %541 = vmatprep.subr.bf16.mxu0 0
    %542 = vmatpush2.bf16.msra.mxu0 0
    %543 = vmatprep.subr.bf16.mxu0 0
    %544 = vmatpush2.bf16.msra.mxu0 0
    %545 = vmatprep.subr.bf16.mxu0 0
    %546 = vmatpush2.bf16.msra.mxu0 0
    %547 = vmatprep.subr.bf16.mxu0 0
    %548 = vmatpush2.bf16.msra.mxu0 0
    %549 = vmatprep.subr.bf16.mxu0 0
    %550 = vmatpush2.bf16.msra.mxu0 0
    %551 = vmatprep.subr.bf16.mxu0 0
    %552 = vmatpush2.bf16.msra.mxu0 0
    %553 = vmatprep.subr.bf16.mxu0 0
    %554 = vmatpush2.bf16.msra.mxu0 0
    %555 = vmatprep.mubr.bf16.mxu0 0
    %556 = vmatmul.mubr.bf16.gmra.mxu0 %v305
    %v557 = vpop.f32.mrf.mxu0
    %v558 = vadd.f32 %v346, %v557
    %v559 = vpop.f32.mrf.mxu0
    %v560 = vadd.f32 %v350, %v559
    %v561 = vpop.f32.mrf.mxu0
    %v562 = vadd.f32 %v346, %v561
    %v563 = vpop.f32.mrf.mxu0
    %v564 = vadd.f32 %v350, %v563
    %565 = vmatprep.mubr.bf16.mxu0 0
    %566 = vmatmul.mubr.bf16.gmra.mxu0 %v306
    %v567 = vpop.f32.mrf.mxu0
    %v568 = vadd.f32 %v346, %v567
    %v569 = vpop.f32.mrf.mxu0
    %v570 = vadd.f32 %v350, %v569
    %v571 = vpop.f32.mrf.mxu0
    %v572 = vadd.f32 %v346, %v571
    %v573 = vpop.f32.mrf.mxu0
    %v574 = vadd.f32 %v350, %v573
    %575 = vmatprep.mubr.bf16.mxu0 0
    %576 = vmatmul.mubr.bf16.gmra.mxu0 %v307
    %v577 = vpop.f32.mrf.mxu0
    %v578 = vadd.f32 %v346, %v577
    %v579 = vpop.f32.mrf.mxu0
    %v580 = vadd.f32 %v350, %v579
    %v581 = vpop.f32.mrf.mxu0
    %v582 = vadd.f32 %v346, %v581
    %v583 = vpop.f32.mrf.mxu0
    %v584 = vadd.f32 %v350, %v583
    %585 = vmatprep.mubr.bf16.mxu0 0
    %586 = vmatmul.mubr.bf16.gmra.mxu0 %v308
    %v587 = vpop.f32.mrf.mxu0
    %v588 = vadd.f32 %v346, %v587
    %v589 = vpop.f32.mrf.mxu0
    %v590 = vadd.f32 %v350, %v589
    %v591 = vpop.f32.mrf.mxu0
    %v592 = vadd.f32 %v346, %v591
    %v593 = vpop.f32.mrf.mxu0
    %v594 = vadd.f32 %v350, %v593
    %595 = vdwg.mxu0
    %596 = vmatprep.subr.bf16.mxu0 %v490
    %597 = vmatpush1.bf16.msra.mxu0 %v489
    %598 = vmatprep.subr.bf16.mxu0 %v486
    %599 = vmatpush1.bf16.msra.mxu0 %v485
    %600 = vmatprep.subr.bf16.mxu0 %v482
    %601 = vmatpush1.bf16.msra.mxu0 %v481
    %602 = vmatprep.subr.bf16.mxu0 %v478
    %603 = vmatpush1.bf16.msra.mxu0 %v477
    %604 = vmatprep.subr.bf16.mxu0 %v474
    %605 = vmatpush1.bf16.msra.mxu0 %v473
    %606 = vmatprep.subr.bf16.mxu0 %v470
    %607 = vmatpush1.bf16.msra.mxu0 %v469
    %608 = vmatprep.subr.bf16.mxu0 %v466
    %609 = vmatpush1.bf16.msra.mxu0 %v465
    %610 = vmatprep.subr.bf16.mxu0 %v462
    %611 = vmatpush1.bf16.msra.mxu0 %v461
    %612 = vmatprep.subr.bf16.mxu0 0
    %613 = vmatpush2.bf16.msra.mxu0 0
    %614 = vmatprep.subr.bf16.mxu0 0
    %615 = vmatpush2.bf16.msra.mxu0 0
    %616 = vmatprep.subr.bf16.mxu0 0
    %617 = vmatpush2.bf16.msra.mxu0 0
    %618 = vmatprep.subr.bf16.mxu0 0
    %619 = vmatpush2.bf16.msra.mxu0 0
    %620 = vmatprep.subr.bf16.mxu0 0
    %621 = vmatpush2.bf16.msra.mxu0 0
    %622 = vmatprep.subr.bf16.mxu0 0
    %623 = vmatpush2.bf16.msra.mxu0 0
    %624 = vmatprep.subr.bf16.mxu0 0
    %625 = vmatpush2.bf16.msra.mxu0 0
    %626 = vmatprep.subr.bf16.mxu0 0
    %627 = vmatpush2.bf16.msra.mxu0 0
    %628 = vmatprep.mubr.bf16.mxu0 0
    %629 = vmatmul.mubr.bf16.gmra.mxu0 %v305
    %v630 = vpop.f32.mrf.mxu0
    %v631 = vadd.f32 %v354, %v630
    %v632 = vpop.f32.mrf.mxu0
    %v633 = vadd.f32 %v358, %v632
    %v634 = vpop.f32.mrf.mxu0
    %v635 = vadd.f32 %v354, %v634
    %v636 = vpop.f32.mrf.mxu0
    %v637 = vadd.f32 %v358, %v636
    %638 = vmatprep.mubr.bf16.mxu0 0
    %639 = vmatmul.mubr.bf16.gmra.mxu0 %v306
    %v640 = vpop.f32.mrf.mxu0
    %v641 = vadd.f32 %v354, %v640
    %v642 = vpop.f32.mrf.mxu0
    %v643 = vadd.f32 %v358, %v642
    %v644 = vpop.f32.mrf.mxu0
    %v645 = vadd.f32 %v354, %v644
    %v646 = vpop.f32.mrf.mxu0
    %v647 = vadd.f32 %v358, %v646
    %648 = vmatprep.mubr.bf16.mxu0 0
    %649 = vmatmul.mubr.bf16.gmra.mxu0 %v307
    %v650 = vpop.f32.mrf.mxu0
    %v651 = vadd.f32 %v354, %v650
    %v652 = vpop.f32.mrf.mxu0
    %v653 = vadd.f32 %v358, %v652
    %v654 = vpop.f32.mrf.mxu0
    %v655 = vadd.f32 %v354, %v654
    %v656 = vpop.f32.mrf.mxu0
    %v657 = vadd.f32 %v358, %v656
    %658 = vmatprep.mubr.bf16.mxu0 0
    %659 = vmatmul.mubr.bf16.gmra.mxu0 %v308
    %v660 = vpop.f32.mrf.mxu0
    %v661 = vadd.f32 %v354, %v660
    %v662 = vpop.f32.mrf.mxu0
    %v663 = vadd.f32 %v358, %v662
    %v664 = vpop.f32.mrf.mxu0
    %v665 = vadd.f32 %v354, %v664
    %v666 = vpop.f32.mrf.mxu0
    %v667 = vadd.f32 %v358, %v666
    %668 = vdwg.mxu0
    %669 = vst [vmem:[#allocation2] sm:$0xff] %v558
    %670 = vst [vmem:[#allocation2 + $0x8] sm:$0xff] %v560
    %671 = vst [vmem:[#allocation2 + $0x10] sm:$0xff] %v631
    %672 = vst [vmem:[#allocation2 + $0x18] sm:$0xff] %v633
    %673 = vst [vmem:[#allocation2 + $0x20] sm:$0xff] %v562
    %674 = vst [vmem:[#allocation2 + $0x28] sm:$0xff] %v564
    %675 = vst [vmem:[#allocation2 + $0x30] sm:$0xff] %v635
    %676 = vst [vmem:[#allocation2 + $0x38] sm:$0xff] %v637
    %677 = vst [vmem:[#allocation2 + $0x40] sm:$0xff] %v568
    %678 = vst [vmem:[#allocation2 + $0x48] sm:$0xff] %v570
    %679 = vst [vmem:[#allocation2 + $0x50] sm:$0xff] %v641
    %680 = vst [vmem:[#allocation2 + $0x58] sm:$0xff] %v643
    %681 = vst [vmem:[#allocation2 + $0x60] sm:$0xff] %v572
    %682 = vst [vmem:[#allocation2 + $0x68] sm:$0xff] %v574
    %683 = vst [vmem:[#allocation2 + $0x70] sm:$0xff] %v645
    %684 = vst [vmem:[#allocation2 + $0x78] sm:$0xff] %v647
    %685 = vst [vmem:[#allocation2 + $0x80] sm:$0xff] %v578
    %686 = vst [vmem:[#allocation2 + $0x88] sm:$0xff] %v580
    %687 = vst [vmem:[#allocation2 + $0x90] sm:$0xff] %v651
    %688 = vst [vmem:[#allocation2 + $0x98] sm:$0xff] %v653
    %689 = vst [vmem:[#allocation2 + $0xa0] sm:$0xff] %v582
    %690 = vst [vmem:[#allocation2 + $0xa8] sm:$0xff] %v584
    %691 = vst [vmem:[#allocation2 + $0xb0] sm:$0xff] %v655
    %692 = vst [vmem:[#allocation2 + $0xb8] sm:$0xff] %v657
    %693 = vst [vmem:[#allocation2 + $0xc0] sm:$0xff] %v588
    %694 = vst [vmem:[#allocation2 + $0xc8] sm:$0xff] %v590
    %695 = vst [vmem:[#allocation2 + $0xd0] sm:$0xff] %v661
    %696 = vst [vmem:[#allocation2 + $0xd8] sm:$0xff] %v663
    %697 = vst [vmem:[#allocation2 + $0xe0] sm:$0xff] %v592
    %698 = vst [vmem:[#allocation2 + $0xe8] sm:$0xff] %v594
    %699 = vst [vmem:[#allocation2 + $0xf0] sm:$0xff] %v665
    %700 = vst [vmem:[#allocation2 + $0xf8] sm:$0xff] %v667
    %v701 = vld [vmem:[#allocation10] sm:$0xff]
    %v702 = vld [vmem:[#allocation10 + $0x8] sm:$0xff]
    %v703 = vld [vmem:[#allocation10 + $0x10] sm:$0xff]
    %v704 = vld [vmem:[#allocation10 + $0x18] sm:$0xff]
    %v705 = vld [vmem:[#allocation10 + $0x20] sm:$0xff]
    %v706 = vld [vmem:[#allocation10 + $0x28] sm:$0xff]
    %v707 = vld [vmem:[#allocation10 + $0x30] sm:$0xff]
    %v708 = vld [vmem:[#allocation10 + $0x38] sm:$0xff]
    %v709 = vld [vmem:[#allocation10 + $0x40] sm:$0xff]
    %v710 = vld [vmem:[#allocation10 + $0x48] sm:$0xff]
    %v711 = vld [vmem:[#allocation10 + $0x50] sm:$0xff]
    %v712 = vld [vmem:[#allocation10 + $0x58] sm:$0xff]
    %v713 = vld [vmem:[#allocation10 + $0x60] sm:$0xff]
    %v714 = vld [vmem:[#allocation10 + $0x68] sm:$0xff]
    %v715 = vld [vmem:[#allocation10 + $0x70] sm:$0xff]
    %v716 = vld [vmem:[#allocation10 + $0x78] sm:$0xff]
    %v717 = vld [vmem:[#allocation10 + $0x80] sm:$0xff]
    %v718 = vld [vmem:[#allocation10 + $0x88] sm:$0xff]
    %v719 = vld [vmem:[#allocation10 + $0x90] sm:$0xff]
    %v720 = vld [vmem:[#allocation10 + $0x98] sm:$0xff]
    %v721 = vld [vmem:[#allocation10 + $0xa0] sm:$0xff]
    %v722 = vld [vmem:[#allocation10 + $0xa8] sm:$0xff]
    %v723 = vld [vmem:[#allocation10 + $0xb0] sm:$0xff]
    %v724 = vld [vmem:[#allocation10 + $0xb8] sm:$0xff]
    %v725 = vld [vmem:[#allocation10 + $0xc0] sm:$0xff]
    %v726 = vld [vmem:[#allocation10 + $0xc8] sm:$0xff]
    %v727 = vld [vmem:[#allocation10 + $0xd0] sm:$0xff]
    %v728 = vld [vmem:[#allocation10 + $0xd8] sm:$0xff]
    %v729 = vld [vmem:[#allocation10 + $0xe0] sm:$0xff]
    %v730 = vld [vmem:[#allocation10 + $0xe8] sm:$0xff]
    %v731 = vld [vmem:[#allocation10 + $0xf0] sm:$0xff]
    %v732 = vld [vmem:[#allocation10 + $0xf8] sm:$0xff]
    %v733 = vld [vmem:[#allocation4] sm:$0xff]
    %v734 = vld [vmem:[#allocation7] sm:$0xff]
    %s735 = smul.u32 0, 4
    %s736 = smul.addr %s735, 8
    %s737 = scalar_lea.vmem [#allocation2], %s736
    %v738 = vld [vmem:[%s737] sm:$0xff]
    %v739 = vld [vmem:[%s737 + $0x8] sm:$0xff]
    %v740 = vld [vmem:[%s737 + $0x10] sm:$0xff]
    %v741 = vld [vmem:[%s737 + $0x18] sm:$0xff]
    %v742 = vpack.c.bf16 %v733, %v733
    %v775 = vunpack.c.l.b16 %v701
    %v776 = vunpack.c.h.b16 %v701
    %v777 = vunpack.c.l.b16 %v702
    %v778 = vunpack.c.h.b16 %v702
    %v779 = vunpack.c.l.b16 %v703
    %v780 = vunpack.c.h.b16 %v703
    %v781 = vunpack.c.l.b16 %v704
    %v782 = vunpack.c.h.b16 %v704
    %v783 = vunpack.c.l.b16 %v705
    %v784 = vunpack.c.h.b16 %v705
    %v785 = vunpack.c.l.b16 %v706
    %v786 = vunpack.c.h.b16 %v706
    %v787 = vunpack.c.l.b16 %v707
    %v788 = vunpack.c.h.b16 %v707
    %v789 = vunpack.c.l.b16 %v708
    %v790 = vunpack.c.h.b16 %v708
    %v791 = vunpack.c.l.b16 %v709
    %v792 = vunpack.c.h.b16 %v709
    %v793 = vunpack.c.l.b16 %v710
    %v794 = vunpack.c.h.b16 %v710
    %v795 = vunpack.c.l.b16 %v711
    %v796 = vunpack.c.h.b16 %v711
    %v797 = vunpack.c.l.b16 %v712
    %v798 = vunpack.c.h.b16 %v712
    %v799 = vunpack.c.l.b16 %v713
    %v800 = vunpack.c.h.b16 %v713
    %v801 = vunpack.c.l.b16 %v714
    %v802 = vunpack.c.h.b16 %v714
    %v803 = vunpack.c.l.b16 %v715
    %v804 = vunpack.c.h.b16 %v715
    %v805 = vunpack.c.l.b16 %v716
    %v806 = vunpack.c.h.b16 %v716
    %v807 = vunpack.c.l.b16 %v717
    %v808 = vunpack.c.h.b16 %v717
    %v809 = vunpack.c.l.b16 %v718
    %v810 = vunpack.c.h.b16 %v718
    %v811 = vunpack.c.l.b16 %v719
    %v812 = vunpack.c.h.b16 %v719
    %v813 = vunpack.c.l.b16 %v720
    %v814 = vunpack.c.h.b16 %v720
    %v815 = vunpack.c.l.b16 %v721
    %v816 = vunpack.c.h.b16 %v721
    %v817 = vunpack.c.l.b16 %v722
    %v818 = vunpack.c.h.b16 %v722
    %v819 = vunpack.c.l.b16 %v723
    %v820 = vunpack.c.h.b16 %v723
    %v821 = vunpack.c.l.b16 %v724
    %v822 = vunpack.c.h.b16 %v724
    %v823 = vunpack.c.l.b16 %v725
    %v824 = vunpack.c.h.b16 %v725
    %v825 = vunpack.c.l.b16 %v726
    %v826 = vunpack.c.h.b16 %v726
    %v827 = vunpack.c.l.b16 %v727
    %v828 = vunpack.c.h.b16 %v727
    %v829 = vunpack.c.l.b16 %v728
    %v830 = vunpack.c.h.b16 %v728
    %v831 = vunpack.c.l.b16 %v729
    %v832 = vunpack.c.h.b16 %v729
    %v833 = vunpack.c.l.b16 %v730
    %v834 = vunpack.c.h.b16 %v730
    %v835 = vunpack.c.l.b16 %v731
    %v836 = vunpack.c.h.b16 %v731
    %v837 = vunpack.c.l.b16 %v732
    %v838 = vunpack.c.h.b16 %v732
    %v839 = vpack.c.b16 %v779, %v775
    %v840 = vpack.c.b16 %v780, %v776
    %v841 = vpack.c.b16 %v781, %v777
    %v842 = vpack.c.b16 %v782, %v778
    %v843 = vpack.c.b16 %v787, %v783
    %v844 = vpack.c.b16 %v788, %v784
    %v845 = vpack.c.b16 %v789, %v785
    %v846 = vpack.c.b16 %v790, %v786
    %v847 = vpack.c.b16 %v795, %v791
    %v848 = vpack.c.b16 %v796, %v792
    %v849 = vpack.c.b16 %v797, %v793
    %v850 = vpack.c.b16 %v798, %v794
    %v851 = vpack.c.b16 %v803, %v799
    %v852 = vpack.c.b16 %v804, %v800
    %v853 = vpack.c.b16 %v805, %v801
    %v854 = vpack.c.b16 %v806, %v802
    %v855 = vpack.c.b16 %v811, %v807
    %v856 = vpack.c.b16 %v812, %v808
    %v857 = vpack.c.b16 %v813, %v809
    %v858 = vpack.c.b16 %v814, %v810
    %v859 = vpack.c.b16 %v819, %v815
    %v860 = vpack.c.b16 %v820, %v816
    %v861 = vpack.c.b16 %v821, %v817
    %v862 = vpack.c.b16 %v822, %v818
    %v863 = vpack.c.b16 %v827, %v823
    %v864 = vpack.c.b16 %v828, %v824
    %v865 = vpack.c.b16 %v829, %v825
    %v866 = vpack.c.b16 %v830, %v826
    %v867 = vpack.c.b16 %v835, %v831
    %v868 = vpack.c.b16 %v836, %v832
    %v869 = vpack.c.b16 %v837, %v833
    %v870 = vpack.c.b16 %v838, %v834
    %903 = vmatprep.subr.bf16.mxu0 %v868
    %904 = vmatpush1.bf16.msra.mxu0 %v867
    %905 = vmatprep.subr.bf16.mxu0 %v864
    %906 = vmatpush1.bf16.msra.mxu0 %v863
    %907 = vmatprep.subr.bf16.mxu0 %v860
    %908 = vmatpush1.bf16.msra.mxu0 %v859
    %909 = vmatprep.subr.bf16.mxu0 %v856
    %910 = vmatpush1.bf16.msra.mxu0 %v855
    %911 = vmatprep.subr.bf16.mxu0 %v852
    %912 = vmatpush1.bf16.msra.mxu0 %v851
    %913 = vmatprep.subr.bf16.mxu0 %v848
    %914 = vmatpush1.bf16.msra.mxu0 %v847
    %915 = vmatprep.subr.bf16.mxu0 %v844
    %916 = vmatpush1.bf16.msra.mxu0 %v843
    %917 = vmatprep.subr.bf16.mxu0 %v840
    %918 = vmatpush1.bf16.msra.mxu0 %v839
    %919 = vmatprep.subr.bf16.mxu0 0
    %920 = vmatpush2.bf16.msra.mxu0 0
    %921 = vmatprep.subr.bf16.mxu0 0
    %922 = vmatpush2.bf16.msra.mxu0 0
    %923 = vmatprep.subr.bf16.mxu0 0
    %924 = vmatpush2.bf16.msra.mxu0 0
    %925 = vmatprep.subr.bf16.mxu0 0
    %926 = vmatpush2.bf16.msra.mxu0 0
    %927 = vmatprep.subr.bf16.mxu0 0
    %928 = vmatpush2.bf16.msra.mxu0 0
    %929 = vmatprep.subr.bf16.mxu0 0
    %930 = vmatpush2.bf16.msra.mxu0 0
    %931 = vmatprep.subr.bf16.mxu0 0
    %932 = vmatpush2.bf16.msra.mxu0 0
    %933 = vmatprep.subr.bf16.mxu0 0
    %934 = vmatpush2.bf16.msra.mxu0 0
    %935 = vmatprep.mubr.bf16.mxu0 0
    %936 = vmatmul.mubr.bf16.gmra.mxu0 %v742
    %v937 = vpop.f32.mrf.mxu0
    %v938 = vadd.f32 0.0, %v937
    %v939 = vpop.f32.mrf.mxu0
    %v940 = vadd.f32 0.0, %v939
    %v941 = vpop.f32.mrf.mxu0
    %v942 = vpop.f32.mrf.mxu0
    %943 = vdwg.mxu0
    %944 = vmatprep.subr.bf16.mxu0 %v870
    %945 = vmatpush1.bf16.msra.mxu0 %v869
    %946 = vmatprep.subr.bf16.mxu0 %v866
    %947 = vmatpush1.bf16.msra.mxu0 %v865
    %948 = vmatprep.subr.bf16.mxu0 %v862
    %949 = vmatpush1.bf16.msra.mxu0 %v861
    %950 = vmatprep.subr.bf16.mxu0 %v858
    %951 = vmatpush1.bf16.msra.mxu0 %v857
    %952 = vmatprep.subr.bf16.mxu0 %v854
    %953 = vmatpush1.bf16.msra.mxu0 %v853
    %954 = vmatprep.subr.bf16.mxu0 %v850
    %955 = vmatpush1.bf16.msra.mxu0 %v849
    %956 = vmatprep.subr.bf16.mxu0 %v846
    %957 = vmatpush1.bf16.msra.mxu0 %v845
    %958 = vmatprep.subr.bf16.mxu0 %v842
    %959 = vmatpush1.bf16.msra.mxu0 %v841
    %960 = vmatprep.subr.bf16.mxu0 0
    %961 = vmatpush2.bf16.msra.mxu0 0
    %962 = vmatprep.subr.bf16.mxu0 0
    %963 = vmatpush2.bf16.msra.mxu0 0
    %964 = vmatprep.subr.bf16.mxu0 0
    %965 = vmatpush2.bf16.msra.mxu0 0
    %966 = vmatprep.subr.bf16.mxu0 0
    %967 = vmatpush2.bf16.msra.mxu0 0
    %968 = vmatprep.subr.bf16.mxu0 0
    %969 = vmatpush2.bf16.msra.mxu0 0
    %970 = vmatprep.subr.bf16.mxu0 0
    %971 = vmatpush2.bf16.msra.mxu0 0
    %972 = vmatprep.subr.bf16.mxu0 0
    %973 = vmatpush2.bf16.msra.mxu0 0
    %974 = vmatprep.subr.bf16.mxu0 0
    %975 = vmatpush2.bf16.msra.mxu0 0
    %976 = vmatprep.mubr.bf16.mxu0 0
    %977 = vmatmul.mubr.bf16.gmra.mxu0 %v742
    %v978 = vpop.f32.mrf.mxu0
    %v979 = vadd.f32 0.0, %v978
    %v980 = vpop.f32.mrf.mxu0
    %v981 = vadd.f32 0.0, %v980
    %v982 = vpop.f32.mrf.mxu0
    %v983 = vpop.f32.mrf.mxu0
    %984 = vdwg.mxu0
    %v985 = vadd.f32 %v738, %v938
    %v986 = vadd.f32 %v739, %v940
    %v987 = vadd.f32 %v740, %v979
    %v988 = vadd.f32 %v741, %v981
    %v989 = vxor.u32 %v985, 2147483648
    %v990 = vmul.f32 %v989, 1.442695
    %v991 = vpow.pop %v990
    %v992 = vadd.f32 %v991, 1.0
    %v993 = vrcp.pop %v992
    %v994 = vmul.f32 1.0, %v993
    %v995 = vxor.u32 %v986, 2147483648
    %v996 = vmul.f32 %v995, 1.442695
    %v997 = vpow.pop %v996
    %v998 = vadd.f32 %v997, 1.0
    %v999 = vrcp.pop %v998
    %v1000 = vmul.f32 1.0, %v999
    %v1001 = vtanh.pop %v987
    %v1002 = vxor.u32 %v988, 2147483648
    %v1003 = vmul.f32 %v1002, 1.442695
    %v1004 = vpow.pop %v1003
    %v1005 = vadd.f32 %v1004, 1.0
    %v1006 = vrcp.pop %v1005
    %v1007 = vmul.f32 1.0, %v1006
    %v1008 = vmul.f32 %v1000, %v734
    %v1009 = vmul.f32 %v994, %v1001
    %v1010 = vadd.f32 %v1008, %v1009
    %v1011 = vtanh.pop %v1010
    %v1012 = vmul.f32 %v1007, %v1011
    %1013 = vst [vmem:[#allocation3] sm:$0xff] %v1012
    %s1014 = smul.u32 1, 4
    %s1015 = smul.addr %s1014, 8
    %s1016 = scalar_lea.vmem [#allocation2], %s1015
    %v1017 = vld [vmem:[%s1016] sm:$0xff]
    %v1018 = vld [vmem:[%s1016 + $0x8] sm:$0xff]
    %v1019 = vld [vmem:[%s1016 + $0x10] sm:$0xff]
    %v1020 = vld [vmem:[%s1016 + $0x18] sm:$0xff]
    %v1021 = vpack.c.bf16 %v1012, %v1012
    %1022 = vmatprep.subr.bf16.mxu0 %v868
    %1023 = vmatpush1.bf16.msra.mxu0 %v867
    %1024 = vmatprep.subr.bf16.mxu0 %v864
    %1025 = vmatpush1.bf16.msra.mxu0 %v863
    %1026 = vmatprep.subr.bf16.mxu0 %v860
    %1027 = vmatpush1.bf16.msra.mxu0 %v859
    %1028 = vmatprep.subr.bf16.mxu0 %v856
    %1029 = vmatpush1.bf16.msra.mxu0 %v855
    %1030 = vmatprep.subr.bf16.mxu0 %v852
    %1031 = vmatpush1.bf16.msra.mxu0 %v851
    %1032 = vmatprep.subr.bf16.mxu0 %v848
    %1033 = vmatpush1.bf16.msra.mxu0 %v847
    %1034 = vmatprep.subr.bf16.mxu0 %v844
    %1035 = vmatpush1.bf16.msra.mxu0 %v843
    %1036 = vmatprep.subr.bf16.mxu0 %v840
    %1037 = vmatpush1.bf16.msra.mxu0 %v839
    %1038 = vmatprep.subr.bf16.mxu0 0
    %1039 = vmatpush2.bf16.msra.mxu0 0
    %1040 = vmatprep.subr.bf16.mxu0 0
    %1041 = vmatpush2.bf16.msra.mxu0 0
    %1042 = vmatprep.subr.bf16.mxu0 0
    %1043 = vmatpush2.bf16.msra.mxu0 0
    %1044 = vmatprep.subr.bf16.mxu0 0
    %1045 = vmatpush2.bf16.msra.mxu0 0
    %1046 = vmatprep.subr.bf16.mxu0 0
    %1047 = vmatpush2.bf16.msra.mxu0 0
    %1048 = vmatprep.subr.bf16.mxu0 0
    %1049 = vmatpush2.bf16.msra.mxu0 0
    %1050 = vmatprep.subr.bf16.mxu0 0
    %1051 = vmatpush2.bf16.msra.mxu0 0
    %1052 = vmatprep.subr.bf16.mxu0 0
    %1053 = vmatpush2.bf16.msra.mxu0 0
    %1054 = vmatprep.mubr.bf16.mxu0 0
    %1055 = vmatmul.mubr.bf16.gmra.mxu0 %v1021
    %v1056 = vpop.f32.mrf.mxu0
    %v1057 = vadd.f32 0.0, %v1056
    %v1058 = vpop.f32.mrf.mxu0
    %v1059 = vadd.f32 0.0, %v1058
    %v1060 = vpop.f32.mrf.mxu0
    %v1061 = vpop.f32.mrf.mxu0
    %1062 = vdwg.mxu0
    %1063 = vmatprep.subr.bf16.mxu0 %v870
    %1064 = vmatpush1.bf16.msra.mxu0 %v869
    %1065 = vmatprep.subr.bf16.mxu0 %v866
    %1066 = vmatpush1.bf16.msra.mxu0 %v865
    %1067 = vmatprep.subr.bf16.mxu0 %v862
    %1068 = vmatpush1.bf16.msra.mxu0 %v861
    %1069 = vmatprep.subr.bf16.mxu0 %v858
    %1070 = vmatpush1.bf16.msra.mxu0 %v857
    %1071 = vmatprep.subr.bf16.mxu0 %v854
    %1072 = vmatpush1.bf16.msra.mxu0 %v853
    %1073 = vmatprep.subr.bf16.mxu0 %v850
    %1074 = vmatpush1.bf16.msra.mxu0 %v849
    %1075 = vmatprep.subr.bf16.mxu0 %v846
    %1076 = vmatpush1.bf16.msra.mxu0 %v845
    %1077 = vmatprep.subr.bf16.mxu0 %v842
    %1078 = vmatpush1.bf16.msra.mxu0 %v841
    %1079 = vmatprep.subr.bf16.mxu0 0
    %1080 = vmatpush2.bf16.msra.mxu0 0
    %1081 = vmatprep.subr.bf16.mxu0 0
    %1082 = vmatpush2.bf16.msra.mxu0 0
    %1083 = vmatprep.subr.bf16.mxu0 0
    %1084 = vmatpush2.bf16.msra.mxu0 0
    %1085 = vmatprep.subr.bf16.mxu0 0
    %1086 = vmatpush2.bf16.msra.mxu0 0
    %1087 = vmatprep.subr.bf16.mxu0 0
    %1088 = vmatpush2.bf16.msra.mxu0 0
    %1089 = vmatprep.subr.bf16.mxu0 0
    %1090 = vmatpush2.bf16.msra.mxu0 0
    %1091 = vmatprep.subr.bf16.mxu0 0
    %1092 = vmatpush2.bf16.msra.mxu0 0
    %1093 = vmatprep.subr.bf16.mxu0 0
    %1094 = vmatpush2.bf16.msra.mxu0 0
    %1095 = vmatprep.mubr.bf16.mxu0 0
    %1096 = vmatmul.mubr.bf16.gmra.mxu0 %v1021
    %v1097 = vpop.f32.mrf.mxu0
    %v1098 = vadd.f32 0.0, %v1097
    %v1099 = vpop.f32.mrf.mxu0
    %v1100 = vadd.f32 0.0, %v1099
    %v1101 = vpop.f32.mrf.mxu0
    %v1102 = vpop.f32.mrf.mxu0
    %1103 = vdwg.mxu0
    %v1104 = vadd.f32 %v1017, %v1057
    %v1105 = vadd.f32 %v1018, %v1059
    %v1106 = vadd.f32 %v1019, %v1098
    %v1107 = vadd.f32 %v1020, %v1100
    %v1108 = vxor.u32 %v1104, 2147483648
    %v1109 = vmul.f32 %v1108, 1.442695
    %v1110 = vpow.pop %v1109
    %v1111 = vadd.f32 %v1110, 1.0
    %v1112 = vrcp.pop %v1111
    %v1113 = vmul.f32 1.0, %v1112
    %v1114 = vxor.u32 %v1105, 2147483648
    %v1115 = vmul.f32 %v1114, 1.442695
    %v1116 = vpow.pop %v1115
    %v1117 = vadd.f32 %v1116, 1.0
    %v1118 = vrcp.pop %v1117
    %v1119 = vmul.f32 1.0, %v1118
    %v1120 = vtanh.pop %v1106
    %v1121 = vxor.u32 %v1107, 2147483648
    %v1122 = vmul.f32 %v1121, 1.442695
    %v1123 = vpow.pop %v1122
    %v1124 = vadd.f32 %v1123, 1.0
    %v1125 = vrcp.pop %v1124
    %v1126 = vmul.f32 1.0, %v1125
    %v1127 = vmul.f32 %v1119, %v1010
    %v1128 = vmul.f32 %v1113, %v1120
    %v1129 = vadd.f32 %v1127, %v1128
    %v1130 = vtanh.pop %v1129
    %v1131 = vmul.f32 %v1126, %v1130
    %s1132 = scalar_lea.vmem [#allocation3], 8
    %1133 = vst [vmem:[%s1132] sm:$0xff] %v1131
    %s1134 = smul.u32 2, 4
    %s1135 = smul.addr %s1134, 8
    %s1136 = scalar_lea.vmem [#allocation2], %s1135
    %v1137 = vld [vmem:[%s1136] sm:$0xff]
    %v1138 = vld [vmem:[%s1136 + $0x8] sm:$0xff]
    %v1139 = vld [vmem:[%s1136 + $0x10] sm:$0xff]
    %v1140 = vld [vmem:[%s1136 + $0x18] sm:$0xff]
    %v1141 = vpack.c.bf16 %v1131, %v1131
    %1142 = vmatprep.subr.bf16.mxu0 %v868
    %1143 = vmatpush1.bf16.msra.mxu0 %v867
    %1144 = vmatprep.subr.bf16.mxu0 %v864
    %1145 = vmatpush1.bf16.msra.mxu0 %v863
    %1146 = vmatprep.subr.bf16.mxu0 %v860
    %1147 = vmatpush1.bf16.msra.mxu0 %v859
    %1148 = vmatprep.subr.bf16.mxu0 %v856
    %1149 = vmatpush1.bf16.msra.mxu0 %v855
    %1150 = vmatprep.subr.bf16.mxu0 %v852
    %1151 = vmatpush1.bf16.msra.mxu0 %v851
    %1152 = vmatprep.subr.bf16.mxu0 %v848
    %1153 = vmatpush1.bf16.msra.mxu0 %v847
    %1154 = vmatprep.subr.bf16.mxu0 %v844
    %1155 = vmatpush1.bf16.msra.mxu0 %v843
    %1156 = vmatprep.subr.bf16.mxu0 %v840
    %1157 = vmatpush1.bf16.msra.mxu0 %v839
    %1158 = vmatprep.subr.bf16.mxu0 0
    %1159 = vmatpush2.bf16.msra.mxu0 0
    %1160 = vmatprep.subr.bf16.mxu0 0
    %1161 = vmatpush2.bf16.msra.mxu0 0
    %1162 = vmatprep.subr.bf16.mxu0 0
    %1163 = vmatpush2.bf16.msra.mxu0 0
    %1164 = vmatprep.subr.bf16.mxu0 0
    %1165 = vmatpush2.bf16.msra.mxu0 0
    %1166 = vmatprep.subr.bf16.mxu0 0
    %1167 = vmatpush2.bf16.msra.mxu0 0
    %1168 = vmatprep.subr.bf16.mxu0 0
    %1169 = vmatpush2.bf16.msra.mxu0 0
    %1170 = vmatprep.subr.bf16.mxu0 0
    %1171 = vmatpush2.bf16.msra.mxu0 0
    %1172 = vmatprep.subr.bf16.mxu0 0
    %1173 = vmatpush2.bf16.msra.mxu0 0
    %1174 = vmatprep.mubr.bf16.mxu0 0
    %1175 = vmatmul.mubr.bf16.gmra.mxu0 %v1141
    %v1176 = vpop.f32.mrf.mxu0
    %v1177 = vadd.f32 0.0, %v1176
    %v1178 = vpop.f32.mrf.mxu0
    %v1179 = vadd.f32 0.0, %v1178
    %v1180 = vpop.f32.mrf.mxu0
    %v1181 = vpop.f32.mrf.mxu0
    %1182 = vdwg.mxu0
    %1183 = vmatprep.subr.bf16.mxu0 %v870
    %1184 = vmatpush1.bf16.msra.mxu0 %v869
    %1185 = vmatprep.subr.bf16.mxu0 %v866
    %1186 = vmatpush1.bf16.msra.mxu0 %v865
    %1187 = vmatprep.subr.bf16.mxu0 %v862
    %1188 = vmatpush1.bf16.msra.mxu0 %v861
    %1189 = vmatprep.subr.bf16.mxu0 %v858
    %1190 = vmatpush1.bf16.msra.mxu0 %v857
    %1191 = vmatprep.subr.bf16.mxu0 %v854
    %1192 = vmatpush1.bf16.msra.mxu0 %v853
    %1193 = vmatprep.subr.bf16.mxu0 %v850
    %1194 = vmatpush1.bf16.msra.mxu0 %v849
    %1195 = vmatprep.subr.bf16.mxu0 %v846
    %1196 = vmatpush1.bf16.msra.mxu0 %v845
    %1197 = vmatprep.subr.bf16.mxu0 %v842
    %1198 = vmatpush1.bf16.msra.mxu0 %v841
    %1199 = vmatprep.subr.bf16.mxu0 0
    %1200 = vmatpush2.bf16.msra.mxu0 0
    %1201 = vmatprep.subr.bf16.mxu0 0
    %1202 = vmatpush2.bf16.msra.mxu0 0
    %1203 = vmatprep.subr.bf16.mxu0 0
    %1204 = vmatpush2.bf16.msra.mxu0 0
    %1205 = vmatprep.subr.bf16.mxu0 0
    %1206 = vmatpush2.bf16.msra.mxu0 0
    %1207 = vmatprep.subr.bf16.mxu0 0
    %1208 = vmatpush2.bf16.msra.mxu0 0
    %1209 = vmatprep.subr.bf16.mxu0 0
    %1210 = vmatpush2.bf16.msra.mxu0 0
    %1211 = vmatprep.subr.bf16.mxu0 0
    %1212 = vmatpush2.bf16.msra.mxu0 0
    %1213 = vmatprep.subr.bf16.mxu0 0
    %1214 = vmatpush2.bf16.msra.mxu0 0
    %1215 = vmatprep.mubr.bf16.mxu0 0
    %1216 = vmatmul.mubr.bf16.gmra.mxu0 %v1141
    %v1217 = vpop.f32.mrf.mxu0
    %v1218 = vadd.f32 0.0, %v1217
    %v1219 = vpop.f32.mrf.mxu0
    %v1220 = vadd.f32 0.0, %v1219
    %v1221 = vpop.f32.mrf.mxu0
    %v1222 = vpop.f32.mrf.mxu0
    %1223 = vdwg.mxu0
    %v1224 = vadd.f32 %v1137, %v1177
    %v1225 = vadd.f32 %v1138, %v1179
    %v1226 = vadd.f32 %v1139, %v1218
    %v1227 = vadd.f32 %v1140, %v1220
    %v1228 = vxor.u32 %v1224, 2147483648
    %v1229 = vmul.f32 %v1228, 1.442695
    %v1230 = vpow.pop %v1229
    %v1231 = vadd.f32 %v1230, 1.0
    %v1232 = vrcp.pop %v1231
    %v1233 = vmul.f32 1.0, %v1232
    %v1234 = vxor.u32 %v1225, 2147483648
    %v1235 = vmul.f32 %v1234, 1.442695
    %v1236 = vpow.pop %v1235
    %v1237 = vadd.f32 %v1236, 1.0
    %v1238 = vrcp.pop %v1237
    %v1239 = vmul.f32 1.0, %v1238
    %v1240 = vtanh.pop %v1226
    %v1241 = vxor.u32 %v1227, 2147483648
    %v1242 = vmul.f32 %v1241, 1.442695
    %v1243 = vpow.pop %v1242
    %v1244 = vadd.f32 %v1243, 1.0
    %v1245 = vrcp.pop %v1244
    %v1246 = vmul.f32 1.0, %v1245
    %v1247 = vmul.f32 %v1239, %v1129
    %v1248 = vmul.f32 %v1233, %v1240
    %v1249 = vadd.f32 %v1247, %v1248
    %v1250 = vtanh.pop %v1249
    %v1251 = vmul.f32 %v1246, %v1250
    %s1252 = scalar_lea.vmem [#allocation3], 16
    %1253 = vst [vmem:[%s1252] sm:$0xff] %v1251
    %s1254 = smul.u32 3, 4
    %s1255 = smul.addr %s1254, 8
    %s1256 = scalar_lea.vmem [#allocation2], %s1255
    %v1257 = vld [vmem:[%s1256] sm:$0xff]
    %v1258 = vld [vmem:[%s1256 + $0x8] sm:$0xff]
    %v1259 = vld [vmem:[%s1256 + $0x10] sm:$0xff]
    %v1260 = vld [vmem:[%s1256 + $0x18] sm:$0xff]
    %v1261 = vpack.c.bf16 %v1251, %v1251
    %1262 = vmatprep.subr.bf16.mxu0 %v868
    %1263 = vmatpush1.bf16.msra.mxu0 %v867
    %1264 = vmatprep.subr.bf16.mxu0 %v864
    %1265 = vmatpush1.bf16.msra.mxu0 %v863
    %1266 = vmatprep.subr.bf16.mxu0 %v860
    %1267 = vmatpush1.bf16.msra.mxu0 %v859
    %1268 = vmatprep.subr.bf16.mxu0 %v856
    %1269 = vmatpush1.bf16.msra.mxu0 %v855
    %1270 = vmatprep.subr.bf16.mxu0 %v852
    %1271 = vmatpush1.bf16.msra.mxu0 %v851
    %1272 = vmatprep.subr.bf16.mxu0 %v848
    %1273 = vmatpush1.bf16.msra.mxu0 %v847
    %1274 = vmatprep.subr.bf16.mxu0 %v844
    %1275 = vmatpush1.bf16.msra.mxu0 %v843
    %1276 = vmatprep.subr.bf16.mxu0 %v840
    %1277 = vmatpush1.bf16.msra.mxu0 %v839
    %1278 = vmatprep.subr.bf16.mxu0 0
    %1279 = vmatpush2.bf16.msra.mxu0 0
    %1280 = vmatprep.subr.bf16.mxu0 0
    %1281 = vmatpush2.bf16.msra.mxu0 0
    %1282 = vmatprep.subr.bf16.mxu0 0
    %1283 = vmatpush2.bf16.msra.mxu0 0
    %1284 = vmatprep.subr.bf16.mxu0 0
    %1285 = vmatpush2.bf16.msra.mxu0 0
    %1286 = vmatprep.subr.bf16.mxu0 0
    %1287 = vmatpush2.bf16.msra.mxu0 0
    %1288 = vmatprep.subr.bf16.mxu0 0
    %1289 = vmatpush2.bf16.msra.mxu0 0
    %1290 = vmatprep.subr.bf16.mxu0 0
    %1291 = vmatpush2.bf16.msra.mxu0 0
    %1292 = vmatprep.subr.bf16.mxu0 0
    %1293 = vmatpush2.bf16.msra.mxu0 0
    %1294 = vmatprep.mubr.bf16.mxu0 0
    %1295 = vmatmul.mubr.bf16.gmra.mxu0 %v1261
    %v1296 = vpop.f32.mrf.mxu0
    %v1297 = vadd.f32 0.0, %v1296
    %v1298 = vpop.f32.mrf.mxu0
    %v1299 = vadd.f32 0.0, %v1298
    %v1300 = vpop.f32.mrf.mxu0
    %v1301 = vpop.f32.mrf.mxu0
    %1302 = vdwg.mxu0
    %1303 = vmatprep.subr.bf16.mxu0 %v870
    %1304 = vmatpush1.bf16.msra.mxu0 %v869
    %1305 = vmatprep.subr.bf16.mxu0 %v866
    %1306 = vmatpush1.bf16.msra.mxu0 %v865
    %1307 = vmatprep.subr.bf16.mxu0 %v862
    %1308 = vmatpush1.bf16.msra.mxu0 %v861
    %1309 = vmatprep.subr.bf16.mxu0 %v858
    %1310 = vmatpush1.bf16.msra.mxu0 %v857
    %1311 = vmatprep.subr.bf16.mxu0 %v854
    %1312 = vmatpush1.bf16.msra.mxu0 %v853
    %1313 = vmatprep.subr.bf16.mxu0 %v850
    %1314 = vmatpush1.bf16.msra.mxu0 %v849
    %1315 = vmatprep.subr.bf16.mxu0 %v846
    %1316 = vmatpush1.bf16.msra.mxu0 %v845
    %1317 = vmatprep.subr.bf16.mxu0 %v842
    %1318 = vmatpush1.bf16.msra.mxu0 %v841
    %1319 = vmatprep.subr.bf16.mxu0 0
    %1320 = vmatpush2.bf16.msra.mxu0 0
    %1321 = vmatprep.subr.bf16.mxu0 0
    %1322 = vmatpush2.bf16.msra.mxu0 0
    %1323 = vmatprep.subr.bf16.mxu0 0
    %1324 = vmatpush2.bf16.msra.mxu0 0
    %1325 = vmatprep.subr.bf16.mxu0 0
    %1326 = vmatpush2.bf16.msra.mxu0 0
    %1327 = vmatprep.subr.bf16.mxu0 0
    %1328 = vmatpush2.bf16.msra.mxu0 0
    %1329 = vmatprep.subr.bf16.mxu0 0
    %1330 = vmatpush2.bf16.msra.mxu0 0
    %1331 = vmatprep.subr.bf16.mxu0 0
    %1332 = vmatpush2.bf16.msra.mxu0 0
    %1333 = vmatprep.subr.bf16.mxu0 0
    %1334 = vmatpush2.bf16.msra.mxu0 0
    %1335 = vmatprep.mubr.bf16.mxu0 0
    %1336 = vmatmul.mubr.bf16.gmra.mxu0 %v1261
    %v1337 = vpop.f32.mrf.mxu0
    %v1338 = vadd.f32 0.0, %v1337
    %v1339 = vpop.f32.mrf.mxu0
    %v1340 = vadd.f32 0.0, %v1339
    %v1341 = vpop.f32.mrf.mxu0
    %v1342 = vpop.f32.mrf.mxu0
    %1343 = vdwg.mxu0
    %v1344 = vadd.f32 %v1257, %v1297
    %v1345 = vadd.f32 %v1258, %v1299
    %v1346 = vadd.f32 %v1259, %v1338
    %v1347 = vadd.f32 %v1260, %v1340
    %v1348 = vxor.u32 %v1344, 2147483648
    %v1349 = vmul.f32 %v1348, 1.442695
    %v1350 = vpow.pop %v1349
    %v1351 = vadd.f32 %v1350, 1.0
    %v1352 = vrcp.pop %v1351
    %v1353 = vmul.f32 1.0, %v1352
    %v1354 = vxor.u32 %v1345, 2147483648
    %v1355 = vmul.f32 %v1354, 1.442695
    %v1356 = vpow.pop %v1355
    %v1357 = vadd.f32 %v1356, 1.0
    %v1358 = vrcp.pop %v1357
    %v1359 = vmul.f32 1.0, %v1358
    %v1360 = vtanh.pop %v1346
    %v1361 = vxor.u32 %v1347, 2147483648
    %v1362 = vmul.f32 %v1361, 1.442695
    %v1363 = vpow.pop %v1362
    %v1364 = vadd.f32 %v1363, 1.0
    %v1365 = vrcp.pop %v1364
    %v1366 = vmul.f32 1.0, %v1365
    %v1367 = vmul.f32 %v1359, %v1249
    %v1368 = vmul.f32 %v1353, %v1360
    %v1369 = vadd.f32 %v1367, %v1368
    %v1370 = vtanh.pop %v1369
    %v1371 = vmul.f32 %v1366, %v1370
    %s1372 = scalar_lea.vmem [#allocation3], 24
    %1373 = vst [vmem:[%s1372] sm:$0xff] %v1371
    %s1374 = smul.u32 4, 4
    %s1375 = smul.addr %s1374, 8
    %s1376 = scalar_lea.vmem [#allocation2], %s1375
    %v1377 = vld [vmem:[%s1376] sm:$0xff]
    %v1378 = vld [vmem:[%s1376 + $0x8] sm:$0xff]
    %v1379 = vld [vmem:[%s1376 + $0x10] sm:$0xff]
    %v1380 = vld [vmem:[%s1376 + $0x18] sm:$0xff]
    %v1381 = vpack.c.bf16 %v1371, %v1371
    %1382 = vmatprep.subr.bf16.mxu0 %v868
    %1383 = vmatpush1.bf16.msra.mxu0 %v867
    %1384 = vmatprep.subr.bf16.mxu0 %v864
    %1385 = vmatpush1.bf16.msra.mxu0 %v863
    %1386 = vmatprep.subr.bf16.mxu0 %v860
    %1387 = vmatpush1.bf16.msra.mxu0 %v859
    %1388 = vmatprep.subr.bf16.mxu0 %v856
    %1389 = vmatpush1.bf16.msra.mxu0 %v855
    %1390 = vmatprep.subr.bf16.mxu0 %v852
    %1391 = vmatpush1.bf16.msra.mxu0 %v851
    %1392 = vmatprep.subr.bf16.mxu0 %v848
    %1393 = vmatpush1.bf16.msra.mxu0 %v847
    %1394 = vmatprep.subr.bf16.mxu0 %v844
    %1395 = vmatpush1.bf16.msra.mxu0 %v843
    %1396 = vmatprep.subr.bf16.mxu0 %v840
    %1397 = vmatpush1.bf16.msra.mxu0 %v839
    %1398 = vmatprep.subr.bf16.mxu0 0
    %1399 = vmatpush2.bf16.msra.mxu0 0
    %1400 = vmatprep.subr.bf16.mxu0 0
    %1401 = vmatpush2.bf16.msra.mxu0 0
    %1402 = vmatprep.subr.bf16.mxu0 0
    %1403 = vmatpush2.bf16.msra.mxu0 0
    %1404 = vmatprep.subr.bf16.mxu0 0
    %1405 = vmatpush2.bf16.msra.mxu0 0
    %1406 = vmatprep.subr.bf16.mxu0 0
    %1407 = vmatpush2.bf16.msra.mxu0 0
    %1408 = vmatprep.subr.bf16.mxu0 0
    %1409 = vmatpush2.bf16.msra.mxu0 0
    %1410 = vmatprep.subr.bf16.mxu0 0
    %1411 = vmatpush2.bf16.msra.mxu0 0
    %1412 = vmatprep.subr.bf16.mxu0 0
    %1413 = vmatpush2.bf16.msra.mxu0 0
    %1414 = vmatprep.mubr.bf16.mxu0 0
    %1415 = vmatmul.mubr.bf16.gmra.mxu0 %v1381
    %v1416 = vpop.f32.mrf.mxu0
    %v1417 = vadd.f32 0.0, %v1416
    %v1418 = vpop.f32.mrf.mxu0
    %v1419 = vadd.f32 0.0, %v1418
    %v1420 = vpop.f32.mrf.mxu0
    %v1421 = vpop.f32.mrf.mxu0
    %1422 = vdwg.mxu0
    %1423 = vmatprep.subr.bf16.mxu0 %v870
    %1424 = vmatpush1.bf16.msra.mxu0 %v869
    %1425 = vmatprep.subr.bf16.mxu0 %v866
    %1426 = vmatpush1.bf16.msra.mxu0 %v865
    %1427 = vmatprep.subr.bf16.mxu0 %v862
    %1428 = vmatpush1.bf16.msra.mxu0 %v861
    %1429 = vmatprep.subr.bf16.mxu0 %v858
    %1430 = vmatpush1.bf16.msra.mxu0 %v857
    %1431 = vmatprep.subr.bf16.mxu0 %v854
    %1432 = vmatpush1.bf16.msra.mxu0 %v853
    %1433 = vmatprep.subr.bf16.mxu0 %v850
    %1434 = vmatpush1.bf16.msra.mxu0 %v849
    %1435 = vmatprep.subr.bf16.mxu0 %v846
    %1436 = vmatpush1.bf16.msra.mxu0 %v845
    %1437 = vmatprep.subr.bf16.mxu0 %v842
    %1438 = vmatpush1.bf16.msra.mxu0 %v841
    %1439 = vmatprep.subr.bf16.mxu0 0
    %1440 = vmatpush2.bf16.msra.mxu0 0
    %1441 = vmatprep.subr.bf16.mxu0 0
    %1442 = vmatpush2.bf16.msra.mxu0 0
    %1443 = vmatprep.subr.bf16.mxu0 0
    %1444 = vmatpush2.bf16.msra.mxu0 0
    %1445 = vmatprep.subr.bf16.mxu0 0
    %1446 = vmatpush2.bf16.msra.mxu0 0
    %1447 = vmatprep.subr.bf16.mxu0 0
    %1448 = vmatpush2.bf16.msra.mxu0 0
    %1449 = vmatprep.subr.bf16.mxu0 0
    %1450 = vmatpush2.bf16.msra.mxu0 0
    %1451 = vmatprep.subr.bf16.mxu0 0
    %1452 = vmatpush2.bf16.msra.mxu0 0
    %1453 = vmatprep.subr.bf16.mxu0 0
    %1454 = vmatpush2.bf16.msra.mxu0 0
    %1455 = vmatprep.mubr.bf16.mxu0 0
    %1456 = vmatmul.mubr.bf16.gmra.mxu0 %v1381
    %v1457 = vpop.f32.mrf.mxu0
    %v1458 = vadd.f32 0.0, %v1457
    %v1459 = vpop.f32.mrf.mxu0
    %v1460 = vadd.f32 0.0, %v1459
    %v1461 = vpop.f32.mrf.mxu0
    %v1462 = vpop.f32.mrf.mxu0
    %1463 = vdwg.mxu0
    %v1464 = vadd.f32 %v1377, %v1417
    %v1465 = vadd.f32 %v1378, %v1419
    %v1466 = vadd.f32 %v1379, %v1458
    %v1467 = vadd.f32 %v1380, %v1460
    %v1468 = vxor.u32 %v1464, 2147483648
    %v1469 = vmul.f32 %v1468, 1.442695
    %v1470 = vpow.pop %v1469
    %v1471 = vadd.f32 %v1470, 1.0
    %v1472 = vrcp.pop %v1471
    %v1473 = vmul.f32 1.0, %v1472
    %v1474 = vxor.u32 %v1465, 2147483648
    %v1475 = vmul.f32 %v1474, 1.442695
    %v1476 = vpow.pop %v1475
    %v1477 = vadd.f32 %v1476, 1.0
    %v1478 = vrcp.pop %v1477
    %v1479 = vmul.f32 1.0, %v1478
    %v1480 = vtanh.pop %v1466
    %v1481 = vxor.u32 %v1467, 2147483648
    %v1482 = vmul.f32 %v1481, 1.442695
    %v1483 = vpow.pop %v1482
    %v1484 = vadd.f32 %v1483, 1.0
    %v1485 = vrcp.pop %v1484
    %v1486 = vmul.f32 1.0, %v1485
    %v1487 = vmul.f32 %v1479, %v1369
    %v1488 = vmul.f32 %v1473, %v1480
    %v1489 = vadd.f32 %v1487, %v1488
    %v1490 = vtanh.pop %v1489
    %v1491 = vmul.f32 %v1486, %v1490
    %s1492 = scalar_lea.vmem [#allocation3], 32
    %1493 = vst [vmem:[%s1492] sm:$0xff] %v1491
    %s1494 = smul.u32 5, 4
    %s1495 = smul.addr %s1494, 8
    %s1496 = scalar_lea.vmem [#allocation2], %s1495
    %v1497 = vld [vmem:[%s1496] sm:$0xff]
    %v1498 = vld [vmem:[%s1496 + $0x8] sm:$0xff]
    %v1499 = vld [vmem:[%s1496 + $0x10] sm:$0xff]
    %v1500 = vld [vmem:[%s1496 + $0x18] sm:$0xff]
    %v1501 = vpack.c.bf16 %v1491, %v1491
    %1502 = vmatprep.subr.bf16.mxu0 %v868
    %1503 = vmatpush1.bf16.msra.mxu0 %v867
    %1504 = vmatprep.subr.bf16.mxu0 %v864
    %1505 = vmatpush1.bf16.msra.mxu0 %v863
    %1506 = vmatprep.subr.bf16.mxu0 %v860
    %1507 = vmatpush1.bf16.msra.mxu0 %v859
    %1508 = vmatprep.subr.bf16.mxu0 %v856
    %1509 = vmatpush1.bf16.msra.mxu0 %v855
    %1510 = vmatprep.subr.bf16.mxu0 %v852
    %1511 = vmatpush1.bf16.msra.mxu0 %v851
    %1512 = vmatprep.subr.bf16.mxu0 %v848
    %1513 = vmatpush1.bf16.msra.mxu0 %v847
    %1514 = vmatprep.subr.bf16.mxu0 %v844
    %1515 = vmatpush1.bf16.msra.mxu0 %v843
    %1516 = vmatprep.subr.bf16.mxu0 %v840
    %1517 = vmatpush1.bf16.msra.mxu0 %v839
    %1518 = vmatprep.subr.bf16.mxu0 0
    %1519 = vmatpush2.bf16.msra.mxu0 0
    %1520 = vmatprep.subr.bf16.mxu0 0
    %1521 = vmatpush2.bf16.msra.mxu0 0
    %1522 = vmatprep.subr.bf16.mxu0 0
    %1523 = vmatpush2.bf16.msra.mxu0 0
    %1524 = vmatprep.subr.bf16.mxu0 0
    %1525 = vmatpush2.bf16.msra.mxu0 0
    %1526 = vmatprep.subr.bf16.mxu0 0
    %1527 = vmatpush2.bf16.msra.mxu0 0
    %1528 = vmatprep.subr.bf16.mxu0 0
    %1529 = vmatpush2.bf16.msra.mxu0 0
    %1530 = vmatprep.subr.bf16.mxu0 0
    %1531 = vmatpush2.bf16.msra.mxu0 0
    %1532 = vmatprep.subr.bf16.mxu0 0
    %1533 = vmatpush2.bf16.msra.mxu0 0
    %1534 = vmatprep.mubr.bf16.mxu0 0
    %1535 = vmatmul.mubr.bf16.gmra.mxu0 %v1501
    %v1536 = vpop.f32.mrf.mxu0
    %v1537 = vadd.f32 0.0, %v1536
    %v1538 = vpop.f32.mrf.mxu0
    %v1539 = vadd.f32 0.0, %v1538
    %v1540 = vpop.f32.mrf.mxu0
    %v1541 = vpop.f32.mrf.mxu0
    %1542 = vdwg.mxu0
    %1543 = vmatprep.subr.bf16.mxu0 %v870
    %1544 = vmatpush1.bf16.msra.mxu0 %v869
    %1545 = vmatprep.subr.bf16.mxu0 %v866
    %1546 = vmatpush1.bf16.msra.mxu0 %v865
    %1547 = vmatprep.subr.bf16.mxu0 %v862
    %1548 = vmatpush1.bf16.msra.mxu0 %v861
    %1549 = vmatprep.subr.bf16.mxu0 %v858
    %1550 = vmatpush1.bf16.msra.mxu0 %v857
    %1551 = vmatprep.subr.bf16.mxu0 %v854
    %1552 = vmatpush1.bf16.msra.mxu0 %v853
    %1553 = vmatprep.subr.bf16.mxu0 %v850
    %1554 = vmatpush1.bf16.msra.mxu0 %v849
    %1555 = vmatprep.subr.bf16.mxu0 %v846
    %1556 = vmatpush1.bf16.msra.mxu0 %v845
    %1557 = vmatprep.subr.bf16.mxu0 %v842
    %1558 = vmatpush1.bf16.msra.mxu0 %v841
    %1559 = vmatprep.subr.bf16.mxu0 0
    %1560 = vmatpush2.bf16.msra.mxu0 0
    %1561 = vmatprep.subr.bf16.mxu0 0
    %1562 = vmatpush2.bf16.msra.mxu0 0
    %1563 = vmatprep.subr.bf16.mxu0 0
    %1564 = vmatpush2.bf16.msra.mxu0 0
    %1565 = vmatprep.subr.bf16.mxu0 0
    %1566 = vmatpush2.bf16.msra.mxu0 0
    %1567 = vmatprep.subr.bf16.mxu0 0
    %1568 = vmatpush2.bf16.msra.mxu0 0
    %1569 = vmatprep.subr.bf16.mxu0 0
    %1570 = vmatpush2.bf16.msra.mxu0 0
    %1571 = vmatprep.subr.bf16.mxu0 0
    %1572 = vmatpush2.bf16.msra.mxu0 0
    %1573 = vmatprep.subr.bf16.mxu0 0
    %1574 = vmatpush2.bf16.msra.mxu0 0
    %1575 = vmatprep.mubr.bf16.mxu0 0
    %1576 = vmatmul.mubr.bf16.gmra.mxu0 %v1501
    %v1577 = vpop.f32.mrf.mxu0
    %v1578 = vadd.f32 0.0, %v1577
    %v1579 = vpop.f32.mrf.mxu0
    %v1580 = vadd.f32 0.0, %v1579
    %v1581 = vpop.f32.mrf.mxu0
    %v1582 = vpop.f32.mrf.mxu0
    %1583 = vdwg.mxu0
    %v1584 = vadd.f32 %v1497, %v1537
    %v1585 = vadd.f32 %v1498, %v1539
    %v1586 = vadd.f32 %v1499, %v1578
    %v1587 = vadd.f32 %v1500, %v1580
    %v1588 = vxor.u32 %v1584, 2147483648
    %v1589 = vmul.f32 %v1588, 1.442695
    %v1590 = vpow.pop %v1589
    %v1591 = vadd.f32 %v1590, 1.0
    %v1592 = vrcp.pop %v1591
    %v1593 = vmul.f32 1.0, %v1592
    %v1594 = vxor.u32 %v1585, 2147483648
    %v1595 = vmul.f32 %v1594, 1.442695
    %v1596 = vpow.pop %v1595
    %v1597 = vadd.f32 %v1596, 1.0
    %v1598 = vrcp.pop %v1597
    %v1599 = vmul.f32 1.0, %v1598
    %v1600 = vtanh.pop %v1586
    %v1601 = vxor.u32 %v1587, 2147483648
    %v1602 = vmul.f32 %v1601, 1.442695
    %v1603 = vpow.pop %v1602
    %v1604 = vadd.f32 %v1603, 1.0
    %v1605 = vrcp.pop %v1604
    %v1606 = vmul.f32 1.0, %v1605
    %v1607 = vmul.f32 %v1599, %v1489
    %v1608 = vmul.f32 %v1593, %v1600
    %v1609 = vadd.f32 %v1607, %v1608
    %v1610 = vtanh.pop %v1609
    %v1611 = vmul.f32 %v1606, %v1610
    %s1612 = scalar_lea.vmem [#allocation3], 40
    %1613 = vst [vmem:[%s1612] sm:$0xff] %v1611
    %s1614 = smul.u32 6, 4
    %s1615 = smul.addr %s1614, 8
    %s1616 = scalar_lea.vmem [#allocation2], %s1615
    %v1617 = vld [vmem:[%s1616] sm:$0xff]
    %v1618 = vld [vmem:[%s1616 + $0x8] sm:$0xff]
    %v1619 = vld [vmem:[%s1616 + $0x10] sm:$0xff]
    %v1620 = vld [vmem:[%s1616 + $0x18] sm:$0xff]
    %v1621 = vpack.c.bf16 %v1611, %v1611
    %1622 = vmatprep.subr.bf16.mxu0 %v868
    %1623 = vmatpush1.bf16.msra.mxu0 %v867
    %1624 = vmatprep.subr.bf16.mxu0 %v864
    %1625 = vmatpush1.bf16.msra.mxu0 %v863
    %1626 = vmatprep.subr.bf16.mxu0 %v860
    %1627 = vmatpush1.bf16.msra.mxu0 %v859
    %1628 = vmatprep.subr.bf16.mxu0 %v856
    %1629 = vmatpush1.bf16.msra.mxu0 %v855
    %1630 = vmatprep.subr.bf16.mxu0 %v852
    %1631 = vmatpush1.bf16.msra.mxu0 %v851
    %1632 = vmatprep.subr.bf16.mxu0 %v848
    %1633 = vmatpush1.bf16.msra.mxu0 %v847
    %1634 = vmatprep.subr.bf16.mxu0 %v844
    %1635 = vmatpush1.bf16.msra.mxu0 %v843
    %1636 = vmatprep.subr.bf16.mxu0 %v840
    %1637 = vmatpush1.bf16.msra.mxu0 %v839
    %1638 = vmatprep.subr.bf16.mxu0 0
    %1639 = vmatpush2.bf16.msra.mxu0 0
    %1640 = vmatprep.subr.bf16.mxu0 0
    %1641 = vmatpush2.bf16.msra.mxu0 0
    %1642 = vmatprep.subr.bf16.mxu0 0
    %1643 = vmatpush2.bf16.msra.mxu0 0
    %1644 = vmatprep.subr.bf16.mxu0 0
    %1645 = vmatpush2.bf16.msra.mxu0 0
    %1646 = vmatprep.subr.bf16.mxu0 0
    %1647 = vmatpush2.bf16.msra.mxu0 0
    %1648 = vmatprep.subr.bf16.mxu0 0
    %1649 = vmatpush2.bf16.msra.mxu0 0
    %1650 = vmatprep.subr.bf16.mxu0 0
    %1651 = vmatpush2.bf16.msra.mxu0 0
    %1652 = vmatprep.subr.bf16.mxu0 0
    %1653 = vmatpush2.bf16.msra.mxu0 0
    %1654 = vmatprep.mubr.bf16.mxu0 0
    %1655 = vmatmul.mubr.bf16.gmra.mxu0 %v1621
    %v1656 = vpop.f32.mrf.mxu0
    %v1657 = vadd.f32 0.0, %v1656
    %v1658 = vpop.f32.mrf.mxu0
    %v1659 = vadd.f32 0.0, %v1658
    %v1660 = vpop.f32.mrf.mxu0
    %v1661 = vpop.f32.mrf.mxu0
    %1662 = vdwg.mxu0
    %1663 = vmatprep.subr.bf16.mxu0 %v870
    %1664 = vmatpush1.bf16.msra.mxu0 %v869
    %1665 = vmatprep.subr.bf16.mxu0 %v866
    %1666 = vmatpush1.bf16.msra.mxu0 %v865
    %1667 = vmatprep.subr.bf16.mxu0 %v862
    %1668 = vmatpush1.bf16.msra.mxu0 %v861
    %1669 = vmatprep.subr.bf16.mxu0 %v858
    %1670 = vmatpush1.bf16.msra.mxu0 %v857
    %1671 = vmatprep.subr.bf16.mxu0 %v854
    %1672 = vmatpush1.bf16.msra.mxu0 %v853
    %1673 = vmatprep.subr.bf16.mxu0 %v850
    %1674 = vmatpush1.bf16.msra.mxu0 %v849
    %1675 = vmatprep.subr.bf16.mxu0 %v846
    %1676 = vmatpush1.bf16.msra.mxu0 %v845
    %1677 = vmatprep.subr.bf16.mxu0 %v842
    %1678 = vmatpush1.bf16.msra.mxu0 %v841
    %1679 = vmatprep.subr.bf16.mxu0 0
    %1680 = vmatpush2.bf16.msra.mxu0 0
    %1681 = vmatprep.subr.bf16.mxu0 0
    %1682 = vmatpush2.bf16.msra.mxu0 0
    %1683 = vmatprep.subr.bf16.mxu0 0
    %1684 = vmatpush2.bf16.msra.mxu0 0
    %1685 = vmatprep.subr.bf16.mxu0 0
    %1686 = vmatpush2.bf16.msra.mxu0 0
    %1687 = vmatprep.subr.bf16.mxu0 0
    %1688 = vmatpush2.bf16.msra.mxu0 0
    %1689 = vmatprep.subr.bf16.mxu0 0
    %1690 = vmatpush2.bf16.msra.mxu0 0
    %1691 = vmatprep.subr.bf16.mxu0 0
    %1692 = vmatpush2.bf16.msra.mxu0 0
    %1693 = vmatprep.subr.bf16.mxu0 0
    %1694 = vmatpush2.bf16.msra.mxu0 0
    %1695 = vmatprep.mubr.bf16.mxu0 0
    %1696 = vmatmul.mubr.bf16.gmra.mxu0 %v1621
    %v1697 = vpop.f32.mrf.mxu0
    %v1698 = vadd.f32 0.0, %v1697
    %v1699 = vpop.f32.mrf.mxu0
    %v1700 = vadd.f32 0.0, %v1699
    %v1701 = vpop.f32.mrf.mxu0
    %v1702 = vpop.f32.mrf.mxu0
    %1703 = vdwg.mxu0
    %v1704 = vadd.f32 %v1617, %v1657
    %v1705 = vadd.f32 %v1618, %v1659
    %v1706 = vadd.f32 %v1619, %v1698
    %v1707 = vadd.f32 %v1620, %v1700
    %v1708 = vxor.u32 %v1704, 2147483648
    %v1709 = vmul.f32 %v1708, 1.442695
    %v1710 = vpow.pop %v1709
    %v1711 = vadd.f32 %v1710, 1.0
    %v1712 = vrcp.pop %v1711
    %v1713 = vmul.f32 1.0, %v1712
    %v1714 = vxor.u32 %v1705, 2147483648
    %v1715 = vmul.f32 %v1714, 1.442695
    %v1716 = vpow.pop %v1715
    %v1717 = vadd.f32 %v1716, 1.0
    %v1718 = vrcp.pop %v1717
    %v1719 = vmul.f32 1.0, %v1718
    %v1720 = vtanh.pop %v1706
    %v1721 = vxor.u32 %v1707, 2147483648
    %v1722 = vmul.f32 %v1721, 1.442695
    %v1723 = vpow.pop %v1722
    %v1724 = vadd.f32 %v1723, 1.0
    %v1725 = vrcp.pop %v1724
    %v1726 = vmul.f32 1.0, %v1725
    %v1727 = vmul.f32 %v1719, %v1609
    %v1728 = vmul.f32 %v1713, %v1720
    %v1729 = vadd.f32 %v1727, %v1728
    %v1730 = vtanh.pop %v1729
    %v1731 = vmul.f32 %v1726, %v1730
    %s1732 = scalar_lea.vmem [#allocation3], 48
    %1733 = vst [vmem:[%s1732] sm:$0xff] %v1731
    %s1734 = smul.u32 7, 4
    %s1735 = smul.addr %s1734, 8
    %s1736 = scalar_lea.vmem [#allocation2], %s1735
    %v1737 = vld [vmem:[%s1736] sm:$0xff]
    %v1738 = vld [vmem:[%s1736 + $0x8] sm:$0xff]
    %v1739 = vld [vmem:[%s1736 + $0x10] sm:$0xff]
    %v1740 = vld [vmem:[%s1736 + $0x18] sm:$0xff]
    %v1741 = vpack.c.bf16 %v1731, %v1731
    %1742 = vmatprep.subr.bf16.mxu0 %v868
    %1743 = vmatpush1.bf16.msra.mxu0 %v867
    %1744 = vmatprep.subr.bf16.mxu0 %v864
    %1745 = vmatpush1.bf16.msra.mxu0 %v863
    %1746 = vmatprep.subr.bf16.mxu0 %v860
    %1747 = vmatpush1.bf16.msra.mxu0 %v859
    %1748 = vmatprep.subr.bf16.mxu0 %v856
    %1749 = vmatpush1.bf16.msra.mxu0 %v855
    %1750 = vmatprep.subr.bf16.mxu0 %v852
    %1751 = vmatpush1.bf16.msra.mxu0 %v851
    %1752 = vmatprep.subr.bf16.mxu0 %v848
    %1753 = vmatpush1.bf16.msra.mxu0 %v847
    %1754 = vmatprep.subr.bf16.mxu0 %v844
    %1755 = vmatpush1.bf16.msra.mxu0 %v843
    %1756 = vmatprep.subr.bf16.mxu0 %v840
    %1757 = vmatpush1.bf16.msra.mxu0 %v839
    %1758 = vmatprep.subr.bf16.mxu0 0
    %1759 = vmatpush2.bf16.msra.mxu0 0
    %1760 = vmatprep.subr.bf16.mxu0 0
    %1761 = vmatpush2.bf16.msra.mxu0 0
    %1762 = vmatprep.subr.bf16.mxu0 0
    %1763 = vmatpush2.bf16.msra.mxu0 0
    %1764 = vmatprep.subr.bf16.mxu0 0
    %1765 = vmatpush2.bf16.msra.mxu0 0
    %1766 = vmatprep.subr.bf16.mxu0 0
    %1767 = vmatpush2.bf16.msra.mxu0 0
    %1768 = vmatprep.subr.bf16.mxu0 0
    %1769 = vmatpush2.bf16.msra.mxu0 0
    %1770 = vmatprep.subr.bf16.mxu0 0
    %1771 = vmatpush2.bf16.msra.mxu0 0
    %1772 = vmatprep.subr.bf16.mxu0 0
    %1773 = vmatpush2.bf16.msra.mxu0 0
    %1774 = vmatprep.mubr.bf16.mxu0 0
    %1775 = vmatmul.mubr.bf16.gmra.mxu0 %v1741
    %v1776 = vpop.f32.mrf.mxu0
    %v1777 = vadd.f32 0.0, %v1776
    %v1778 = vpop.f32.mrf.mxu0
    %v1779 = vadd.f32 0.0, %v1778
    %v1780 = vpop.f32.mrf.mxu0
    %v1781 = vpop.f32.mrf.mxu0
    %1782 = vdwg.mxu0
    %1783 = vmatprep.subr.bf16.mxu0 %v870
    %1784 = vmatpush1.bf16.msra.mxu0 %v869
    %1785 = vmatprep.subr.bf16.mxu0 %v866
    %1786 = vmatpush1.bf16.msra.mxu0 %v865
    %1787 = vmatprep.subr.bf16.mxu0 %v862
    %1788 = vmatpush1.bf16.msra.mxu0 %v861
    %1789 = vmatprep.subr.bf16.mxu0 %v858
    %1790 = vmatpush1.bf16.msra.mxu0 %v857
    %1791 = vmatprep.subr.bf16.mxu0 %v854
    %1792 = vmatpush1.bf16.msra.mxu0 %v853
    %1793 = vmatprep.subr.bf16.mxu0 %v850
    %1794 = vmatpush1.bf16.msra.mxu0 %v849
    %1795 = vmatprep.subr.bf16.mxu0 %v846
    %1796 = vmatpush1.bf16.msra.mxu0 %v845
    %1797 = vmatprep.subr.bf16.mxu0 %v842
    %1798 = vmatpush1.bf16.msra.mxu0 %v841
    %1799 = vmatprep.subr.bf16.mxu0 0
    %1800 = vmatpush2.bf16.msra.mxu0 0
    %1801 = vmatprep.subr.bf16.mxu0 0
    %1802 = vmatpush2.bf16.msra.mxu0 0
    %1803 = vmatprep.subr.bf16.mxu0 0
    %1804 = vmatpush2.bf16.msra.mxu0 0
    %1805 = vmatprep.subr.bf16.mxu0 0
    %1806 = vmatpush2.bf16.msra.mxu0 0
    %1807 = vmatprep.subr.bf16.mxu0 0
    %1808 = vmatpush2.bf16.msra.mxu0 0
    %1809 = vmatprep.subr.bf16.mxu0 0
    %1810 = vmatpush2.bf16.msra.mxu0 0
    %1811 = vmatprep.subr.bf16.mxu0 0
    %1812 = vmatpush2.bf16.msra.mxu0 0
    %1813 = vmatprep.subr.bf16.mxu0 0
    %1814 = vmatpush2.bf16.msra.mxu0 0
    %1815 = vmatprep.mubr.bf16.mxu0 0
    %1816 = vmatmul.mubr.bf16.gmra.mxu0 %v1741
    %v1817 = vpop.f32.mrf.mxu0
    %v1818 = vadd.f32 0.0, %v1817
    %v1819 = vpop.f32.mrf.mxu0
    %v1820 = vadd.f32 0.0, %v1819
    %v1821 = vpop.f32.mrf.mxu0
    %v1822 = vpop.f32.mrf.mxu0
    %1823 = vdwg.mxu0
    %v1824 = vadd.f32 %v1737, %v1777
    %v1825 = vadd.f32 %v1738, %v1779
    %v1826 = vadd.f32 %v1739, %v1818
    %v1827 = vadd.f32 %v1740, %v1820
    %v1828 = vxor.u32 %v1824, 2147483648
    %v1829 = vmul.f32 %v1828, 1.442695
    %v1830 = vpow.pop %v1829
    %v1831 = vadd.f32 %v1830, 1.0
    %v1832 = vrcp.pop %v1831
    %v1833 = vmul.f32 1.0, %v1832
    %v1834 = vxor.u32 %v1825, 2147483648
    %v1835 = vmul.f32 %v1834, 1.442695
    %v1836 = vpow.pop %v1835
    %v1837 = vadd.f32 %v1836, 1.0
    %v1838 = vrcp.pop %v1837
    %v1839 = vmul.f32 1.0, %v1838
    %v1840 = vtanh.pop %v1826
    %v1841 = vxor.u32 %v1827, 2147483648
    %v1842 = vmul.f32 %v1841, 1.442695
    %v1843 = vpow.pop %v1842
    %v1844 = vadd.f32 %v1843, 1.0
    %v1845 = vrcp.pop %v1844
    %v1846 = vmul.f32 1.0, %v1845
    %v1847 = vmul.f32 %v1839, %v1729
    %v1848 = vmul.f32 %v1833, %v1840
    %v1849 = vadd.f32 %v1847, %v1848
    %v1850 = vtanh.pop %v1849
    %v1851 = vmul.f32 %v1846, %v1850
    %s1852 = scalar_lea.vmem [#allocation3], 56
    %1853 = vst [vmem:[%s1852] sm:$0xff] %v1851
    %1854 = vst [vmem:[#allocation14] sm:$0xff] %v1851
    %1855 = vst [vmem:[#allocation16] sm:$0xff] %v1849
    %v1856 = vld [vmem:[#allocation3] sm:$0xff]
    %v1857 = vld [vmem:[#allocation3 + $0x8] sm:$0xff]
    %v1858 = vld [vmem:[#allocation3 + $0x10] sm:$0xff]
    %v1859 = vld [vmem:[#allocation3 + $0x18] sm:$0xff]
    %v1860 = vld [vmem:[#allocation3 + $0x20] sm:$0xff]
    %v1861 = vld [vmem:[#allocation3 + $0x28] sm:$0xff]
    %v1862 = vld [vmem:[#allocation3 + $0x30] sm:$0xff]
    %v1863 = vld [vmem:[#allocation3 + $0x38] sm:$0xff]
    %v1864 = vpack.c.bf16 %v1857, %v1856
    %v1865 = vpack.c.bf16 %v1859, %v1858
    %v1866 = vpack.c.bf16 %v1861, %v1860
    %v1867 = vpack.c.bf16 %v1863, %v1862
    %s1868 = scalar_lea.vmem [#allocation9], 256
    %v1869 = vld [vmem:[%s1868] sm:$0xff]
    %v1870 = vld [vmem:[%s1868 + $0x8] sm:$0xff]
    %v1871 = vld [vmem:[%s1868 + $0x10] sm:$0xff]
    %v1872 = vld [vmem:[%s1868 + $0x18] sm:$0xff]
    %v1873 = vld [vmem:[%s1868 + $0x20] sm:$0xff]
    %v1874 = vld [vmem:[%s1868 + $0x28] sm:$0xff]
    %v1875 = vld [vmem:[%s1868 + $0x30] sm:$0xff]
    %v1876 = vld [vmem:[%s1868 + $0x38] sm:$0xff]
    %v1877 = vld [vmem:[%s1868 + $0x40] sm:$0xff]
    %v1878 = vld [vmem:[%s1868 + $0x48] sm:$0xff]
    %v1879 = vld [vmem:[%s1868 + $0x50] sm:$0xff]
    %v1880 = vld [vmem:[%s1868 + $0x58] sm:$0xff]
    %v1881 = vld [vmem:[%s1868 + $0x60] sm:$0xff]
    %v1882 = vld [vmem:[%s1868 + $0x68] sm:$0xff]
    %v1883 = vld [vmem:[%s1868 + $0x70] sm:$0xff]
    %v1884 = vld [vmem:[%s1868 + $0x78] sm:$0xff]
    %v1885 = vld [vmem:[%s1868 + $0x80] sm:$0xff]
    %v1886 = vld [vmem:[%s1868 + $0x88] sm:$0xff]
    %v1887 = vld [vmem:[%s1868 + $0x90] sm:$0xff]
    %v1888 = vld [vmem:[%s1868 + $0x98] sm:$0xff]
    %v1889 = vld [vmem:[%s1868 + $0xa0] sm:$0xff]
    %v1890 = vld [vmem:[%s1868 + $0xa8] sm:$0xff]
    %v1891 = vld [vmem:[%s1868 + $0xb0] sm:$0xff]
    %v1892 = vld [vmem:[%s1868 + $0xb8] sm:$0xff]
    %v1893 = vld [vmem:[%s1868 + $0xc0] sm:$0xff]
    %v1894 = vld [vmem:[%s1868 + $0xc8] sm:$0xff]
    %v1895 = vld [vmem:[%s1868 + $0xd0] sm:$0xff]
    %v1896 = vld [vmem:[%s1868 + $0xd8] sm:$0xff]
    %v1897 = vld [vmem:[%s1868 + $0xe0] sm:$0xff]
    %v1898 = vld [vmem:[%s1868 + $0xe8] sm:$0xff]
    %v1899 = vld [vmem:[%s1868 + $0xf0] sm:$0xff]
    %v1900 = vld [vmem:[%s1868 + $0xf8] sm:$0xff]
    %s1901 = scalar_lea.vmem %s6, 4
    %v1902 = vld [vmem:[%s1901] sm:$0xf]
    %v1904 = vlaneseq
    %v1905 = vshrl.u32 %v1904, 7
    %v1906 = vsub.s32 0, %v1905
    %v1907 = vrot.slane %v1902, %v1906
    %v1908 = vlaneseq
    %v1909 = vshrl.u32 %v1908, 7
    %v1910 = vsub.s32 1, %v1909
    %v1911 = vrot.slane %v1902, %v1910
    %v1912 = vlaneseq
    %v1913 = vshrl.u32 %v1912, 7
    %v1914 = vsub.s32 2, %v1913
    %v1915 = vrot.slane %v1902, %v1914
    %v1916 = vlaneseq
    %v1917 = vshrl.u32 %v1916, 7
    %v1918 = vsub.s32 3, %v1917
    %v1919 = vrot.slane %v1902, %v1918
    %v1956 = vunpack.c.l.b16 %v1869
    %v1957 = vunpack.c.h.b16 %v1869
    %v1958 = vunpack.c.l.b16 %v1870
    %v1959 = vunpack.c.h.b16 %v1870
    %v1960 = vunpack.c.l.b16 %v1871
    %v1961 = vunpack.c.h.b16 %v1871
    %v1962 = vunpack.c.l.b16 %v1872
    %v1963 = vunpack.c.h.b16 %v1872
    %v1964 = vunpack.c.l.b16 %v1873
    %v1965 = vunpack.c.h.b16 %v1873
    %v1966 = vunpack.c.l.b16 %v1874
    %v1967 = vunpack.c.h.b16 %v1874
    %v1968 = vunpack.c.l.b16 %v1875
    %v1969 = vunpack.c.h.b16 %v1875
    %v1970 = vunpack.c.l.b16 %v1876
    %v1971 = vunpack.c.h.b16 %v1876
    %v1972 = vunpack.c.l.b16 %v1877
    %v1973 = vunpack.c.h.b16 %v1877
    %v1974 = vunpack.c.l.b16 %v1878
    %v1975 = vunpack.c.h.b16 %v1878
    %v1976 = vunpack.c.l.b16 %v1879
    %v1977 = vunpack.c.h.b16 %v1879
    %v1978 = vunpack.c.l.b16 %v1880
    %v1979 = vunpack.c.h.b16 %v1880
    %v1980 = vunpack.c.l.b16 %v1881
    %v1981 = vunpack.c.h.b16 %v1881
    %v1982 = vunpack.c.l.b16 %v1882
    %v1983 = vunpack.c.h.b16 %v1882
    %v1984 = vunpack.c.l.b16 %v1883
    %v1985 = vunpack.c.h.b16 %v1883
    %v1986 = vunpack.c.l.b16 %v1884
    %v1987 = vunpack.c.h.b16 %v1884
    %v1988 = vunpack.c.l.b16 %v1885
    %v1989 = vunpack.c.h.b16 %v1885
    %v1990 = vunpack.c.l.b16 %v1886
    %v1991 = vunpack.c.h.b16 %v1886
    %v1992 = vunpack.c.l.b16 %v1887
    %v1993 = vunpack.c.h.b16 %v1887
    %v1994 = vunpack.c.l.b16 %v1888
    %v1995 = vunpack.c.h.b16 %v1888
    %v1996 = vunpack.c.l.b16 %v1889
    %v1997 = vunpack.c.h.b16 %v1889
    %v1998 = vunpack.c.l.b16 %v1890
    %v1999 = vunpack.c.h.b16 %v1890
    %v2000 = vunpack.c.l.b16 %v1891
    %v2001 = vunpack.c.h.b16 %v1891
    %v2002 = vunpack.c.l.b16 %v1892
    %v2003 = vunpack.c.h.b16 %v1892
    %v2004 = vunpack.c.l.b16 %v1893
    %v2005 = vunpack.c.h.b16 %v1893
    %v2006 = vunpack.c.l.b16 %v1894
    %v2007 = vunpack.c.h.b16 %v1894
    %v2008 = vunpack.c.l.b16 %v1895
    %v2009 = vunpack.c.h.b16 %v1895
    %v2010 = vunpack.c.l.b16 %v1896
    %v2011 = vunpack.c.h.b16 %v1896
    %v2012 = vunpack.c.l.b16 %v1897
    %v2013 = vunpack.c.h.b16 %v1897
    %v2014 = vunpack.c.l.b16 %v1898
    %v2015 = vunpack.c.h.b16 %v1898
    %v2016 = vunpack.c.l.b16 %v1899
    %v2017 = vunpack.c.h.b16 %v1899
    %v2018 = vunpack.c.l.b16 %v1900
    %v2019 = vunpack.c.h.b16 %v1900
    %v2020 = vpack.c.b16 %v1960, %v1956
    %v2021 = vpack.c.b16 %v1961, %v1957
    %v2022 = vpack.c.b16 %v1962, %v1958
    %v2023 = vpack.c.b16 %v1963, %v1959
    %v2024 = vpack.c.b16 %v1968, %v1964
    %v2025 = vpack.c.b16 %v1969, %v1965
    %v2026 = vpack.c.b16 %v1970, %v1966
    %v2027 = vpack.c.b16 %v1971, %v1967
    %v2028 = vpack.c.b16 %v1976, %v1972
    %v2029 = vpack.c.b16 %v1977, %v1973
    %v2030 = vpack.c.b16 %v1978, %v1974
    %v2031 = vpack.c.b16 %v1979, %v1975
    %v2032 = vpack.c.b16 %v1984, %v1980
    %v2033 = vpack.c.b16 %v1985, %v1981
    %v2034 = vpack.c.b16 %v1986, %v1982
    %v2035 = vpack.c.b16 %v1987, %v1983
    %v2036 = vpack.c.b16 %v1992, %v1988
    %v2037 = vpack.c.b16 %v1993, %v1989
    %v2038 = vpack.c.b16 %v1994, %v1990
    %v2039 = vpack.c.b16 %v1995, %v1991
    %v2040 = vpack.c.b16 %v2000, %v1996
    %v2041 = vpack.c.b16 %v2001, %v1997
    %v2042 = vpack.c.b16 %v2002, %v1998
    %v2043 = vpack.c.b16 %v2003, %v1999
    %v2044 = vpack.c.b16 %v2008, %v2004
    %v2045 = vpack.c.b16 %v2009, %v2005
    %v2046 = vpack.c.b16 %v2010, %v2006
    %v2047 = vpack.c.b16 %v2011, %v2007
    %v2048 = vpack.c.b16 %v2016, %v2012
    %v2049 = vpack.c.b16 %v2017, %v2013
    %v2050 = vpack.c.b16 %v2018, %v2014
    %v2051 = vpack.c.b16 %v2019, %v2015
    %2084 = vmatprep.subr.bf16.mxu0 %v2049
    %2085 = vmatpush1.bf16.msra.mxu0 %v2048
    %2086 = vmatprep.subr.bf16.mxu0 %v2045
    %2087 = vmatpush1.bf16.msra.mxu0 %v2044
    %2088 = vmatprep.subr.bf16.mxu0 %v2041
    %2089 = vmatpush1.bf16.msra.mxu0 %v2040
    %2090 = vmatprep.subr.bf16.mxu0 %v2037
    %2091 = vmatpush1.bf16.msra.mxu0 %v2036
    %2092 = vmatprep.subr.bf16.mxu0 %v2033
    %2093 = vmatpush1.bf16.msra.mxu0 %v2032
    %2094 = vmatprep.subr.bf16.mxu0 %v2029
    %2095 = vmatpush1.bf16.msra.mxu0 %v2028
    %2096 = vmatprep.subr.bf16.mxu0 %v2025
    %2097 = vmatpush1.bf16.msra.mxu0 %v2024
    %2098 = vmatprep.subr.bf16.mxu0 %v2021
    %2099 = vmatpush1.bf16.msra.mxu0 %v2020
    %2100 = vmatprep.subr.bf16.mxu0 0
    %2101 = vmatpush2.bf16.msra.mxu0 0
    %2102 = vmatprep.subr.bf16.mxu0 0
    %2103 = vmatpush2.bf16.msra.mxu0 0
    %2104 = vmatprep.subr.bf16.mxu0 0
    %2105 = vmatpush2.bf16.msra.mxu0 0
    %2106 = vmatprep.subr.bf16.mxu0 0
    %2107 = vmatpush2.bf16.msra.mxu0 0
    %2108 = vmatprep.subr.bf16.mxu0 0
    %2109 = vmatpush2.bf16.msra.mxu0 0
    %2110 = vmatprep.subr.bf16.mxu0 0
    %2111 = vmatpush2.bf16.msra.mxu0 0
    %2112 = vmatprep.subr.bf16.mxu0 0
    %2113 = vmatpush2.bf16.msra.mxu0 0
    %2114 = vmatprep.subr.bf16.mxu0 0
    %2115 = vmatpush2.bf16.msra.mxu0 0
    %2116 = vmatprep.mubr.bf16.mxu0 0
    %2117 = vmatmul.mubr.bf16.gmra.mxu0 %v1864
    %v2118 = vpop.f32.mrf.mxu0
    %v2119 = vadd.f32 %v1907, %v2118
    %v2120 = vpop.f32.mrf.mxu0
    %v2121 = vadd.f32 %v1911, %v2120
    %v2122 = vpop.f32.mrf.mxu0
    %v2123 = vadd.f32 %v1907, %v2122
    %v2124 = vpop.f32.mrf.mxu0
    %v2125 = vadd.f32 %v1911, %v2124
    %2126 = vmatprep.mubr.bf16.mxu0 0
    %2127 = vmatmul.mubr.bf16.gmra.mxu0 %v1865
    %v2128 = vpop.f32.mrf.mxu0
    %v2129 = vadd.f32 %v1907, %v2128
    %v2130 = vpop.f32.mrf.mxu0
    %v2131 = vadd.f32 %v1911, %v2130
    %v2132 = vpop.f32.mrf.mxu0
    %v2133 = vadd.f32 %v1907, %v2132
    %v2134 = vpop.f32.mrf.mxu0
    %v2135 = vadd.f32 %v1911, %v2134
    %2136 = vmatprep.mubr.bf16.mxu0 0
    %2137 = vmatmul.mubr.bf16.gmra.mxu0 %v1866
    %v2138 = vpop.f32.mrf.mxu0
    %v2139 = vadd.f32 %v1907, %v2138
    %v2140 = vpop.f32.mrf.mxu0
    %v2141 = vadd.f32 %v1911, %v2140
    %v2142 = vpop.f32.mrf.mxu0
    %v2143 = vadd.f32 %v1907, %v2142
    %v2144 = vpop.f32.mrf.mxu0
    %v2145 = vadd.f32 %v1911, %v2144
    %2146 = vmatprep.mubr.bf16.mxu0 0
    %2147 = vmatmul.mubr.bf16.gmra.mxu0 %v1867
    %v2148 = vpop.f32.mrf.mxu0
    %v2149 = vadd.f32 %v1907, %v2148
    %v2150 = vpop.f32.mrf.mxu0
    %v2151 = vadd.f32 %v1911, %v2150
    %v2152 = vpop.f32.mrf.mxu0
    %v2153 = vadd.f32 %v1907, %v2152
    %v2154 = vpop.f32.mrf.mxu0
    %v2155 = vadd.f32 %v1911, %v2154
    %2156 = vdwg.mxu0
    %2157 = vmatprep.subr.bf16.mxu0 %v2051
    %2158 = vmatpush1.bf16.msra.mxu0 %v2050
    %2159 = vmatprep.subr.bf16.mxu0 %v2047
    %2160 = vmatpush1.bf16.msra.mxu0 %v2046
    %2161 = vmatprep.subr.bf16.mxu0 %v2043
    %2162 = vmatpush1.bf16.msra.mxu0 %v2042
    %2163 = vmatprep.subr.bf16.mxu0 %v2039
    %2164 = vmatpush1.bf16.msra.mxu0 %v2038
    %2165 = vmatprep.subr.bf16.mxu0 %v2035
    %2166 = vmatpush1.bf16.msra.mxu0 %v2034
    %2167 = vmatprep.subr.bf16.mxu0 %v2031
    %2168 = vmatpush1.bf16.msra.mxu0 %v2030
    %2169 = vmatprep.subr.bf16.mxu0 %v2027
    %2170 = vmatpush1.bf16.msra.mxu0 %v2026
    %2171 = vmatprep.subr.bf16.mxu0 %v2023
    %2172 = vmatpush1.bf16.msra.mxu0 %v2022
    %2173 = vmatprep.subr.bf16.mxu0 0
    %2174 = vmatpush2.bf16.msra.mxu0 0
    %2175 = vmatprep.subr.bf16.mxu0 0
    %2176 = vmatpush2.bf16.msra.mxu0 0
    %2177 = vmatprep.subr.bf16.mxu0 0
    %2178 = vmatpush2.bf16.msra.mxu0 0
    %2179 = vmatprep.subr.bf16.mxu0 0
    %2180 = vmatpush2.bf16.msra.mxu0 0
    %2181 = vmatprep.subr.bf16.mxu0 0
    %2182 = vmatpush2.bf16.msra.mxu0 0
    %2183 = vmatprep.subr.bf16.mxu0 0
    %2184 = vmatpush2.bf16.msra.mxu0 0
    %2185 = vmatprep.subr.bf16.mxu0 0
    %2186 = vmatpush2.bf16.msra.mxu0 0
    %2187 = vmatprep.subr.bf16.mxu0 0
    %2188 = vmatpush2.bf16.msra.mxu0 0
    %2189 = vmatprep.mubr.bf16.mxu0 0
    %2190 = vmatmul.mubr.bf16.gmra.mxu0 %v1864
    %v2191 = vpop.f32.mrf.mxu0
    %v2192 = vadd.f32 %v1915, %v2191
    %v2193 = vpop.f32.mrf.mxu0
    %v2194 = vadd.f32 %v1919, %v2193
    %v2195 = vpop.f32.mrf.mxu0
    %v2196 = vadd.f32 %v1915, %v2195
    %v2197 = vpop.f32.mrf.mxu0
    %v2198 = vadd.f32 %v1919, %v2197
    %2199 = vmatprep.mubr.bf16.mxu0 0
    %2200 = vmatmul.mubr.bf16.gmra.mxu0 %v1865
    %v2201 = vpop.f32.mrf.mxu0
    %v2202 = vadd.f32 %v1915, %v2201
    %v2203 = vpop.f32.mrf.mxu0
    %v2204 = vadd.f32 %v1919, %v2203
    %v2205 = vpop.f32.mrf.mxu0
    %v2206 = vadd.f32 %v1915, %v2205
    %v2207 = vpop.f32.mrf.mxu0
    %v2208 = vadd.f32 %v1919, %v2207
    %2209 = vmatprep.mubr.bf16.mxu0 0
    %2210 = vmatmul.mubr.bf16.gmra.mxu0 %v1866
    %v2211 = vpop.f32.mrf.mxu0
    %v2212 = vadd.f32 %v1915, %v2211
    %v2213 = vpop.f32.mrf.mxu0
    %v2214 = vadd.f32 %v1919, %v2213
    %v2215 = vpop.f32.mrf.mxu0
    %v2216 = vadd.f32 %v1915, %v2215
    %v2217 = vpop.f32.mrf.mxu0
    %v2218 = vadd.f32 %v1919, %v2217
    %2219 = vmatprep.mubr.bf16.mxu0 0
    %2220 = vmatmul.mubr.bf16.gmra.mxu0 %v1867
    %v2221 = vpop.f32.mrf.mxu0
    %v2222 = vadd.f32 %v1915, %v2221
    %v2223 = vpop.f32.mrf.mxu0
    %v2224 = vadd.f32 %v1919, %v2223
    %v2225 = vpop.f32.mrf.mxu0
    %v2226 = vadd.f32 %v1915, %v2225
    %v2227 = vpop.f32.mrf.mxu0
    %v2228 = vadd.f32 %v1919, %v2227
    %2229 = vdwg.mxu0
    %2230 = vst [vmem:[#allocation2] sm:$0xff] %v2119
    %2231 = vst [vmem:[#allocation2 + $0x8] sm:$0xff] %v2121
    %2232 = vst [vmem:[#allocation2 + $0x10] sm:$0xff] %v2192
    %2233 = vst [vmem:[#allocation2 + $0x18] sm:$0xff] %v2194
    %2234 = vst [vmem:[#allocation2 + $0x20] sm:$0xff] %v2123
    %2235 = vst [vmem:[#allocation2 + $0x28] sm:$0xff] %v2125
    %2236 = vst [vmem:[#allocation2 + $0x30] sm:$0xff] %v2196
    %2237 = vst [vmem:[#allocation2 + $0x38] sm:$0xff] %v2198
    %2238 = vst [vmem:[#allocation2 + $0x40] sm:$0xff] %v2129
    %2239 = vst [vmem:[#allocation2 + $0x48] sm:$0xff] %v2131
    %2240 = vst [vmem:[#allocation2 + $0x50] sm:$0xff] %v2202
    %2241 = vst [vmem:[#allocation2 + $0x58] sm:$0xff] %v2204
    %2242 = vst [vmem:[#allocation2 + $0x60] sm:$0xff] %v2133
    %2243 = vst [vmem:[#allocation2 + $0x68] sm:$0xff] %v2135
    %2244 = vst [vmem:[#allocation2 + $0x70] sm:$0xff] %v2206
    %2245 = vst [vmem:[#allocation2 + $0x78] sm:$0xff] %v2208
    %2246 = vst [vmem:[#allocation2 + $0x80] sm:$0xff] %v2139
    %2247 = vst [vmem:[#allocation2 + $0x88] sm:$0xff] %v2141
    %2248 = vst [vmem:[#allocation2 + $0x90] sm:$0xff] %v2212
    %2249 = vst [vmem:[#allocation2 + $0x98] sm:$0xff] %v2214
    %2250 = vst [vmem:[#allocation2 + $0xa0] sm:$0xff] %v2143
    %2251 = vst [vmem:[#allocation2 + $0xa8] sm:$0xff] %v2145
    %2252 = vst [vmem:[#allocation2 + $0xb0] sm:$0xff] %v2216
    %2253 = vst [vmem:[#allocation2 + $0xb8] sm:$0xff] %v2218
    %2254 = vst [vmem:[#allocation2 + $0xc0] sm:$0xff] %v2149
    %2255 = vst [vmem:[#allocation2 + $0xc8] sm:$0xff] %v2151
    %2256 = vst [vmem:[#allocation2 + $0xd0] sm:$0xff] %v2222
    %2257 = vst [vmem:[#allocation2 + $0xd8] sm:$0xff] %v2224
    %2258 = vst [vmem:[#allocation2 + $0xe0] sm:$0xff] %v2153
    %2259 = vst [vmem:[#allocation2 + $0xe8] sm:$0xff] %v2155
    %2260 = vst [vmem:[#allocation2 + $0xf0] sm:$0xff] %v2226
    %2261 = vst [vmem:[#allocation2 + $0xf8] sm:$0xff] %v2228
    %s2262 = scalar_lea.vmem [#allocation10], 256
    %v2263 = vld [vmem:[%s2262] sm:$0xff]
    %v2264 = vld [vmem:[%s2262 + $0x8] sm:$0xff]
    %v2265 = vld [vmem:[%s2262 + $0x10] sm:$0xff]
    %v2266 = vld [vmem:[%s2262 + $0x18] sm:$0xff]
    %v2267 = vld [vmem:[%s2262 + $0x20] sm:$0xff]
    %v2268 = vld [vmem:[%s2262 + $0x28] sm:$0xff]
    %v2269 = vld [vmem:[%s2262 + $0x30] sm:$0xff]
    %v2270 = vld [vmem:[%s2262 + $0x38] sm:$0xff]
    %v2271 = vld [vmem:[%s2262 + $0x40] sm:$0xff]
    %v2272 = vld [vmem:[%s2262 + $0x48] sm:$0xff]
    %v2273 = vld [vmem:[%s2262 + $0x50] sm:$0xff]
    %v2274 = vld [vmem:[%s2262 + $0x58] sm:$0xff]
    %v2275 = vld [vmem:[%s2262 + $0x60] sm:$0xff]
    %v2276 = vld [vmem:[%s2262 + $0x68] sm:$0xff]
    %v2277 = vld [vmem:[%s2262 + $0x70] sm:$0xff]
    %v2278 = vld [vmem:[%s2262 + $0x78] sm:$0xff]
    %v2279 = vld [vmem:[%s2262 + $0x80] sm:$0xff]
    %v2280 = vld [vmem:[%s2262 + $0x88] sm:$0xff]
    %v2281 = vld [vmem:[%s2262 + $0x90] sm:$0xff]
    %v2282 = vld [vmem:[%s2262 + $0x98] sm:$0xff]
    %v2283 = vld [vmem:[%s2262 + $0xa0] sm:$0xff]
    %v2284 = vld [vmem:[%s2262 + $0xa8] sm:$0xff]
    %v2285 = vld [vmem:[%s2262 + $0xb0] sm:$0xff]
    %v2286 = vld [vmem:[%s2262 + $0xb8] sm:$0xff]
    %v2287 = vld [vmem:[%s2262 + $0xc0] sm:$0xff]
    %v2288 = vld [vmem:[%s2262 + $0xc8] sm:$0xff]
    %v2289 = vld [vmem:[%s2262 + $0xd0] sm:$0xff]
    %v2290 = vld [vmem:[%s2262 + $0xd8] sm:$0xff]
    %v2291 = vld [vmem:[%s2262 + $0xe0] sm:$0xff]
    %v2292 = vld [vmem:[%s2262 + $0xe8] sm:$0xff]
    %v2293 = vld [vmem:[%s2262 + $0xf0] sm:$0xff]
    %v2294 = vld [vmem:[%s2262 + $0xf8] sm:$0xff]
    %s2295 = scalar_lea.vmem [#allocation4], 8
    %v2296 = vld [vmem:[%s2295] sm:$0xff]
    %s2297 = scalar_lea.vmem [#allocation7], 8
    %v2298 = vld [vmem:[%s2297] sm:$0xff]
    %v2299 = vld [vmem:[%s737] sm:$0xff]
    %v2300 = vld [vmem:[%s737 + $0x8] sm:$0xff]
    %v2301 = vld [vmem:[%s737 + $0x10] sm:$0xff]
    %v2302 = vld [vmem:[%s737 + $0x18] sm:$0xff]
    %v2303 = vpack.c.bf16 %v2296, %v2296
    %v2336 = vunpack.c.l.b16 %v2263
    %v2337 = vunpack.c.h.b16 %v2263
    %v2338 = vunpack.c.l.b16 %v2264
    %v2339 = vunpack.c.h.b16 %v2264
    %v2340 = vunpack.c.l.b16 %v2265
    %v2341 = vunpack.c.h.b16 %v2265
    %v2342 = vunpack.c.l.b16 %v2266
    %v2343 = vunpack.c.h.b16 %v2266
    %v2344 = vunpack.c.l.b16 %v2267
    %v2345 = vunpack.c.h.b16 %v2267
    %v2346 = vunpack.c.l.b16 %v2268
    %v2347 = vunpack.c.h.b16 %v2268
    %v2348 = vunpack.c.l.b16 %v2269
    %v2349 = vunpack.c.h.b16 %v2269
    %v2350 = vunpack.c.l.b16 %v2270
    %v2351 = vunpack.c.h.b16 %v2270
    %v2352 = vunpack.c.l.b16 %v2271
    %v2353 = vunpack.c.h.b16 %v2271
    %v2354 = vunpack.c.l.b16 %v2272
    %v2355 = vunpack.c.h.b16 %v2272
    %v2356 = vunpack.c.l.b16 %v2273
    %v2357 = vunpack.c.h.b16 %v2273
    %v2358 = vunpack.c.l.b16 %v2274
    %v2359 = vunpack.c.h.b16 %v2274
    %v2360 = vunpack.c.l.b16 %v2275
    %v2361 = vunpack.c.h.b16 %v2275
    %v2362 = vunpack.c.l.b16 %v2276
    %v2363 = vunpack.c.h.b16 %v2276
    %v2364 = vunpack.c.l.b16 %v2277
    %v2365 = vunpack.c.h.b16 %v2277
    %v2366 = vunpack.c.l.b16 %v2278
    %v2367 = vunpack.c.h.b16 %v2278
    %v2368 = vunpack.c.l.b16 %v2279
    %v2369 = vunpack.c.h.b16 %v2279
    %v2370 = vunpack.c.l.b16 %v2280
    %v2371 = vunpack.c.h.b16 %v2280
    %v2372 = vunpack.c.l.b16 %v2281
    %v2373 = vunpack.c.h.b16 %v2281
    %v2374 = vunpack.c.l.b16 %v2282
    %v2375 = vunpack.c.h.b16 %v2282
    %v2376 = vunpack.c.l.b16 %v2283
    %v2377 = vunpack.c.h.b16 %v2283
    %v2378 = vunpack.c.l.b16 %v2284
    %v2379 = vunpack.c.h.b16 %v2284
    %v2380 = vunpack.c.l.b16 %v2285
    %v2381 = vunpack.c.h.b16 %v2285
    %v2382 = vunpack.c.l.b16 %v2286
    %v2383 = vunpack.c.h.b16 %v2286
    %v2384 = vunpack.c.l.b16 %v2287
    %v2385 = vunpack.c.h.b16 %v2287
    %v2386 = vunpack.c.l.b16 %v2288
    %v2387 = vunpack.c.h.b16 %v2288
    %v2388 = vunpack.c.l.b16 %v2289
    %v2389 = vunpack.c.h.b16 %v2289
    %v2390 = vunpack.c.l.b16 %v2290
    %v2391 = vunpack.c.h.b16 %v2290
    %v2392 = vunpack.c.l.b16 %v2291
    %v2393 = vunpack.c.h.b16 %v2291
    %v2394 = vunpack.c.l.b16 %v2292
    %v2395 = vunpack.c.h.b16 %v2292
    %v2396 = vunpack.c.l.b16 %v2293
    %v2397 = vunpack.c.h.b16 %v2293
    %v2398 = vunpack.c.l.b16 %v2294
    %v2399 = vunpack.c.h.b16 %v2294
    %v2400 = vpack.c.b16 %v2340, %v2336
    %v2401 = vpack.c.b16 %v2341, %v2337
    %v2402 = vpack.c.b16 %v2342, %v2338
    %v2403 = vpack.c.b16 %v2343, %v2339
    %v2404 = vpack.c.b16 %v2348, %v2344
    %v2405 = vpack.c.b16 %v2349, %v2345
    %v2406 = vpack.c.b16 %v2350, %v2346
    %v2407 = vpack.c.b16 %v2351, %v2347
    %v2408 = vpack.c.b16 %v2356, %v2352
    %v2409 = vpack.c.b16 %v2357, %v2353
    %v2410 = vpack.c.b16 %v2358, %v2354
    %v2411 = vpack.c.b16 %v2359, %v2355
    %v2412 = vpack.c.b16 %v2364, %v2360
    %v2413 = vpack.c.b16 %v2365, %v2361
    %v2414 = vpack.c.b16 %v2366, %v2362
    %v2415 = vpack.c.b16 %v2367, %v2363
    %v2416 = vpack.c.b16 %v2372, %v2368
    %v2417 = vpack.c.b16 %v2373, %v2369
    %v2418 = vpack.c.b16 %v2374, %v2370
    %v2419 = vpack.c.b16 %v2375, %v2371
    %v2420 = vpack.c.b16 %v2380, %v2376
    %v2421 = vpack.c.b16 %v2381, %v2377
    %v2422 = vpack.c.b16 %v2382, %v2378
    %v2423 = vpack.c.b16 %v2383, %v2379
    %v2424 = vpack.c.b16 %v2388, %v2384
    %v2425 = vpack.c.b16 %v2389, %v2385
    %v2426 = vpack.c.b16 %v2390, %v2386
    %v2427 = vpack.c.b16 %v2391, %v2387
    %v2428 = vpack.c.b16 %v2396, %v2392
    %v2429 = vpack.c.b16 %v2397, %v2393
    %v2430 = vpack.c.b16 %v2398, %v2394
    %v2431 = vpack.c.b16 %v2399, %v2395
    %2464 = vmatprep.subr.bf16.mxu0 %v2429
    %2465 = vmatpush1.bf16.msra.mxu0 %v2428
    %2466 = vmatprep.subr.bf16.mxu0 %v2425
    %2467 = vmatpush1.bf16.msra.mxu0 %v2424
    %2468 = vmatprep.subr.bf16.mxu0 %v2421
    %2469 = vmatpush1.bf16.msra.mxu0 %v2420
    %2470 = vmatprep.subr.bf16.mxu0 %v2417
    %2471 = vmatpush1.bf16.msra.mxu0 %v2416
    %2472 = vmatprep.subr.bf16.mxu0 %v2413
    %2473 = vmatpush1.bf16.msra.mxu0 %v2412
    %2474 = vmatprep.subr.bf16.mxu0 %v2409
    %2475 = vmatpush1.bf16.msra.mxu0 %v2408
    %2476 = vmatprep.subr.bf16.mxu0 %v2405
    %2477 = vmatpush1.bf16.msra.mxu0 %v2404
    %2478 = vmatprep.subr.bf16.mxu0 %v2401
    %2479 = vmatpush1.bf16.msra.mxu0 %v2400
    %2480 = vmatprep.subr.bf16.mxu0 0
    %2481 = vmatpush2.bf16.msra.mxu0 0
    %2482 = vmatprep.subr.bf16.mxu0 0
    %2483 = vmatpush2.bf16.msra.mxu0 0
    %2484 = vmatprep.subr.bf16.mxu0 0
    %2485 = vmatpush2.bf16.msra.mxu0 0
    %2486 = vmatprep.subr.bf16.mxu0 0
    %2487 = vmatpush2.bf16.msra.mxu0 0
    %2488 = vmatprep.subr.bf16.mxu0 0
    %2489 = vmatpush2.bf16.msra.mxu0 0
    %2490 = vmatprep.subr.bf16.mxu0 0
    %2491 = vmatpush2.bf16.msra.mxu0 0
    %2492 = vmatprep.subr.bf16.mxu0 0
    %2493 = vmatpush2.bf16.msra.mxu0 0
    %2494 = vmatprep.subr.bf16.mxu0 0
    %2495 = vmatpush2.bf16.msra.mxu0 0
    %2496 = vmatprep.mubr.bf16.mxu0 0
    %2497 = vmatmul.mubr.bf16.gmra.mxu0 %v2303
    %v2498 = vpop.f32.mrf.mxu0
    %v2499 = vadd.f32 0.0, %v2498
    %v2500 = vpop.f32.mrf.mxu0
    %v2501 = vadd.f32 0.0, %v2500
    %v2502 = vpop.f32.mrf.mxu0
    %v2503 = vpop.f32.mrf.mxu0
    %2504 = vdwg.mxu0
    %2505 = vmatprep.subr.bf16.mxu0 %v2431
    %2506 = vmatpush1.bf16.msra.mxu0 %v2430
    %2507 = vmatprep.subr.bf16.mxu0 %v2427
    %2508 = vmatpush1.bf16.msra.mxu0 %v2426
    %2509 = vmatprep.subr.bf16.mxu0 %v2423
    %2510 = vmatpush1.bf16.msra.mxu0 %v2422
    %2511 = vmatprep.subr.bf16.mxu0 %v2419
    %2512 = vmatpush1.bf16.msra.mxu0 %v2418
    %2513 = vmatprep.subr.bf16.mxu0 %v2415
    %2514 = vmatpush1.bf16.msra.mxu0 %v2414
    %2515 = vmatprep.subr.bf16.mxu0 %v2411
    %2516 = vmatpush1.bf16.msra.mxu0 %v2410
    %2517 = vmatprep.subr.bf16.mxu0 %v2407
    %2518 = vmatpush1.bf16.msra.mxu0 %v2406
    %2519 = vmatprep.subr.bf16.mxu0 %v2403
    %2520 = vmatpush1.bf16.msra.mxu0 %v2402
    %2521 = vmatprep.subr.bf16.mxu0 0
    %2522 = vmatpush2.bf16.msra.mxu0 0
    %2523 = vmatprep.subr.bf16.mxu0 0
    %2524 = vmatpush2.bf16.msra.mxu0 0
    %2525 = vmatprep.subr.bf16.mxu0 0
    %2526 = vmatpush2.bf16.msra.mxu0 0
    %2527 = vmatprep.subr.bf16.mxu0 0
    %2528 = vmatpush2.bf16.msra.mxu0 0
    %2529 = vmatprep.subr.bf16.mxu0 0
    %2530 = vmatpush2.bf16.msra.mxu0 0
    %2531 = vmatprep.subr.bf16.mxu0 0
    %2532 = vmatpush2.bf16.msra.mxu0 0
    %2533 = vmatprep.subr.bf16.mxu0 0
    %2534 = vmatpush2.bf16.msra.mxu0 0
    %2535 = vmatprep.subr.bf16.mxu0 0
    %2536 = vmatpush2.bf16.msra.mxu0 0
    %2537 = vmatprep.mubr.bf16.mxu0 0
    %2538 = vmatmul.mubr.bf16.gmra.mxu0 %v2303
    %v2539 = vpop.f32.mrf.mxu0
    %v2540 = vadd.f32 0.0, %v2539
    %v2541 = vpop.f32.mrf.mxu0
    %v2542 = vadd.f32 0.0, %v2541
    %v2543 = vpop.f32.mrf.mxu0
    %v2544 = vpop.f32.mrf.mxu0
    %2545 = vdwg.mxu0
    %v2546 = vadd.f32 %v2299, %v2499
    %v2547 = vadd.f32 %v2300, %v2501
    %v2548 = vadd.f32 %v2301, %v2540
    %v2549 = vadd.f32 %v2302, %v2542
    %v2550 = vxor.u32 %v2546, 2147483648
    %v2551 = vmul.f32 %v2550, 1.442695
    %v2552 = vpow.pop %v2551
    %v2553 = vadd.f32 %v2552, 1.0
    %v2554 = vrcp.pop %v2553
    %v2555 = vmul.f32 1.0, %v2554
    %v2556 = vxor.u32 %v2547, 2147483648
    %v2557 = vmul.f32 %v2556, 1.442695
    %v2558 = vpow.pop %v2557
    %v2559 = vadd.f32 %v2558, 1.0
    %v2560 = vrcp.pop %v2559
    %v2561 = vmul.f32 1.0, %v2560
    %v2562 = vtanh.pop %v2548
    %v2563 = vxor.u32 %v2549, 2147483648
    %v2564 = vmul.f32 %v2563, 1.442695
    %v2565 = vpow.pop %v2564
    %v2566 = vadd.f32 %v2565, 1.0
    %v2567 = vrcp.pop %v2566
    %v2568 = vmul.f32 1.0, %v2567
    %v2569 = vmul.f32 %v2561, %v2298
    %v2570 = vmul.f32 %v2555, %v2562
    %v2571 = vadd.f32 %v2569, %v2570
    %v2572 = vtanh.pop %v2571
    %v2573 = vmul.f32 %v2568, %v2572
    %2574 = vst [vmem:[#allocation3] sm:$0xff] %v2573
    %v2575 = vld [vmem:[%s1016] sm:$0xff]
    %v2576 = vld [vmem:[%s1016 + $0x8] sm:$0xff]
    %v2577 = vld [vmem:[%s1016 + $0x10] sm:$0xff]
    %v2578 = vld [vmem:[%s1016 + $0x18] sm:$0xff]
    %v2579 = vpack.c.bf16 %v2573, %v2573
    %2580 = vmatprep.subr.bf16.mxu0 %v2429
    %2581 = vmatpush1.bf16.msra.mxu0 %v2428
    %2582 = vmatprep.subr.bf16.mxu0 %v2425
    %2583 = vmatpush1.bf16.msra.mxu0 %v2424
    %2584 = vmatprep.subr.bf16.mxu0 %v2421
    %2585 = vmatpush1.bf16.msra.mxu0 %v2420
    %2586 = vmatprep.subr.bf16.mxu0 %v2417
    %2587 = vmatpush1.bf16.msra.mxu0 %v2416
    %2588 = vmatprep.subr.bf16.mxu0 %v2413
    %2589 = vmatpush1.bf16.msra.mxu0 %v2412
    %2590 = vmatprep.subr.bf16.mxu0 %v2409
    %2591 = vmatpush1.bf16.msra.mxu0 %v2408
    %2592 = vmatprep.subr.bf16.mxu0 %v2405
    %2593 = vmatpush1.bf16.msra.mxu0 %v2404
    %2594 = vmatprep.subr.bf16.mxu0 %v2401
    %2595 = vmatpush1.bf16.msra.mxu0 %v2400
    %2596 = vmatprep.subr.bf16.mxu0 0
    %2597 = vmatpush2.bf16.msra.mxu0 0
    %2598 = vmatprep.subr.bf16.mxu0 0
    %2599 = vmatpush2.bf16.msra.mxu0 0
    %2600 = vmatprep.subr.bf16.mxu0 0
    %2601 = vmatpush2.bf16.msra.mxu0 0
    %2602 = vmatprep.subr.bf16.mxu0 0
    %2603 = vmatpush2.bf16.msra.mxu0 0
    %2604 = vmatprep.subr.bf16.mxu0 0
    %2605 = vmatpush2.bf16.msra.mxu0 0
    %2606 = vmatprep.subr.bf16.mxu0 0
    %2607 = vmatpush2.bf16.msra.mxu0 0
    %2608 = vmatprep.subr.bf16.mxu0 0
    %2609 = vmatpush2.bf16.msra.mxu0 0
    %2610 = vmatprep.subr.bf16.mxu0 0
    %2611 = vmatpush2.bf16.msra.mxu0 0
    %2612 = vmatprep.mubr.bf16.mxu0 0
    %2613 = vmatmul.mubr.bf16.gmra.mxu0 %v2579
    %v2614 = vpop.f32.mrf.mxu0
    %v2615 = vadd.f32 0.0, %v2614
    %v2616 = vpop.f32.mrf.mxu0
    %v2617 = vadd.f32 0.0, %v2616
    %v2618 = vpop.f32.mrf.mxu0
    %v2619 = vpop.f32.mrf.mxu0
    %2620 = vdwg.mxu0
    %2621 = vmatprep.subr.bf16.mxu0 %v2431
    %2622 = vmatpush1.bf16.msra.mxu0 %v2430
    %2623 = vmatprep.subr.bf16.mxu0 %v2427
    %2624 = vmatpush1.bf16.msra.mxu0 %v2426
    %2625 = vmatprep.subr.bf16.mxu0 %v2423
    %2626 = vmatpush1.bf16.msra.mxu0 %v2422
    %2627 = vmatprep.subr.bf16.mxu0 %v2419
    %2628 = vmatpush1.bf16.msra.mxu0 %v2418
    %2629 = vmatprep.subr.bf16.mxu0 %v2415
    %2630 = vmatpush1.bf16.msra.mxu0 %v2414
    %2631 = vmatprep.subr.bf16.mxu0 %v2411
    %2632 = vmatpush1.bf16.msra.mxu0 %v2410
    %2633 = vmatprep.subr.bf16.mxu0 %v2407
    %2634 = vmatpush1.bf16.msra.mxu0 %v2406
    %2635 = vmatprep.subr.bf16.mxu0 %v2403
    %2636 = vmatpush1.bf16.msra.mxu0 %v2402
    %2637 = vmatprep.subr.bf16.mxu0 0
    %2638 = vmatpush2.bf16.msra.mxu0 0
    %2639 = vmatprep.subr.bf16.mxu0 0
    %2640 = vmatpush2.bf16.msra.mxu0 0
    %2641 = vmatprep.subr.bf16.mxu0 0
    %2642 = vmatpush2.bf16.msra.mxu0 0
    %2643 = vmatprep.subr.bf16.mxu0 0
    %2644 = vmatpush2.bf16.msra.mxu0 0
    %2645 = vmatprep.subr.bf16.mxu0 0
    %2646 = vmatpush2.bf16.msra.mxu0 0
    %2647 = vmatprep.subr.bf16.mxu0 0
    %2648 = vmatpush2.bf16.msra.mxu0 0
    %2649 = vmatprep.subr.bf16.mxu0 0
    %2650 = vmatpush2.bf16.msra.mxu0 0
    %2651 = vmatprep.subr.bf16.mxu0 0
    %2652 = vmatpush2.bf16.msra.mxu0 0
    %2653 = vmatprep.mubr.bf16.mxu0 0
    %2654 = vmatmul.mubr.bf16.gmra.mxu0 %v2579
    %v2655 = vpop.f32.mrf.mxu0
    %v2656 = vadd.f32 0.0, %v2655
    %v2657 = vpop.f32.mrf.mxu0
    %v2658 = vadd.f32 0.0, %v2657
    %v2659 = vpop.f32.mrf.mxu0
    %v2660 = vpop.f32.mrf.mxu0
    %2661 = vdwg.mxu0
    %v2662 = vadd.f32 %v2575, %v2615
    %v2663 = vadd.f32 %v2576, %v2617
    %v2664 = vadd.f32 %v2577, %v2656
    %v2665 = vadd.f32 %v2578, %v2658
    %v2666 = vxor.u32 %v2662, 2147483648
    %v2667 = vmul.f32 %v2666, 1.442695
    %v2668 = vpow.pop %v2667
    %v2669 = vadd.f32 %v2668, 1.0
    %v2670 = vrcp.pop %v2669
    %v2671 = vmul.f32 1.0, %v2670
    %v2672 = vxor.u32 %v2663, 2147483648
    %v2673 = vmul.f32 %v2672, 1.442695
    %v2674 = vpow.pop %v2673
    %v2675 = vadd.f32 %v2674, 1.0
    %v2676 = vrcp.pop %v2675
    %v2677 = vmul.f32 1.0, %v2676
    %v2678 = vtanh.pop %v2664
    %v2679 = vxor.u32 %v2665, 2147483648
    %v2680 = vmul.f32 %v2679, 1.442695
    %v2681 = vpow.pop %v2680
    %v2682 = vadd.f32 %v2681, 1.0
    %v2683 = vrcp.pop %v2682
    %v2684 = vmul.f32 1.0, %v2683
    %v2685 = vmul.f32 %v2677, %v2571
    %v2686 = vmul.f32 %v2671, %v2678
    %v2687 = vadd.f32 %v2685, %v2686
    %v2688 = vtanh.pop %v2687
    %v2689 = vmul.f32 %v2684, %v2688
    %2690 = vst [vmem:[%s1132] sm:$0xff] %v2689
    %v2691 = vld [vmem:[%s1136] sm:$0xff]
    %v2692 = vld [vmem:[%s1136 + $0x8] sm:$0xff]
    %v2693 = vld [vmem:[%s1136 + $0x10] sm:$0xff]
    %v2694 = vld [vmem:[%s1136 + $0x18] sm:$0xff]
    %v2695 = vpack.c.bf16 %v2689, %v2689
    %2696 = vmatprep.subr.bf16.mxu0 %v2429
    %2697 = vmatpush1.bf16.msra.mxu0 %v2428
    %2698 = vmatprep.subr.bf16.mxu0 %v2425
    %2699 = vmatpush1.bf16.msra.mxu0 %v2424
    %2700 = vmatprep.subr.bf16.mxu0 %v2421
    %2701 = vmatpush1.bf16.msra.mxu0 %v2420
    %2702 = vmatprep.subr.bf16.mxu0 %v2417
    %2703 = vmatpush1.bf16.msra.mxu0 %v2416
    %2704 = vmatprep.subr.bf16.mxu0 %v2413
    %2705 = vmatpush1.bf16.msra.mxu0 %v2412
    %2706 = vmatprep.subr.bf16.mxu0 %v2409
    %2707 = vmatpush1.bf16.msra.mxu0 %v2408
    %2708 = vmatprep.subr.bf16.mxu0 %v2405
    %2709 = vmatpush1.bf16.msra.mxu0 %v2404
    %2710 = vmatprep.subr.bf16.mxu0 %v2401
    %2711 = vmatpush1.bf16.msra.mxu0 %v2400
    %2712 = vmatprep.subr.bf16.mxu0 0
    %2713 = vmatpush2.bf16.msra.mxu0 0
    %2714 = vmatprep.subr.bf16.mxu0 0
    %2715 = vmatpush2.bf16.msra.mxu0 0
    %2716 = vmatprep.subr.bf16.mxu0 0
    %2717 = vmatpush2.bf16.msra.mxu0 0
    %2718 = vmatprep.subr.bf16.mxu0 0
    %2719 = vmatpush2.bf16.msra.mxu0 0
    %2720 = vmatprep.subr.bf16.mxu0 0
    %2721 = vmatpush2.bf16.msra.mxu0 0
    %2722 = vmatprep.subr.bf16.mxu0 0
    %2723 = vmatpush2.bf16.msra.mxu0 0
    %2724 = vmatprep.subr.bf16.mxu0 0
    %2725 = vmatpush2.bf16.msra.mxu0 0
    %2726 = vmatprep.subr.bf16.mxu0 0
    %2727 = vmatpush2.bf16.msra.mxu0 0
    %2728 = vmatprep.mubr.bf16.mxu0 0
    %2729 = vmatmul.mubr.bf16.gmra.mxu0 %v2695
    %v2730 = vpop.f32.mrf.mxu0
    %v2731 = vadd.f32 0.0, %v2730
    %v2732 = vpop.f32.mrf.mxu0
    %v2733 = vadd.f32 0.0, %v2732
    %v2734 = vpop.f32.mrf.mxu0
    %v2735 = vpop.f32.mrf.mxu0
    %2736 = vdwg.mxu0
    %2737 = vmatprep.subr.bf16.mxu0 %v2431
    %2738 = vmatpush1.bf16.msra.mxu0 %v2430
    %2739 = vmatprep.subr.bf16.mxu0 %v2427
    %2740 = vmatpush1.bf16.msra.mxu0 %v2426
    %2741 = vmatprep.subr.bf16.mxu0 %v2423
    %2742 = vmatpush1.bf16.msra.mxu0 %v2422
    %2743 = vmatprep.subr.bf16.mxu0 %v2419
    %2744 = vmatpush1.bf16.msra.mxu0 %v2418
    %2745 = vmatprep.subr.bf16.mxu0 %v2415
    %2746 = vmatpush1.bf16.msra.mxu0 %v2414
    %2747 = vmatprep.subr.bf16.mxu0 %v2411
    %2748 = vmatpush1.bf16.msra.mxu0 %v2410
    %2749 = vmatprep.subr.bf16.mxu0 %v2407
    %2750 = vmatpush1.bf16.msra.mxu0 %v2406
    %2751 = vmatprep.subr.bf16.mxu0 %v2403
    %2752 = vmatpush1.bf16.msra.mxu0 %v2402
    %2753 = vmatprep.subr.bf16.mxu0 0
    %2754 = vmatpush2.bf16.msra.mxu0 0
    %2755 = vmatprep.subr.bf16.mxu0 0
    %2756 = vmatpush2.bf16.msra.mxu0 0
    %2757 = vmatprep.subr.bf16.mxu0 0
    %2758 = vmatpush2.bf16.msra.mxu0 0
    %2759 = vmatprep.subr.bf16.mxu0 0
    %2760 = vmatpush2.bf16.msra.mxu0 0
    %2761 = vmatprep.subr.bf16.mxu0 0
    %2762 = vmatpush2.bf16.msra.mxu0 0
    %2763 = vmatprep.subr.bf16.mxu0 0
    %2764 = vmatpush2.bf16.msra.mxu0 0
    %2765 = vmatprep.subr.bf16.mxu0 0
    %2766 = vmatpush2.bf16.msra.mxu0 0
    %2767 = vmatprep.subr.bf16.mxu0 0
    %2768 = vmatpush2.bf16.msra.mxu0 0
    %2769 = vmatprep.mubr.bf16.mxu0 0
    %2770 = vmatmul.mubr.bf16.gmra.mxu0 %v2695
    %v2771 = vpop.f32.mrf.mxu0
    %v2772 = vadd.f32 0.0, %v2771
    %v2773 = vpop.f32.mrf.mxu0
    %v2774 = vadd.f32 0.0, %v2773
    %v2775 = vpop.f32.mrf.mxu0
    %v2776 = vpop.f32.mrf.mxu0
    %2777 = vdwg.mxu0
    %v2778 = vadd.f32 %v2691, %v2731
    %v2779 = vadd.f32 %v2692, %v2733
    %v2780 = vadd.f32 %v2693, %v2772
    %v2781 = vadd.f32 %v2694, %v2774
    %v2782 = vxor.u32 %v2778, 2147483648
    %v2783 = vmul.f32 %v2782, 1.442695
    %v2784 = vpow.pop %v2783
    %v2785 = vadd.f32 %v2784, 1.0
    %v2786 = vrcp.pop %v2785
    %v2787 = vmul.f32 1.0, %v2786
    %v2788 = vxor.u32 %v2779, 2147483648
    %v2789 = vmul.f32 %v2788, 1.442695
    %v2790 = vpow.pop %v2789
    %v2791 = vadd.f32 %v2790, 1.0
    %v2792 = vrcp.pop %v2791
    %v2793 = vmul.f32 1.0, %v2792
    %v2794 = vtanh.pop %v2780
    %v2795 = vxor.u32 %v2781, 2147483648
    %v2796 = vmul.f32 %v2795, 1.442695
    %v2797 = vpow.pop %v2796
    %v2798 = vadd.f32 %v2797, 1.0
    %v2799 = vrcp.pop %v2798
    %v2800 = vmul.f32 1.0, %v2799
    %v2801 = vmul.f32 %v2793, %v2687
    %v2802 = vmul.f32 %v2787, %v2794
    %v2803 = vadd.f32 %v2801, %v2802
    %v2804 = vtanh.pop %v2803
    %v2805 = vmul.f32 %v2800, %v2804
    %2806 = vst [vmem:[%s1252] sm:$0xff] %v2805
    %v2807 = vld [vmem:[%s1256] sm:$0xff]
    %v2808 = vld [vmem:[%s1256 + $0x8] sm:$0xff]
    %v2809 = vld [vmem:[%s1256 + $0x10] sm:$0xff]
    %v2810 = vld [vmem:[%s1256 + $0x18] sm:$0xff]
    %v2811 = vpack.c.bf16 %v2805, %v2805
    %2812 = vmatprep.subr.bf16.mxu0 %v2429
    %2813 = vmatpush1.bf16.msra.mxu0 %v2428
    %2814 = vmatprep.subr.bf16.mxu0 %v2425
    %2815 = vmatpush1.bf16.msra.mxu0 %v2424
    %2816 = vmatprep.subr.bf16.mxu0 %v2421
    %2817 = vmatpush1.bf16.msra.mxu0 %v2420
    %2818 = vmatprep.subr.bf16.mxu0 %v2417
    %2819 = vmatpush1.bf16.msra.mxu0 %v2416
    %2820 = vmatprep.subr.bf16.mxu0 %v2413
    %2821 = vmatpush1.bf16.msra.mxu0 %v2412
    %2822 = vmatprep.subr.bf16.mxu0 %v2409
    %2823 = vmatpush1.bf16.msra.mxu0 %v2408
    %2824 = vmatprep.subr.bf16.mxu0 %v2405
    %2825 = vmatpush1.bf16.msra.mxu0 %v2404
    %2826 = vmatprep.subr.bf16.mxu0 %v2401
    %2827 = vmatpush1.bf16.msra.mxu0 %v2400
    %2828 = vmatprep.subr.bf16.mxu0 0
    %2829 = vmatpush2.bf16.msra.mxu0 0
    %2830 = vmatprep.subr.bf16.mxu0 0
    %2831 = vmatpush2.bf16.msra.mxu0 0
    %2832 = vmatprep.subr.bf16.mxu0 0
    %2833 = vmatpush2.bf16.msra.mxu0 0
    %2834 = vmatprep.subr.bf16.mxu0 0
    %2835 = vmatpush2.bf16.msra.mxu0 0
    %2836 = vmatprep.subr.bf16.mxu0 0
    %2837 = vmatpush2.bf16.msra.mxu0 0
    %2838 = vmatprep.subr.bf16.mxu0 0
    %2839 = vmatpush2.bf16.msra.mxu0 0
    %2840 = vmatprep.subr.bf16.mxu0 0
    %2841 = vmatpush2.bf16.msra.mxu0 0
    %2842 = vmatprep.subr.bf16.mxu0 0
    %2843 = vmatpush2.bf16.msra.mxu0 0
    %2844 = vmatprep.mubr.bf16.mxu0 0
    %2845 = vmatmul.mubr.bf16.gmra.mxu0 %v2811
    %v2846 = vpop.f32.mrf.mxu0
    %v2847 = vadd.f32 0.0, %v2846
    %v2848 = vpop.f32.mrf.mxu0
    %v2849 = vadd.f32 0.0, %v2848
    %v2850 = vpop.f32.mrf.mxu0
    %v2851 = vpop.f32.mrf.mxu0
    %2852 = vdwg.mxu0
    %2853 = vmatprep.subr.bf16.mxu0 %v2431
    %2854 = vmatpush1.bf16.msra.mxu0 %v2430
    %2855 = vmatprep.subr.bf16.mxu0 %v2427
    %2856 = vmatpush1.bf16.msra.mxu0 %v2426
    %2857 = vmatprep.subr.bf16.mxu0 %v2423
    %2858 = vmatpush1.bf16.msra.mxu0 %v2422
    %2859 = vmatprep.subr.bf16.mxu0 %v2419
    %2860 = vmatpush1.bf16.msra.mxu0 %v2418
    %2861 = vmatprep.subr.bf16.mxu0 %v2415
    %2862 = vmatpush1.bf16.msra.mxu0 %v2414
    %2863 = vmatprep.subr.bf16.mxu0 %v2411
    %2864 = vmatpush1.bf16.msra.mxu0 %v2410
    %2865 = vmatprep.subr.bf16.mxu0 %v2407
    %2866 = vmatpush1.bf16.msra.mxu0 %v2406
    %2867 = vmatprep.subr.bf16.mxu0 %v2403
    %2868 = vmatpush1.bf16.msra.mxu0 %v2402
    %2869 = vmatprep.subr.bf16.mxu0 0
    %2870 = vmatpush2.bf16.msra.mxu0 0
    %2871 = vmatprep.subr.bf16.mxu0 0
    %2872 = vmatpush2.bf16.msra.mxu0 0
    %2873 = vmatprep.subr.bf16.mxu0 0
    %2874 = vmatpush2.bf16.msra.mxu0 0
    %2875 = vmatprep.subr.bf16.mxu0 0
    %2876 = vmatpush2.bf16.msra.mxu0 0
    %2877 = vmatprep.subr.bf16.mxu0 0
    %2878 = vmatpush2.bf16.msra.mxu0 0
    %2879 = vmatprep.subr.bf16.mxu0 0
    %2880 = vmatpush2.bf16.msra.mxu0 0
    %2881 = vmatprep.subr.bf16.mxu0 0
    %2882 = vmatpush2.bf16.msra.mxu0 0
    %2883 = vmatprep.subr.bf16.mxu0 0
    %2884 = vmatpush2.bf16.msra.mxu0 0
    %2885 = vmatprep.mubr.bf16.mxu0 0
    %2886 = vmatmul.mubr.bf16.gmra.mxu0 %v2811
    %v2887 = vpop.f32.mrf.mxu0
    %v2888 = vadd.f32 0.0, %v2887
    %v2889 = vpop.f32.mrf.mxu0
    %v2890 = vadd.f32 0.0, %v2889
    %v2891 = vpop.f32.mrf.mxu0
    %v2892 = vpop.f32.mrf.mxu0
    %2893 = vdwg.mxu0
    %v2894 = vadd.f32 %v2807, %v2847
    %v2895 = vadd.f32 %v2808, %v2849
    %v2896 = vadd.f32 %v2809, %v2888
    %v2897 = vadd.f32 %v2810, %v2890
    %v2898 = vxor.u32 %v2894, 2147483648
    %v2899 = vmul.f32 %v2898, 1.442695
    %v2900 = vpow.pop %v2899
    %v2901 = vadd.f32 %v2900, 1.0
    %v2902 = vrcp.pop %v2901
    %v2903 = vmul.f32 1.0, %v2902
    %v2904 = vxor.u32 %v2895, 2147483648
    %v2905 = vmul.f32 %v2904, 1.442695
    %v2906 = vpow.pop %v2905
    %v2907 = vadd.f32 %v2906, 1.0
    %v2908 = vrcp.pop %v2907
    %v2909 = vmul.f32 1.0, %v2908
    %v2910 = vtanh.pop %v2896
    %v2911 = vxor.u32 %v2897, 2147483648
    %v2912 = vmul.f32 %v2911, 1.442695
    %v2913 = vpow.pop %v2912
    %v2914 = vadd.f32 %v2913, 1.0
    %v2915 = vrcp.pop %v2914
    %v2916 = vmul.f32 1.0, %v2915
    %v2917 = vmul.f32 %v2909, %v2803
    %v2918 = vmul.f32 %v2903, %v2910
    %v2919 = vadd.f32 %v2917, %v2918
    %v2920 = vtanh.pop %v2919
    %v2921 = vmul.f32 %v2916, %v2920
    %2922 = vst [vmem:[%s1372] sm:$0xff] %v2921
    %v2923 = vld [vmem:[%s1376] sm:$0xff]
    %v2924 = vld [vmem:[%s1376 + $0x8] sm:$0xff]
    %v2925 = vld [vmem:[%s1376 + $0x10] sm:$0xff]
    %v2926 = vld [vmem:[%s1376 + $0x18] sm:$0xff]
    %v2927 = vpack.c.bf16 %v2921, %v2921
    %2928 = vmatprep.subr.bf16.mxu0 %v2429
    %2929 = vmatpush1.bf16.msra.mxu0 %v2428
    %2930 = vmatprep.subr.bf16.mxu0 %v2425
    %2931 = vmatpush1.bf16.msra.mxu0 %v2424
    %2932 = vmatprep.subr.bf16.mxu0 %v2421
    %2933 = vmatpush1.bf16.msra.mxu0 %v2420
    %2934 = vmatprep.subr.bf16.mxu0 %v2417
    %2935 = vmatpush1.bf16.msra.mxu0 %v2416
    %2936 = vmatprep.subr.bf16.mxu0 %v2413
    %2937 = vmatpush1.bf16.msra.mxu0 %v2412
    %2938 = vmatprep.subr.bf16.mxu0 %v2409
    %2939 = vmatpush1.bf16.msra.mxu0 %v2408
    %2940 = vmatprep.subr.bf16.mxu0 %v2405
    %2941 = vmatpush1.bf16.msra.mxu0 %v2404
    %2942 = vmatprep.subr.bf16.mxu0 %v2401
    %2943 = vmatpush1.bf16.msra.mxu0 %v2400
    %2944 = vmatprep.subr.bf16.mxu0 0
    %2945 = vmatpush2.bf16.msra.mxu0 0
    %2946 = vmatprep.subr.bf16.mxu0 0
    %2947 = vmatpush2.bf16.msra.mxu0 0
    %2948 = vmatprep.subr.bf16.mxu0 0
    %2949 = vmatpush2.bf16.msra.mxu0 0
    %2950 = vmatprep.subr.bf16.mxu0 0
    %2951 = vmatpush2.bf16.msra.mxu0 0
    %2952 = vmatprep.subr.bf16.mxu0 0
    %2953 = vmatpush2.bf16.msra.mxu0 0
    %2954 = vmatprep.subr.bf16.mxu0 0
    %2955 = vmatpush2.bf16.msra.mxu0 0
    %2956 = vmatprep.subr.bf16.mxu0 0
    %2957 = vmatpush2.bf16.msra.mxu0 0
    %2958 = vmatprep.subr.bf16.mxu0 0
    %2959 = vmatpush2.bf16.msra.mxu0 0
    %2960 = vmatprep.mubr.bf16.mxu0 0
    %2961 = vmatmul.mubr.bf16.gmra.mxu0 %v2927
    %v2962 = vpop.f32.mrf.mxu0
    %v2963 = vadd.f32 0.0, %v2962
    %v2964 = vpop.f32.mrf.mxu0
    %v2965 = vadd.f32 0.0, %v2964
    %v2966 = vpop.f32.mrf.mxu0
    %v2967 = vpop.f32.mrf.mxu0
    %2968 = vdwg.mxu0
    %2969 = vmatprep.subr.bf16.mxu0 %v2431
    %2970 = vmatpush1.bf16.msra.mxu0 %v2430
    %2971 = vmatprep.subr.bf16.mxu0 %v2427
    %2972 = vmatpush1.bf16.msra.mxu0 %v2426
    %2973 = vmatprep.subr.bf16.mxu0 %v2423
    %2974 = vmatpush1.bf16.msra.mxu0 %v2422
    %2975 = vmatprep.subr.bf16.mxu0 %v2419
    %2976 = vmatpush1.bf16.msra.mxu0 %v2418
    %2977 = vmatprep.subr.bf16.mxu0 %v2415
    %2978 = vmatpush1.bf16.msra.mxu0 %v2414
    %2979 = vmatprep.subr.bf16.mxu0 %v2411
    %2980 = vmatpush1.bf16.msra.mxu0 %v2410
    %2981 = vmatprep.subr.bf16.mxu0 %v2407
    %2982 = vmatpush1.bf16.msra.mxu0 %v2406
    %2983 = vmatprep.subr.bf16.mxu0 %v2403
    %2984 = vmatpush1.bf16.msra.mxu0 %v2402
    %2985 = vmatprep.subr.bf16.mxu0 0
    %2986 = vmatpush2.bf16.msra.mxu0 0
    %2987 = vmatprep.subr.bf16.mxu0 0
    %2988 = vmatpush2.bf16.msra.mxu0 0
    %2989 = vmatprep.subr.bf16.mxu0 0
    %2990 = vmatpush2.bf16.msra.mxu0 0
    %2991 = vmatprep.subr.bf16.mxu0 0
    %2992 = vmatpush2.bf16.msra.mxu0 0
    %2993 = vmatprep.subr.bf16.mxu0 0
    %2994 = vmatpush2.bf16.msra.mxu0 0
    %2995 = vmatprep.subr.bf16.mxu0 0
    %2996 = vmatpush2.bf16.msra.mxu0 0
    %2997 = vmatprep.subr.bf16.mxu0 0
    %2998 = vmatpush2.bf16.msra.mxu0 0
    %2999 = vmatprep.subr.bf16.mxu0 0
    %3000 = vmatpush2.bf16.msra.mxu0 0
    %3001 = vmatprep.mubr.bf16.mxu0 0
    %3002 = vmatmul.mubr.bf16.gmra.mxu0 %v2927
    %v3003 = vpop.f32.mrf.mxu0
    %v3004 = vadd.f32 0.0, %v3003
    %v3005 = vpop.f32.mrf.mxu0
    %v3006 = vadd.f32 0.0, %v3005
    %v3007 = vpop.f32.mrf.mxu0
    %v3008 = vpop.f32.mrf.mxu0
    %3009 = vdwg.mxu0
    %v3010 = vadd.f32 %v2923, %v2963
    %v3011 = vadd.f32 %v2924, %v2965
    %v3012 = vadd.f32 %v2925, %v3004
    %v3013 = vadd.f32 %v2926, %v3006
    %v3014 = vxor.u32 %v3010, 2147483648
    %v3015 = vmul.f32 %v3014, 1.442695
    %v3016 = vpow.pop %v3015
    %v3017 = vadd.f32 %v3016, 1.0
    %v3018 = vrcp.pop %v3017
    %v3019 = vmul.f32 1.0, %v3018
    %v3020 = vxor.u32 %v3011, 2147483648
    %v3021 = vmul.f32 %v3020, 1.442695
    %v3022 = vpow.pop %v3021
    %v3023 = vadd.f32 %v3022, 1.0
    %v3024 = vrcp.pop %v3023
    %v3025 = vmul.f32 1.0, %v3024
    %v3026 = vtanh.pop %v3012
    %v3027 = vxor.u32 %v3013, 2147483648
    %v3028 = vmul.f32 %v3027, 1.442695
    %v3029 = vpow.pop %v3028
    %v3030 = vadd.f32 %v3029, 1.0
    %v3031 = vrcp.pop %v3030
    %v3032 = vmul.f32 1.0, %v3031
    %v3033 = vmul.f32 %v3025, %v2919
    %v3034 = vmul.f32 %v3019, %v3026
    %v3035 = vadd.f32 %v3033, %v3034
    %v3036 = vtanh.pop %v3035
    %v3037 = vmul.f32 %v3032, %v3036
    %3038 = vst [vmem:[%s1492] sm:$0xff] %v3037
    %v3039 = vld [vmem:[%s1496] sm:$0xff]
    %v3040 = vld [vmem:[%s1496 + $0x8] sm:$0xff]
    %v3041 = vld [vmem:[%s1496 + $0x10] sm:$0xff]
    %v3042 = vld [vmem:[%s1496 + $0x18] sm:$0xff]
    %v3043 = vpack.c.bf16 %v3037, %v3037
    %3044 = vmatprep.subr.bf16.mxu0 %v2429
    %3045 = vmatpush1.bf16.msra.mxu0 %v2428
    %3046 = vmatprep.subr.bf16.mxu0 %v2425
    %3047 = vmatpush1.bf16.msra.mxu0 %v2424
    %3048 = vmatprep.subr.bf16.mxu0 %v2421
    %3049 = vmatpush1.bf16.msra.mxu0 %v2420
    %3050 = vmatprep.subr.bf16.mxu0 %v2417
    %3051 = vmatpush1.bf16.msra.mxu0 %v2416
    %3052 = vmatprep.subr.bf16.mxu0 %v2413
    %3053 = vmatpush1.bf16.msra.mxu0 %v2412
    %3054 = vmatprep.subr.bf16.mxu0 %v2409
    %3055 = vmatpush1.bf16.msra.mxu0 %v2408
    %3056 = vmatprep.subr.bf16.mxu0 %v2405
    %3057 = vmatpush1.bf16.msra.mxu0 %v2404
    %3058 = vmatprep.subr.bf16.mxu0 %v2401
    %3059 = vmatpush1.bf16.msra.mxu0 %v2400
    %3060 = vmatprep.subr.bf16.mxu0 0
    %3061 = vmatpush2.bf16.msra.mxu0 0
    %3062 = vmatprep.subr.bf16.mxu0 0
    %3063 = vmatpush2.bf16.msra.mxu0 0
    %3064 = vmatprep.subr.bf16.mxu0 0
    %3065 = vmatpush2.bf16.msra.mxu0 0
    %3066 = vmatprep.subr.bf16.mxu0 0
    %3067 = vmatpush2.bf16.msra.mxu0 0
    %3068 = vmatprep.subr.bf16.mxu0 0
    %3069 = vmatpush2.bf16.msra.mxu0 0
    %3070 = vmatprep.subr.bf16.mxu0 0
    %3071 = vmatpush2.bf16.msra.mxu0 0
    %3072 = vmatprep.subr.bf16.mxu0 0
    %3073 = vmatpush2.bf16.msra.mxu0 0
    %3074 = vmatprep.subr.bf16.mxu0 0
    %3075 = vmatpush2.bf16.msra.mxu0 0
    %3076 = vmatprep.mubr.bf16.mxu0 0
    %3077 = vmatmul.mubr.bf16.gmra.mxu0 %v3043
    %v3078 = vpop.f32.mrf.mxu0
    %v3079 = vadd.f32 0.0, %v3078
    %v3080 = vpop.f32.mrf.mxu0
    %v3081 = vadd.f32 0.0, %v3080
    %v3082 = vpop.f32.mrf.mxu0
    %v3083 = vpop.f32.mrf.mxu0
    %3084 = vdwg.mxu0
    %3085 = vmatprep.subr.bf16.mxu0 %v2431
    %3086 = vmatpush1.bf16.msra.mxu0 %v2430
    %3087 = vmatprep.subr.bf16.mxu0 %v2427
    %3088 = vmatpush1.bf16.msra.mxu0 %v2426
    %3089 = vmatprep.subr.bf16.mxu0 %v2423
    %3090 = vmatpush1.bf16.msra.mxu0 %v2422
    %3091 = vmatprep.subr.bf16.mxu0 %v2419
    %3092 = vmatpush1.bf16.msra.mxu0 %v2418
    %3093 = vmatprep.subr.bf16.mxu0 %v2415
    %3094 = vmatpush1.bf16.msra.mxu0 %v2414
    %3095 = vmatprep.subr.bf16.mxu0 %v2411
    %3096 = vmatpush1.bf16.msra.mxu0 %v2410
    %3097 = vmatprep.subr.bf16.mxu0 %v2407
    %3098 = vmatpush1.bf16.msra.mxu0 %v2406
    %3099 = vmatprep.subr.bf16.mxu0 %v2403
    %3100 = vmatpush1.bf16.msra.mxu0 %v2402
    %3101 = vmatprep.subr.bf16.mxu0 0
    %3102 = vmatpush2.bf16.msra.mxu0 0
    %3103 = vmatprep.subr.bf16.mxu0 0
    %3104 = vmatpush2.bf16.msra.mxu0 0
    %3105 = vmatprep.subr.bf16.mxu0 0
    %3106 = vmatpush2.bf16.msra.mxu0 0
    %3107 = vmatprep.subr.bf16.mxu0 0
    %3108 = vmatpush2.bf16.msra.mxu0 0
    %3109 = vmatprep.subr.bf16.mxu0 0
    %3110 = vmatpush2.bf16.msra.mxu0 0
    %3111 = vmatprep.subr.bf16.mxu0 0
    %3112 = vmatpush2.bf16.msra.mxu0 0
    %3113 = vmatprep.subr.bf16.mxu0 0
    %3114 = vmatpush2.bf16.msra.mxu0 0
    %3115 = vmatprep.subr.bf16.mxu0 0
    %3116 = vmatpush2.bf16.msra.mxu0 0
    %3117 = vmatprep.mubr.bf16.mxu0 0
    %3118 = vmatmul.mubr.bf16.gmra.mxu0 %v3043
    %v3119 = vpop.f32.mrf.mxu0
    %v3120 = vadd.f32 0.0, %v3119
    %v3121 = vpop.f32.mrf.mxu0
    %v3122 = vadd.f32 0.0, %v3121
    %v3123 = vpop.f32.mrf.mxu0
    %v3124 = vpop.f32.mrf.mxu0
    %3125 = vdwg.mxu0
    %v3126 = vadd.f32 %v3039, %v3079
    %v3127 = vadd.f32 %v3040, %v3081
    %v3128 = vadd.f32 %v3041, %v3120
    %v3129 = vadd.f32 %v3042, %v3122
    %v3130 = vxor.u32 %v3126, 2147483648
    %v3131 = vmul.f32 %v3130, 1.442695
    %v3132 = vpow.pop %v3131
    %v3133 = vadd.f32 %v3132, 1.0
    %v3134 = vrcp.pop %v3133
    %v3135 = vmul.f32 1.0, %v3134
    %v3136 = vxor.u32 %v3127, 2147483648
    %v3137 = vmul.f32 %v3136, 1.442695
    %v3138 = vpow.pop %v3137
    %v3139 = vadd.f32 %v3138, 1.0
    %v3140 = vrcp.pop %v3139
    %v3141 = vmul.f32 1.0, %v3140
    %v3142 = vtanh.pop %v3128
    %v3143 = vxor.u32 %v3129, 2147483648
    %v3144 = vmul.f32 %v3143, 1.442695
    %v3145 = vpow.pop %v3144
    %v3146 = vadd.f32 %v3145, 1.0
    %v3147 = vrcp.pop %v3146
    %v3148 = vmul.f32 1.0, %v3147
    %v3149 = vmul.f32 %v3141, %v3035
    %v3150 = vmul.f32 %v3135, %v3142
    %v3151 = vadd.f32 %v3149, %v3150
    %v3152 = vtanh.pop %v3151
    %v3153 = vmul.f32 %v3148, %v3152
    %3154 = vst [vmem:[%s1612] sm:$0xff] %v3153
    %v3155 = vld [vmem:[%s1616] sm:$0xff]
    %v3156 = vld [vmem:[%s1616 + $0x8] sm:$0xff]
    %v3157 = vld [vmem:[%s1616 + $0x10] sm:$0xff]
    %v3158 = vld [vmem:[%s1616 + $0x18] sm:$0xff]
    %v3159 = vpack.c.bf16 %v3153, %v3153
    %3160 = vmatprep.subr.bf16.mxu0 %v2429
    %3161 = vmatpush1.bf16.msra.mxu0 %v2428
    %3162 = vmatprep.subr.bf16.mxu0 %v2425
    %3163 = vmatpush1.bf16.msra.mxu0 %v2424
    %3164 = vmatprep.subr.bf16.mxu0 %v2421
    %3165 = vmatpush1.bf16.msra.mxu0 %v2420
    %3166 = vmatprep.subr.bf16.mxu0 %v2417
    %3167 = vmatpush1.bf16.msra.mxu0 %v2416
    %3168 = vmatprep.subr.bf16.mxu0 %v2413
    %3169 = vmatpush1.bf16.msra.mxu0 %v2412
    %3170 = vmatprep.subr.bf16.mxu0 %v2409
    %3171 = vmatpush1.bf16.msra.mxu0 %v2408
    %3172 = vmatprep.subr.bf16.mxu0 %v2405
    %3173 = vmatpush1.bf16.msra.mxu0 %v2404
    %3174 = vmatprep.subr.bf16.mxu0 %v2401
    %3175 = vmatpush1.bf16.msra.mxu0 %v2400
    %3176 = vmatprep.subr.bf16.mxu0 0
    %3177 = vmatpush2.bf16.msra.mxu0 0
    %3178 = vmatprep.subr.bf16.mxu0 0
    %3179 = vmatpush2.bf16.msra.mxu0 0
    %3180 = vmatprep.subr.bf16.mxu0 0
    %3181 = vmatpush2.bf16.msra.mxu0 0
    %3182 = vmatprep.subr.bf16.mxu0 0
    %3183 = vmatpush2.bf16.msra.mxu0 0
    %3184 = vmatprep.subr.bf16.mxu0 0
    %3185 = vmatpush2.bf16.msra.mxu0 0
    %3186 = vmatprep.subr.bf16.mxu0 0
    %3187 = vmatpush2.bf16.msra.mxu0 0
    %3188 = vmatprep.subr.bf16.mxu0 0
    %3189 = vmatpush2.bf16.msra.mxu0 0
    %3190 = vmatprep.subr.bf16.mxu0 0
    %3191 = vmatpush2.bf16.msra.mxu0 0
    %3192 = vmatprep.mubr.bf16.mxu0 0
    %3193 = vmatmul.mubr.bf16.gmra.mxu0 %v3159
    %v3194 = vpop.f32.mrf.mxu0
    %v3195 = vadd.f32 0.0, %v3194
    %v3196 = vpop.f32.mrf.mxu0
    %v3197 = vadd.f32 0.0, %v3196
    %v3198 = vpop.f32.mrf.mxu0
    %v3199 = vpop.f32.mrf.mxu0
    %3200 = vdwg.mxu0
    %3201 = vmatprep.subr.bf16.mxu0 %v2431
    %3202 = vmatpush1.bf16.msra.mxu0 %v2430
    %3203 = vmatprep.subr.bf16.mxu0 %v2427
    %3204 = vmatpush1.bf16.msra.mxu0 %v2426
    %3205 = vmatprep.subr.bf16.mxu0 %v2423
    %3206 = vmatpush1.bf16.msra.mxu0 %v2422
    %3207 = vmatprep.subr.bf16.mxu0 %v2419
    %3208 = vmatpush1.bf16.msra.mxu0 %v2418
    %3209 = vmatprep.subr.bf16.mxu0 %v2415
    %3210 = vmatpush1.bf16.msra.mxu0 %v2414
    %3211 = vmatprep.subr.bf16.mxu0 %v2411
    %3212 = vmatpush1.bf16.msra.mxu0 %v2410
    %3213 = vmatprep.subr.bf16.mxu0 %v2407
    %3214 = vmatpush1.bf16.msra.mxu0 %v2406
    %3215 = vmatprep.subr.bf16.mxu0 %v2403
    %3216 = vmatpush1.bf16.msra.mxu0 %v2402
    %3217 = vmatprep.subr.bf16.mxu0 0
    %3218 = vmatpush2.bf16.msra.mxu0 0
    %3219 = vmatprep.subr.bf16.mxu0 0
    %3220 = vmatpush2.bf16.msra.mxu0 0
    %3221 = vmatprep.subr.bf16.mxu0 0
    %3222 = vmatpush2.bf16.msra.mxu0 0
    %3223 = vmatprep.subr.bf16.mxu0 0
    %3224 = vmatpush2.bf16.msra.mxu0 0
    %3225 = vmatprep.subr.bf16.mxu0 0
    %3226 = vmatpush2.bf16.msra.mxu0 0
    %3227 = vmatprep.subr.bf16.mxu0 0
    %3228 = vmatpush2.bf16.msra.mxu0 0
    %3229 = vmatprep.subr.bf16.mxu0 0
    %3230 = vmatpush2.bf16.msra.mxu0 0
    %3231 = vmatprep.subr.bf16.mxu0 0
    %3232 = vmatpush2.bf16.msra.mxu0 0
    %3233 = vmatprep.mubr.bf16.mxu0 0
    %3234 = vmatmul.mubr.bf16.gmra.mxu0 %v3159
    %v3235 = vpop.f32.mrf.mxu0
    %v3236 = vadd.f32 0.0, %v3235
    %v3237 = vpop.f32.mrf.mxu0
    %v3238 = vadd.f32 0.0, %v3237
    %v3239 = vpop.f32.mrf.mxu0
    %v3240 = vpop.f32.mrf.mxu0
    %3241 = vdwg.mxu0
    %v3242 = vadd.f32 %v3155, %v3195
    %v3243 = vadd.f32 %v3156, %v3197
    %v3244 = vadd.f32 %v3157, %v3236
    %v3245 = vadd.f32 %v3158, %v3238
    %v3246 = vxor.u32 %v3242, 2147483648
    %v3247 = vmul.f32 %v3246, 1.442695
    %v3248 = vpow.pop %v3247
    %v3249 = vadd.f32 %v3248, 1.0
    %v3250 = vrcp.pop %v3249
    %v3251 = vmul.f32 1.0, %v3250
    %v3252 = vxor.u32 %v3243, 2147483648
    %v3253 = vmul.f32 %v3252, 1.442695
    %v3254 = vpow.pop %v3253
    %v3255 = vadd.f32 %v3254, 1.0
    %v3256 = vrcp.pop %v3255
    %v3257 = vmul.f32 1.0, %v3256
    %v3258 = vtanh.pop %v3244
    %v3259 = vxor.u32 %v3245, 2147483648
    %v3260 = vmul.f32 %v3259, 1.442695
    %v3261 = vpow.pop %v3260
    %v3262 = vadd.f32 %v3261, 1.0
    %v3263 = vrcp.pop %v3262
    %v3264 = vmul.f32 1.0, %v3263
    %v3265 = vmul.f32 %v3257, %v3151
    %v3266 = vmul.f32 %v3251, %v3258
    %v3267 = vadd.f32 %v3265, %v3266
    %v3268 = vtanh.pop %v3267
    %v3269 = vmul.f32 %v3264, %v3268
    %3270 = vst [vmem:[%s1732] sm:$0xff] %v3269
    %v3271 = vld [vmem:[%s1736] sm:$0xff]
    %v3272 = vld [vmem:[%s1736 + $0x8] sm:$0xff]
    %v3273 = vld [vmem:[%s1736 + $0x10] sm:$0xff]
    %v3274 = vld [vmem:[%s1736 + $0x18] sm:$0xff]
    %v3275 = vpack.c.bf16 %v3269, %v3269
    %3276 = vmatprep.subr.bf16.mxu0 %v2429
    %3277 = vmatpush1.bf16.msra.mxu0 %v2428
    %3278 = vmatprep.subr.bf16.mxu0 %v2425
    %3279 = vmatpush1.bf16.msra.mxu0 %v2424
    %3280 = vmatprep.subr.bf16.mxu0 %v2421
    %3281 = vmatpush1.bf16.msra.mxu0 %v2420
    %3282 = vmatprep.subr.bf16.mxu0 %v2417
    %3283 = vmatpush1.bf16.msra.mxu0 %v2416
    %3284 = vmatprep.subr.bf16.mxu0 %v2413
    %3285 = vmatpush1.bf16.msra.mxu0 %v2412
    %3286 = vmatprep.subr.bf16.mxu0 %v2409
    %3287 = vmatpush1.bf16.msra.mxu0 %v2408
    %3288 = vmatprep.subr.bf16.mxu0 %v2405
    %3289 = vmatpush1.bf16.msra.mxu0 %v2404
    %3290 = vmatprep.subr.bf16.mxu0 %v2401
    %3291 = vmatpush1.bf16.msra.mxu0 %v2400
    %3292 = vmatprep.subr.bf16.mxu0 0
    %3293 = vmatpush2.bf16.msra.mxu0 0
    %3294 = vmatprep.subr.bf16.mxu0 0
    %3295 = vmatpush2.bf16.msra.mxu0 0
    %3296 = vmatprep.subr.bf16.mxu0 0
    %3297 = vmatpush2.bf16.msra.mxu0 0
    %3298 = vmatprep.subr.bf16.mxu0 0
    %3299 = vmatpush2.bf16.msra.mxu0 0
    %3300 = vmatprep.subr.bf16.mxu0 0
    %3301 = vmatpush2.bf16.msra.mxu0 0
    %3302 = vmatprep.subr.bf16.mxu0 0
    %3303 = vmatpush2.bf16.msra.mxu0 0
    %3304 = vmatprep.subr.bf16.mxu0 0
    %3305 = vmatpush2.bf16.msra.mxu0 0
    %3306 = vmatprep.subr.bf16.mxu0 0
    %3307 = vmatpush2.bf16.msra.mxu0 0
    %3308 = vmatprep.mubr.bf16.mxu0 0
    %3309 = vmatmul.mubr.bf16.gmra.mxu0 %v3275
    %v3310 = vpop.f32.mrf.mxu0
    %v3311 = vadd.f32 0.0, %v3310
    %v3312 = vpop.f32.mrf.mxu0
    %v3313 = vadd.f32 0.0, %v3312
    %v3314 = vpop.f32.mrf.mxu0
    %v3315 = vpop.f32.mrf.mxu0
    %3316 = vdwg.mxu0
    %3317 = vmatprep.subr.bf16.mxu0 %v2431
    %3318 = vmatpush1.bf16.msra.mxu0 %v2430
    %3319 = vmatprep.subr.bf16.mxu0 %v2427
    %3320 = vmatpush1.bf16.msra.mxu0 %v2426
    %3321 = vmatprep.subr.bf16.mxu0 %v2423
    %3322 = vmatpush1.bf16.msra.mxu0 %v2422
    %3323 = vmatprep.subr.bf16.mxu0 %v2419
    %3324 = vmatpush1.bf16.msra.mxu0 %v2418
    %3325 = vmatprep.subr.bf16.mxu0 %v2415
    %3326 = vmatpush1.bf16.msra.mxu0 %v2414
    %3327 = vmatprep.subr.bf16.mxu0 %v2411
    %3328 = vmatpush1.bf16.msra.mxu0 %v2410
    %3329 = vmatprep.subr.bf16.mxu0 %v2407
    %3330 = vmatpush1.bf16.msra.mxu0 %v2406
    %3331 = vmatprep.subr.bf16.mxu0 %v2403
    %3332 = vmatpush1.bf16.msra.mxu0 %v2402
    %3333 = vmatprep.subr.bf16.mxu0 0
    %3334 = vmatpush2.bf16.msra.mxu0 0
    %3335 = vmatprep.subr.bf16.mxu0 0
    %3336 = vmatpush2.bf16.msra.mxu0 0
    %3337 = vmatprep.subr.bf16.mxu0 0
    %3338 = vmatpush2.bf16.msra.mxu0 0
    %3339 = vmatprep.subr.bf16.mxu0 0
    %3340 = vmatpush2.bf16.msra.mxu0 0
    %3341 = vmatprep.subr.bf16.mxu0 0
    %3342 = vmatpush2.bf16.msra.mxu0 0
    %3343 = vmatprep.subr.bf16.mxu0 0
    %3344 = vmatpush2.bf16.msra.mxu0 0
    %3345 = vmatprep.subr.bf16.mxu0 0
    %3346 = vmatpush2.bf16.msra.mxu0 0
    %3347 = vmatprep.subr.bf16.mxu0 0
    %3348 = vmatpush2.bf16.msra.mxu0 0
    %3349 = vmatprep.mubr.bf16.mxu0 0
    %3350 = vmatmul.mubr.bf16.gmra.mxu0 %v3275
    %v3351 = vpop.f32.mrf.mxu0
    %v3352 = vadd.f32 0.0, %v3351
    %v3353 = vpop.f32.mrf.mxu0
    %v3354 = vadd.f32 0.0, %v3353
    %v3355 = vpop.f32.mrf.mxu0
    %v3356 = vpop.f32.mrf.mxu0
    %3357 = vdwg.mxu0
    %v3358 = vadd.f32 %v3271, %v3311
    %v3359 = vadd.f32 %v3272, %v3313
    %v3360 = vadd.f32 %v3273, %v3352
    %v3361 = vadd.f32 %v3274, %v3354
    %v3362 = vxor.u32 %v3358, 2147483648
    %v3363 = vmul.f32 %v3362, 1.442695
    %v3364 = vpow.pop %v3363
    %v3365 = vadd.f32 %v3364, 1.0
    %v3366 = vrcp.pop %v3365
    %v3367 = vmul.f32 1.0, %v3366
    %v3368 = vxor.u32 %v3359, 2147483648
    %v3369 = vmul.f32 %v3368, 1.442695
    %v3370 = vpow.pop %v3369
    %v3371 = vadd.f32 %v3370, 1.0
    %v3372 = vrcp.pop %v3371
    %v3373 = vmul.f32 1.0, %v3372
    %v3374 = vtanh.pop %v3360
    %v3375 = vxor.u32 %v3361, 2147483648
    %v3376 = vmul.f32 %v3375, 1.442695
    %v3377 = vpow.pop %v3376
    %v3378 = vadd.f32 %v3377, 1.0
    %v3379 = vrcp.pop %v3378
    %v3380 = vmul.f32 1.0, %v3379
    %v3381 = vmul.f32 %v3373, %v3267
    %v3382 = vmul.f32 %v3367, %v3374
    %v3383 = vadd.f32 %v3381, %v3382
    %v3384 = vtanh.pop %v3383
    %v3385 = vmul.f32 %v3380, %v3384
    %3386 = vst [vmem:[%s1852] sm:$0xff] %v3385
    %s3387 = scalar_lea.vmem [#allocation14], 8
    %3388 = vst [vmem:[%s3387] sm:$0xff] %v3385
    %s3389 = scalar_lea.vmem [#allocation16], 8
    %3390 = vst [vmem:[%s3389] sm:$0xff] %v3383
    %v3391 = vld [vmem:[#allocation3] sm:$0xff]
    %v3392 = vld [vmem:[#allocation3 + $0x8] sm:$0xff]
    %v3393 = vld [vmem:[#allocation3 + $0x10] sm:$0xff]
    %v3394 = vld [vmem:[#allocation3 + $0x18] sm:$0xff]
    %v3395 = vld [vmem:[#allocation3 + $0x20] sm:$0xff]
    %v3396 = vld [vmem:[#allocation3 + $0x28] sm:$0xff]
    %v3397 = vld [vmem:[#allocation3 + $0x30] sm:$0xff]
    %v3398 = vld [vmem:[#allocation3 + $0x38] sm:$0xff]
    %v3399 = vpack.c.bf16 %v3392, %v3391
    %v3400 = vpack.c.bf16 %v3394, %v3393
    %v3401 = vpack.c.bf16 %v3396, %v3395
    %v3402 = vpack.c.bf16 %v3398, %v3397
    %v3403 = vld [vmem:[#allocation12] sm:$0xf]
    %v3404 = vld [vmem:[#allocation12 + $0x4] sm:$0xf]
    %v3405 = vld [vmem:[#allocation12 + $0x8] sm:$0xf]
    %v3406 = vld [vmem:[#allocation12 + $0xc] sm:$0xf]
    %v3407 = vld [vmem:[#allocation12 + $0x10] sm:$0xf]
    %v3408 = vld [vmem:[#allocation12 + $0x14] sm:$0xf]
    %v3409 = vld [vmem:[#allocation12 + $0x18] sm:$0xf]
    %v3410 = vld [vmem:[#allocation12 + $0x1c] sm:$0xf]
    %v3411 = vld [vmem:[#allocation12 + $0x20] sm:$0xf]
    %v3412 = vld [vmem:[#allocation12 + $0x24] sm:$0xf]
    %v3413 = vld [vmem:[#allocation12 + $0x28] sm:$0xf]
    %v3414 = vld [vmem:[#allocation12 + $0x2c] sm:$0xf]
    %v3415 = vld [vmem:[#allocation12 + $0x30] sm:$0xf]
    %v3416 = vld [vmem:[#allocation12 + $0x34] sm:$0xf]
    %v3417 = vld [vmem:[#allocation12 + $0x38] sm:$0xf]
    %v3418 = vld [vmem:[#allocation12 + $0x3c] sm:$0xf]
    %v3419 = vld [vmem:[%s8] sm:$0x1]
    %v3421 = vlaneseq
    %v3422 = vshrl.u32 %v3421, 7
    %v3423 = vsub.s32 0, %v3422
    %v3424 = vrot.slane %v3419, %v3423
    %v3442 = vunpack.c.l.b16 %v3403
    %v3443 = vunpack.c.l.b16 %v3404
    %v3444 = vunpack.c.l.b16 %v3405
    %v3445 = vunpack.c.l.b16 %v3406
    %v3446 = vunpack.c.l.b16 %v3407
    %v3447 = vunpack.c.l.b16 %v3408
    %v3448 = vunpack.c.l.b16 %v3409
    %v3449 = vunpack.c.l.b16 %v3410
    %v3450 = vunpack.c.l.b16 %v3411
    %v3451 = vunpack.c.l.b16 %v3412
    %v3452 = vunpack.c.l.b16 %v3413
    %v3453 = vunpack.c.l.b16 %v3414
    %v3454 = vunpack.c.l.b16 %v3415
    %v3455 = vunpack.c.l.b16 %v3416
    %v3456 = vunpack.c.l.b16 %v3417
    %v3457 = vunpack.c.l.b16 %v3418
    %v3458 = vpack.c.b16 %v3443, %v3442
    %v3459 = vpack.c.b16 %v3445, %v3444
    %v3460 = vpack.c.b16 %v3447, %v3446
    %v3461 = vpack.c.b16 %v3449, %v3448
    %v3462 = vpack.c.b16 %v3451, %v3450
    %v3463 = vpack.c.b16 %v3453, %v3452
    %v3464 = vpack.c.b16 %v3455, %v3454
    %v3465 = vpack.c.b16 %v3457, %v3456
    %3474 = vmatprep.subr.bf16.mxu0 0
    %3475 = vmatpush1.bf16.msra.mxu0 %v3465
    %3476 = vmatprep.subr.bf16.mxu0 0
    %3477 = vmatpush1.bf16.msra.mxu0 %v3464
    %3478 = vmatprep.subr.bf16.mxu0 0
    %3479 = vmatpush1.bf16.msra.mxu0 %v3463
    %3480 = vmatprep.subr.bf16.mxu0 0
    %3481 = vmatpush1.bf16.msra.mxu0 %v3462
    %3482 = vmatprep.subr.bf16.mxu0 0
    %3483 = vmatpush1.bf16.msra.mxu0 %v3461
    %3484 = vmatprep.subr.bf16.mxu0 0
    %3485 = vmatpush1.bf16.msra.mxu0 %v3460
    %3486 = vmatprep.subr.bf16.mxu0 0
    %3487 = vmatpush1.bf16.msra.mxu0 %v3459
    %3488 = vmatprep.subr.bf16.mxu0 0
    %3489 = vmatpush1.bf16.msra.mxu0 %v3458
    %3490 = vmatprep.subr.bf16.mxu0 0
    %3491 = vmatpush2.bf16.msra.mxu0 0
    %3492 = vmatprep.subr.bf16.mxu0 0
    %3493 = vmatpush2.bf16.msra.mxu0 0
    %3494 = vmatprep.subr.bf16.mxu0 0
    %3495 = vmatpush2.bf16.msra.mxu0 0
    %3496 = vmatprep.subr.bf16.mxu0 0
    %3497 = vmatpush2.bf16.msra.mxu0 0
    %3498 = vmatprep.subr.bf16.mxu0 0
    %3499 = vmatpush2.bf16.msra.mxu0 0
    %3500 = vmatprep.subr.bf16.mxu0 0
    %3501 = vmatpush2.bf16.msra.mxu0 0
    %3502 = vmatprep.subr.bf16.mxu0 0
    %3503 = vmatpush2.bf16.msra.mxu0 0
    %3504 = vmatprep.subr.bf16.mxu0 0
    %3505 = vmatpush2.bf16.msra.mxu0 0
    %3506 = vmatprep.mubr.bf16.mxu0 0
    %3507 = vmatmul.mubr.bf16.gmra.mxu0 %v3399
    %v3508 = vpop.f32.mrf.mxu0
    %v3509 = vadd.f32 %v3424, %v3508
    %v3510 = vpop.f32.mrf.mxu0
    %v3511 = vpop.f32.mrf.mxu0
    %v3512 = vadd.f32 %v3424, %v3511
    %v3513 = vpop.f32.mrf.mxu0
    %3514 = vmatprep.mubr.bf16.mxu0 0
    %3515 = vmatmul.mubr.bf16.gmra.mxu0 %v3400
    %v3516 = vpop.f32.mrf.mxu0
    %v3517 = vadd.f32 %v3424, %v3516
    %v3518 = vpop.f32.mrf.mxu0
    %v3519 = vpop.f32.mrf.mxu0
    %v3520 = vadd.f32 %v3424, %v3519
    %v3521 = vpop.f32.mrf.mxu0
    %3522 = vmatprep.mubr.bf16.mxu0 0
    %3523 = vmatmul.mubr.bf16.gmra.mxu0 %v3401
    %v3524 = vpop.f32.mrf.mxu0
    %v3525 = vadd.f32 %v3424, %v3524
    %v3526 = vpop.f32.mrf.mxu0
    %v3527 = vpop.f32.mrf.mxu0
    %v3528 = vadd.f32 %v3424, %v3527
    %v3529 = vpop.f32.mrf.mxu0
    %3530 = vmatprep.mubr.bf16.mxu0 0
    %3531 = vmatmul.mubr.bf16.gmra.mxu0 %v3402
    %v3532 = vpop.f32.mrf.mxu0
    %v3533 = vadd.f32 %v3424, %v3532
    %v3534 = vpop.f32.mrf.mxu0
    %v3535 = vpop.f32.mrf.mxu0
    %v3536 = vadd.f32 %v3424, %v3535
    %v3537 = vpop.f32.mrf.mxu0
    %3538 = vdwg.mxu0
    %3539 = vst [vmem:[#allocation13] sm:$0xff] %v3509
    %3540 = vst [vmem:[#allocation13 + $0x8] sm:$0xff] %v3512
    %3541 = vst [vmem:[#allocation13 + $0x10] sm:$0xff] %v3517
    %3542 = vst [vmem:[#allocation13 + $0x18] sm:$0xff] %v3520
    %3543 = vst [vmem:[#allocation13 + $0x20] sm:$0xff] %v3525
    %3544 = vst [vmem:[#allocation13 + $0x28] sm:$0xff] %v3528
    %3545 = vst [vmem:[#allocation13 + $0x30] sm:$0xff] %v3533
    %3546 = vst [vmem:[#allocation13 + $0x38] sm:$0xff] %v3536
    // Predicated region
    $region58: #{tpu_custom_call.1} parent=1 // pred_check
      _
    $region59: #{tpu_custom_call.1} parent=1 // pred_check_branch
      %3548 = sbr.rel (0) target = $region61
    $region60: #{tpu_custom_call.1} parent=1 // pred_region
      %s3550 = ssub.s32 1024, 1024
      %3551 = vsyncadd [#allocation6], %s3550
      %s3552 = sshll.u32 [#allocation13], 4
      %s3553 = int_to_ptr.vmem [resolvable:$true] %s3552
      %3558 = dma.vmem_to_hbm [thread:$0]  %s3553, 1024, %s9, [#allocation6], 128, 128, 8
    $region61: #{tpu_custom_call.1} parent=1 // pred_fallthru
      _
    // Predicated region
    $region62: #{tpu_custom_call.1} parent=1 // pred_check
      _
    $region63: #{tpu_custom_call.1} parent=1 // pred_check_branch
      %3560 = sbr.rel (0) target = $region65
    $region64: #{tpu_custom_call.1} parent=1 // pred_region
      %s3562 = ssub.s32 256, 256
      %3563 = vsyncadd [#allocation15], %s3562
      %s3564 = sshll.u32 [#allocation14], 4
      %s3565 = int_to_ptr.vmem [resolvable:$true] %s3564
      %3570 = dma.vmem_to_hbm [thread:$0]  %s3565, 256, %s10, [#allocation15], 128, 128, 8
    $region65: #{tpu_custom_call.1} parent=1 // pred_fallthru
      _
    // Predicated region
    $region66: #{tpu_custom_call.1} parent=1 // pred_check
      _
    $region67: #{tpu_custom_call.1} parent=1 // pred_check_branch
      %3572 = sbr.rel (0) target = $region69
    $region68: #{tpu_custom_call.1} parent=1 // pred_region
      %s3574 = ssub.s32 256, 256
      %3575 = vsyncadd [#allocation15], %s3574
      %s3576 = sshll.u32 [#allocation16], 4
      %s3577 = int_to_ptr.vmem [resolvable:$true] %s3576
      %3582 = dma.vmem_to_hbm [thread:$0]  %s3577, 256, %s11, [#allocation15], 128, 128, 8
    $region69: #{tpu_custom_call.1} parent=1 // pred_fallthru
      _
    // Predicated region
    $region70: #{tpu_custom_call.1} parent=1 // pred_check
      _
    $region71: #{tpu_custom_call.1} parent=1 // pred_check_branch
      %3584 = sbr.rel (0) target = $region73
    $region72: #{tpu_custom_call.1} parent=1 // pred_region
      %3585 = dma.done [#allocation6], 1024
    $region73: #{tpu_custom_call.1} parent=1 // pred_fallthru
      _
    // Predicated region
    $region74: #{tpu_custom_call.1} parent=1 // pred_check
      _
    $region75: #{tpu_custom_call.1} parent=1 // pred_check_branch
      %3587 = sbr.rel (0) target = $region77
    $region76: #{tpu_custom_call.1} parent=1 // pred_region
      %3588 = dma.done [#allocation15], 256
    $region77: #{tpu_custom_call.1} parent=1 // pred_fallthru
      _
    // Predicated region
    $region78: #{tpu_custom_call.1} parent=1 // pred_check
      _
    $region79: #{tpu_custom_call.1} parent=1 // pred_check_branch
      %3590 = sbr.rel (0) target = $region81
    $region80: #{tpu_custom_call.1} parent=1 // pred_region
      %3591 = dma.done [#allocation15], 256
    $region81: #{tpu_custom_call.1} parent=1 // pred_fallthru
      _
    %3592 = vsyncpa [#allocation5], 1
    %3593 = vsyncpa [#allocation8], 1
    %3594 = vsyncpa [#allocation11], 1
    %3595 = vsyncpa [#allocation6], 1
    %3596 = vsyncpa [#allocation15], 1

</llo_original>
